<compile_context>
chip_gen: v6e
topology: v6e:2x2x1
jax: 0.10.0
libtpu: 0.0.40
codegen_flags: <defaults>
</compile_context>

<pallas_src>
import numpy as np

import jax
import jax.numpy as jnp
from jax.experimental import pallas as pl
from jax.experimental.pallas import tpu as pltpu


_PARALLEL_1D = pltpu.CompilerParams(dimension_semantics=("parallel",))


# ----------------------------------------------------------------------------
# Kernel 1: fully fused image branch (VGG stand-in), one sample per grid step.
#   layout: rows = H, lanes = (W, C) with C = 8 real channels
#   conv  : 3 banded matmuls (one per vertical tap), bias + ReLU in f32
#   pool  : constant 0/1 selection matmuls (even/odd phase) + elementwise max;
#           the conv2 halo is emitted as exact zeros by the selection matrices
# ----------------------------------------------------------------------------
def _image_branch_kernel(x_ref, w1_ref, b1_ref, selw1_ref, selh1_ref,
                         w2_ref, b2_ref, selw2_ref, selh2_ref, o_ref):
    # ---- conv1: (24, 208) x (208, 192) per vertical tap --------------------
    h1_rows = x_ref.shape[1] - 2                      # 24
    acc1 = jnp.zeros((h1_rows, w1_ref.shape[2]), jnp.float32)
    for di in range(3):                               # unrolled, cheap casts (~40 KB total)
        lhs = x_ref[0, di:di + h1_rows, :].astype(jnp.bfloat16)
        acc1 = acc1 + jnp.dot(lhs, w1_ref[di], preferred_element_type=jnp.float32)
    h1 = jnp.maximum(acc1 + b1_ref[...], 0.0)         # (24, 192) f32

    # ---- 2x2 maxpool + zero halo for conv2: (24,192) -> (14,112) -----------
    mw1 = jnp.maximum(
        jnp.dot(h1, selw1_ref[0], preferred_element_type=jnp.float32),
        jnp.dot(h1, selw1_ref[1], preferred_element_type=jnp.float32))     # (24, 112)
    p1 = jnp.maximum(
        jnp.dot(selh1_ref[0], mw1, preferred_element_type=jnp.float32),
        jnp.dot(selh1_ref[1], mw1, preferred_element_type=jnp.float32))    # (14, 112)

    # ---- conv2: (12, 112) x (112, 96) per vertical tap ----------------------
    h2_rows = p1.shape[0] - 2                         # 12
    acc2 = jnp.zeros((h2_rows, w2_ref.shape[2]), jnp.float32)
    for di in range(3):
        lhs = p1[di:di + h2_rows, :].astype(jnp.bfloat16)
        acc2 = acc2 + jnp.dot(lhs, w2_ref[di], preferred_element_type=jnp.float32)
    h2 = jnp.maximum(acc2 + b2_ref[...], 0.0)         # (12, 96) f32

    # ---- 2x2 maxpool: (12, 96) -> (6, 48) -----------------------------------
    mw2 = jnp.maximum(
        jnp.dot(h2, selw2_ref[0], preferred_element_type=jnp.float32),
        jnp.dot(h2, selw2_ref[1], preferred_element_type=jnp.float32))     # (12, 48)
    p2 = jnp.maximum(
        jnp.dot(selh2_ref[0], mw2, preferred_element_type=jnp.float32),
        jnp.dot(selh2_ref[1], mw2, preferred_element_type=jnp.float32))    # (6, 48)

    o_ref[0] = p2.astype(o_ref.dtype)                 # bf16, consumed as MXU operand


def pallas_image_branch(x, p):
    """x: (B, 26, 208) f32 padded image with lanes = (W_padded, C_padded=8)."""
    B = x.shape[0]
    return pl.pallas_call(
        _image_branch_kernel,
        out_shape=jax.ShapeDtypeStruct((B, 6, 48), jnp.bfloat16),
        grid=(B,),
        in_specs=[
            pl.BlockSpec((1,) + x.shape[1:], lambda b: (b, 0, 0)),
            pl.BlockSpec(p["conv1_w"].shape, lambda b: (0, 0, 0)),
            pl.BlockSpec(p["conv1_b"].shape, lambda b: (0, 0)),
            pl.BlockSpec(p["selw1"].shape, lambda b: (0, 0, 0)),
            pl.BlockSpec(p["selh1"].shape, lambda b: (0, 0, 0)),
            pl.BlockSpec(p["conv2_w"].shape, lambda b: (0, 0, 0)),
            pl.BlockSpec(p["conv2_b"].shape, lambda b: (0, 0)),
            pl.BlockSpec(p["selw2"].shape, lambda b: (0, 0, 0)),
            pl.BlockSpec(p["selh2"].shape, lambda b: (0, 0, 0)),
        ],
        out_specs=pl.BlockSpec((1, 6, 48), lambda b: (b, 0, 0)),
        compiler_params=_PARALLEL_1D,
    )(x, p["conv1_w"], p["conv1_b"], p["selw1"], p["selh1"],
      p["conv2_w"], p["conv2_b"], p["selw2"], p["selh2"])


# ----------------------------------------------------------------------------
# Kernel 2: fused text branch + classification head (no concat, no extra launch)
#   masked mean-pool -> tanh pooler -> logits = t @ Wt + img @ Wi + b
# ----------------------------------------------------------------------------
def _text_head_kernel(emb_ref, mask_ref, pw_ref, pb_ref, img_ref,
                      wt_ref, wi_ref, cb_ref, o_ref):
    emb = emb_ref[0]                                          # (S, H) f32
    m = mask_ref[0].astype(jnp.float32)                       # (1, S)  (int mask cast in-kernel)
    summed = jnp.dot(m, emb, preferred_element_type=jnp.float32)          # (1, H)
    denom = jnp.maximum(jnp.sum(m, axis=1, keepdims=True), 1.0)           # (1, 1)
    pooled = summed / denom                                                # (1, H)
    t = jnp.tanh(jnp.dot(pooled.astype(jnp.bfloat16), pw_ref[...],
                         preferred_element_type=jnp.float32) + pb_ref[...])  # (1, H)
    y = jnp.dot(t.astype(jnp.bfloat16), wt_ref[...],
                preferred_element_type=jnp.float32)                        # (1, 128)
    y = y + jnp.dot(img_ref[0], wi_ref[...],                               # img already bf16
                    preferred_element_type=jnp.float32)
    o_ref[0] = y + cb_ref[...]                                             # lane-dense (1, 128)


def pallas_text_head(emb, mask, img_flat, p):
    B, S, H = emb.shape
    N = p["cls_b"].shape[1]
    Ki = p["cls_w_img"].shape[0]
    return pl.pallas_call(
        _text_head_kernel,
        out_shape=jax.ShapeDtypeStruct((B, 1, N), jnp.float32),
        grid=(B,),
        in_specs=[
            pl.BlockSpec((1, S, H), lambda b: (b, 0, 0)),
            pl.BlockSpec((1, 1, S), lambda b: (b, 0, 0)),
            pl.BlockSpec((H, H), lambda b: (0, 0)),
            pl.BlockSpec((1, H), lambda b: (0, 0)),
            pl.BlockSpec((1, 1, Ki), lambda b: (b, 0, 0)),
            pl.BlockSpec((H, N), lambda b: (0, 0)),
            pl.BlockSpec((Ki, N), lambda b: (0, 0)),
            pl.BlockSpec((1, N), lambda b: (0, 0)),
        ],
        out_specs=pl.BlockSpec((1, 1, N), lambda b: (b, 0, 0)),
        compiler_params=_PARALLEL_1D,
    )(emb, mask, p["pooler_w"], p["pooler_b"], img_flat,
      p["cls_w_text"], p["cls_w_img"], p["cls_b"])


# ----------------------------------------------------------------------------
# Init-time constant builders (banded conv weights + pooling selection matrices)
# ----------------------------------------------------------------------------
def _banded_conv_weight(w, w_in, w_out, cin_pad, cout_pad):
    """w: (3, 3, cin, cout) -> (3, w_in*cin_pad, w_out*cout_pad) banded matmul weights."""
    kh, kw, cin, cout = w.shape
    out = np.zeros((kh, w_in * cin_pad, w_out * cout_pad), np.float32)
    for di in range(kh):
        for dj in range(kw):
            for wo in range(w_out):
                wi = wo + dj
                out[di, wi * cin_pad:wi * cin_pad + cin,
                    wo * cout_pad:wo * cout_pad + cout] = w[di, dj]
    return out


def _pool_sel_lanes(w_in, w_out, c, phase, pad):
    """(w_in*c, (w_out+2*pad)*c) 0/1 matrix: picks lane (2*wo+phase, ch); pad cols are zero."""
    s = np.zeros((w_in * c, (w_out + 2 * pad) * c), np.float32)
    for wo in range(w_out):
        for ch in range(c):
            s[(2 * wo + phase) * c + ch, (wo + pad) * c + ch] = 1.0
    return s


def _pool_sel_rows(h_in, h_out, phase, pad):
    """((h_out+2*pad), h_in) 0/1 matrix: picks row 2*ho+phase; pad rows are zero."""
    s = np.zeros((h_out + 2 * pad, h_in), np.float32)
    for ho in range(h_out):
        s[ho + pad, 2 * ho + phase] = 1.0
    return s


def init_params(key, vocab=100, hidden=32, cin=3, c1=8, c2=8, n_classes=2, n_pad=128):
    ks = jax.random.split(key, 10)
    s = 0.05
    emb = jax.random.normal(ks[0], (vocab, hidden), jnp.float32) * s
    pooler_w = jax.random.normal(ks[1], (hidden, hidden), jnp.float32) * s
    pooler_b = jax.random.normal(ks[2], (1, hidden), jnp.float32) * s
    w1 = np.asarray(jax.random.normal(ks[3], (3, 3, cin, c1), jnp.float32)) * s
    b1 = np.asarray(jax.random.normal(ks[4], (c1,), jnp.float32)) * s
    w2 = np.asarray(jax.random.normal(ks[5], (3, 3, c1, c2), jnp.float32)) * s
    b2 = np.asarray(jax.random.normal(ks[6], (c2,), jnp.float32)) * s
    wt = np.asarray(jax.random.normal(ks[7], (hidden, n_classes), jnp.float32)) * s
    wi = np.asarray(jax.random.normal(ks[8], (6, 6, c2, n_classes), jnp.float32)) * s
    cb = np.asarray(jax.random.normal(ks[9], (n_classes,), jnp.float32)) * s

    img_k = 6 * 6 * c2                                     # 288 real image features
    cls_w_text = np.zeros((hidden, n_pad), np.float32)
    cls_w_text[:, :n_classes] = wt
    cls_w_img = np.zeros((img_k, n_pad), np.float32)       # (288, 128): 12x smaller than before
    cls_w_img[:, :n_classes] = wi.reshape(img_k, n_classes)
    cls_b = np.zeros((1, n_pad), np.float32)
    cls_b[0, :n_classes] = cb

    return {
        "emb": emb,
        "pooler_w": pooler_w.astype(jnp.bfloat16),
        "pooler_b": pooler_b,
        # image branch (banded weights; lanes = (W, C) with C padded 3 -> 8 on the input)
        "conv1_w": jnp.asarray(_banded_conv_weight(w1, 26, 24, 8, c1), jnp.bfloat16),
        "conv1_b": jnp.asarray(np.tile(b1, 24)[None, :], jnp.float32),     # (1, 192)
        "conv2_w": jnp.asarray(_banded_conv_weight(w2, 14, 12, c1, c2), jnp.bfloat16),
        "conv2_b": jnp.asarray(np.tile(b2, 12)[None, :], jnp.float32),     # (1, 96)
        "selw1": jnp.asarray(np.stack([_pool_sel_lanes(24, 12, c1, ph, 1) for ph in (0, 1)])),
        "selh1": jnp.asarray(np.stack([_pool_sel_rows(24, 12, ph, 1) for ph in (0, 1)])),
        "selw2": jnp.asarray(np.stack([_pool_sel_lanes(12, 6, c2, ph, 0) for ph in (0, 1)])),
        "selh2": jnp.asarray(np.stack([_pool_sel_rows(12, 6, ph, 0) for ph in (0, 1)])),
        # fused classification head (text block + image block, no concat)
        "cls_w_text": jnp.asarray(cls_w_text, jnp.bfloat16),
        "cls_w_img": jnp.asarray(cls_w_img, jnp.bfloat16),
        "cls_b": jnp.asarray(cls_b, jnp.float32),
    }


# ----------------------------------------------------------------------------
# Forward
# ----------------------------------------------------------------------------
def mix_model_forward(params, text, text_input_mask, image, n_classes=2):
    B = text.shape[0]

    # ---- text embedding gather stays in XLA (data-dependent row gather) ------
    emb = jnp.take(params["emb"], text, axis=0)               # (B, S, H) f32
    mask3 = text_input_mask.astype(jnp.int32)[:, None, :]     # (B, 1, S), cast in-kernel

    # ---- image boundary layout prep (only remaining XLA glue on the image path)
    x = jnp.transpose(image, (0, 2, 3, 1))                    # NCHW -> NHWC
    x = jnp.pad(x, ((0, 0), (1, 1), (1, 1), (0, 8 - x.shape[-1])))  # halo + C pad to 8
    x = x.reshape(B, x.shape[1], -1)                          # (B, 26, 208): lanes = (W, C)

    # ---- fused image branch: conv1 -> pool -> conv2 -> pool, one launch ------
    feat = pallas_image_branch(x, params)                     # (B, 6, 48) bf16
    img_flat = feat.reshape(B, 1, -1)                         # (B, 1, 288), contiguous (free)

    # ---- fused text branch + classification head, one launch -----------------
    logits = pallas_text_head(emb, mask3, img_flat, params)   # (B, 1, 128) lane-dense
    return logits[:, 0, :n_classes]


# ----------------------------------------------------------------------------
if __name__ == "__main__":
    B, S, H, V, n_classes = 2, 8, 32, 100, 2
    key = jax.random.PRNGKey(0)
    k_text, k_img = jax.random.split(key)

    text = jax.random.randint(k_text, (B, S), 0, V, dtype=jnp.int32)
    lengths = jnp.array([S, S - 3], jnp.int32)
    text_input_mask = (jnp.arange(S)[None, :] < lengths[:, None]).astype(jnp.int32)
    image = jax.random.normal(k_img, (B, 3, 24, 24), jnp.float32)

    params = init_params(jax.random.PRNGKey(42), vocab=V, hidden=H,
                         n_classes=n_classes)

    out = jax.jit(mix_model_forward)(params, text, text_input_mask, image)
    out = jax.block_until_ready(out)
    assert out.shape == (B, n_classes), out.shape
    assert bool(jnp.all(jnp.isfinite(out)))
    print("KERNEL_OK")
</pallas_src>

<mosaic_0001>
module attributes {stable_mosaic.version = 11 : i64} {
  func.func @_image_branch_kernel(%arg0: i32, %arg1: memref<1x26x208xf32, #tpu.memory_space<vmem>>, %arg2: memref<3x208x192xbf16, #tpu.memory_space<vmem>>, %arg3: memref<1x192xf32, #tpu.memory_space<vmem>>, %arg4: memref<2x192x112xf32, #tpu.memory_space<vmem>>, %arg5: memref<2x14x24xf32, #tpu.memory_space<vmem>>, %arg6: memref<3x112x96xbf16, #tpu.memory_space<vmem>>, %arg7: memref<1x96xf32, #tpu.memory_space<vmem>>, %arg8: memref<2x96x48xf32, #tpu.memory_space<vmem>>, %arg9: memref<2x6x12xf32, #tpu.memory_space<vmem>>, %arg10: memref<1x6x48xbf16, #tpu.memory_space<vmem>>) attributes {dimension_semantics = [#tpu.dimension_semantics<parallel>], iteration_bounds = array<i64: 2>, scalar_prefetch = 0 : i64, scratch_operands = 0 : i64, tpu.core_type = #tpu.core_type<tc>, window_params = [{transform_indices = @transform_0, window_bounds = array<i64: 1, 26, 208>}, {pipeline_mode = #tpu.pipeline_mode<synchronous>, transform_indices = @transform_1, window_bounds = array<i64: 3, 208, 192>}, {pipeline_mode = #tpu.pipeline_mode<synchronous>, transform_indices = @transform_2, window_bounds = array<i64: 1, 192>}, {pipeline_mode = #tpu.pipeline_mode<synchronous>, transform_indices = @transform_3, window_bounds = array<i64: 2, 192, 112>}, {pipeline_mode = #tpu.pipeline_mode<synchronous>, transform_indices = @transform_4, window_bounds = array<i64: 2, 14, 24>}, {pipeline_mode = #tpu.pipeline_mode<synchronous>, transform_indices = @transform_5, window_bounds = array<i64: 3, 112, 96>}, {pipeline_mode = #tpu.pipeline_mode<synchronous>, transform_indices = @transform_6, window_bounds = array<i64: 1, 96>}, {pipeline_mode = #tpu.pipeline_mode<synchronous>, transform_indices = @transform_7, window_bounds = array<i64: 2, 96, 48>}, {pipeline_mode = #tpu.pipeline_mode<synchronous>, transform_indices = @transform_8, window_bounds = array<i64: 2, 6, 12>}, {transform_indices = @transform_9, window_bounds = array<i64: 1, 6, 48>}]} {
    %cst = arith.constant 0.000000e+00 : f32
    %0 = vector.broadcast %cst : f32 to vector<24x192xf32>
    %c0 = arith.constant 0 : index
    %c0_0 = arith.constant 0 : index
    %c0_1 = arith.constant 0 : index
    %1 = vector.load %arg1[%c0, %c0_0, %c0_1] : memref<1x26x208xf32, #tpu.memory_space<vmem>>, vector<1x24x208xf32>
    %2 = vector.shape_cast %1 : vector<1x24x208xf32> to vector<24x208xf32>
    %3 = arith.truncf %2 : vector<24x208xf32> to vector<24x208xbf16>
    %c0_2 = arith.constant 0 : index
    %c0_3 = arith.constant 0 : index
    %c0_4 = arith.constant 0 : index
    %4 = vector.load %arg2[%c0_2, %c0_3, %c0_4] : memref<3x208x192xbf16, #tpu.memory_space<vmem>>, vector<1x208x192xbf16>
    %5 = vector.shape_cast %4 : vector<1x208x192xbf16> to vector<208x192xbf16>
    %cst_5 = arith.constant dense<0.000000e+00> : vector<24x192xf32>
    %6 = tpu.matmul %3, %5, %cst_5 {dimension_numbers = #tpu.dot_dimension_numbers<[1], [0], [0], [1], [0, 0, 1, 1], [], []>} : vector<24x208xbf16>, vector<208x192xbf16>, vector<24x192xf32> -> vector<24x192xf32>
    %7 = arith.addf %0, %6 : vector<24x192xf32>
    %c0_6 = arith.constant 0 : index
    %c1 = arith.constant 1 : index
    %c0_7 = arith.constant 0 : index
    %8 = vector.load %arg1[%c0_6, %c1, %c0_7] : memref<1x26x208xf32, #tpu.memory_space<vmem>>, vector<1x24x208xf32>
    %9 = vector.shape_cast %8 : vector<1x24x208xf32> to vector<24x208xf32>
    %10 = arith.truncf %9 : vector<24x208xf32> to vector<24x208xbf16>
    %c1_8 = arith.constant 1 : index
    %c0_9 = arith.constant 0 : index
    %c0_10 = arith.constant 0 : index
    %11 = vector.load %arg2[%c1_8, %c0_9, %c0_10] : memref<3x208x192xbf16, #tpu.memory_space<vmem>>, vector<1x208x192xbf16>
    %12 = vector.shape_cast %11 : vector<1x208x192xbf16> to vector<208x192xbf16>
    %cst_11 = arith.constant dense<0.000000e+00> : vector<24x192xf32>
    %13 = tpu.matmul %10, %12, %cst_11 {dimension_numbers = #tpu.dot_dimension_numbers<[1], [0], [0], [1], [0, 0, 1, 1], [], []>} : vector<24x208xbf16>, vector<208x192xbf16>, vector<24x192xf32> -> vector<24x192xf32>
    %14 = arith.addf %7, %13 : vector<24x192xf32>
    %c0_12 = arith.constant 0 : index
    %c2 = arith.constant 2 : index
    %c0_13 = arith.constant 0 : index
    %15 = vector.load %arg1[%c0_12, %c2, %c0_13] : memref<1x26x208xf32, #tpu.memory_space<vmem>>, vector<1x24x208xf32>
    %16 = vector.shape_cast %15 : vector<1x24x208xf32> to vector<24x208xf32>
    %17 = arith.truncf %16 : vector<24x208xf32> to vector<24x208xbf16>
    %c2_14 = arith.constant 2 : index
    %c0_15 = arith.constant 0 : index
    %c0_16 = arith.constant 0 : index
    %18 = vector.load %arg2[%c2_14, %c0_15, %c0_16] : memref<3x208x192xbf16, #tpu.memory_space<vmem>>, vector<1x208x192xbf16>
    %19 = vector.shape_cast %18 : vector<1x208x192xbf16> to vector<208x192xbf16>
    %cst_17 = arith.constant dense<0.000000e+00> : vector<24x192xf32>
    %20 = tpu.matmul %17, %19, %cst_17 {dimension_numbers = #tpu.dot_dimension_numbers<[1], [0], [0], [1], [0, 0, 1, 1], [], []>} : vector<24x208xbf16>, vector<208x192xbf16>, vector<24x192xf32> -> vector<24x192xf32>
    %21 = arith.addf %14, %20 : vector<24x192xf32>
    %c0_18 = arith.constant 0 : index
    %c0_19 = arith.constant 0 : index
    %22 = vector.load %arg3[%c0_18, %c0_19] : memref<1x192xf32, #tpu.memory_space<vmem>>, vector<1x192xf32>
    %23 = vector.broadcast %22 : vector<1x192xf32> to vector<24x192xf32>
    %24 = arith.addf %21, %23 : vector<24x192xf32>
    %cst_20 = arith.constant 0.000000e+00 : f32
    %25 = vector.broadcast %cst_20 : f32 to vector<24x192xf32>
    %26 = arith.maximumf %24, %25 : vector<24x192xf32>
    %c0_21 = arith.constant 0 : index
    %c0_22 = arith.constant 0 : index
    %c0_23 = arith.constant 0 : index
    %27 = vector.load %arg4[%c0_21, %c0_22, %c0_23] : memref<2x192x112xf32, #tpu.memory_space<vmem>>, vector<1x192x112xf32>
    %28 = vector.shape_cast %27 : vector<1x192x112xf32> to vector<192x112xf32>
    %cst_24 = arith.constant dense<0.000000e+00> : vector<24x112xf32>
    %29 = tpu.matmul %26, %28, %cst_24 {dimension_numbers = #tpu.dot_dimension_numbers<[1], [0], [0], [1], [0, 0, 1, 1], [], []>} : vector<24x192xf32>, vector<192x112xf32>, vector<24x112xf32> -> vector<24x112xf32>
    %c1_25 = arith.constant 1 : index
    %c0_26 = arith.constant 0 : index
    %c0_27 = arith.constant 0 : index
    %30 = vector.load %arg4[%c1_25, %c0_26, %c0_27] : memref<2x192x112xf32, #tpu.memory_space<vmem>>, vector<1x192x112xf32>
    %31 = vector.shape_cast %30 : vector<1x192x112xf32> to vector<192x112xf32>
    %cst_28 = arith.constant dense<0.000000e+00> : vector<24x112xf32>
    %32 = tpu.matmul %26, %31, %cst_28 {dimension_numbers = #tpu.dot_dimension_numbers<[1], [0], [0], [1], [0, 0, 1, 1], [], []>} : vector<24x192xf32>, vector<192x112xf32>, vector<24x112xf32> -> vector<24x112xf32>
    %33 = arith.maximumf %29, %32 : vector<24x112xf32>
    %c0_29 = arith.constant 0 : index
    %c0_30 = arith.constant 0 : index
    %c0_31 = arith.constant 0 : index
    %34 = vector.load %arg5[%c0_29, %c0_30, %c0_31] : memref<2x14x24xf32, #tpu.memory_space<vmem>>, vector<1x14x24xf32>
    %35 = vector.shape_cast %34 : vector<1x14x24xf32> to vector<14x24xf32>
    %cst_32 = arith.constant dense<0.000000e+00> : vector<14x112xf32>
    %36 = tpu.matmul %35, %33, %cst_32 {dimension_numbers = #tpu.dot_dimension_numbers<[1], [0], [0], [1], [0, 0, 1, 1], [], []>} : vector<14x24xf32>, vector<24x112xf32>, vector<14x112xf32> -> vector<14x112xf32>
    %c1_33 = arith.constant 1 : index
    %c0_34 = arith.constant 0 : index
    %c0_35 = arith.constant 0 : index
    %37 = vector.load %arg5[%c1_33, %c0_34, %c0_35] : memref<2x14x24xf32, #tpu.memory_space<vmem>>, vector<1x14x24xf32>
    %38 = vector.shape_cast %37 : vector<1x14x24xf32> to vector<14x24xf32>
    %cst_36 = arith.constant dense<0.000000e+00> : vector<14x112xf32>
    %39 = tpu.matmul %38, %33, %cst_36 {dimension_numbers = #tpu.dot_dimension_numbers<[1], [0], [0], [1], [0, 0, 1, 1], [], []>} : vector<14x24xf32>, vector<24x112xf32>, vector<14x112xf32> -> vector<14x112xf32>
    %40 = arith.maximumf %36, %39 : vector<14x112xf32>
    %cst_37 = arith.constant 0.000000e+00 : f32
    %41 = vector.broadcast %cst_37 : f32 to vector<12x96xf32>
    %42 = vector.extract_strided_slice %40 {offsets = [0, 0], sizes = [12, 112], strides = [1, 1]} : vector<14x112xf32> to vector<12x112xf32>
    %43 = arith.truncf %42 : vector<12x112xf32> to vector<12x112xbf16>
    %c0_38 = arith.constant 0 : index
    %c0_39 = arith.constant 0 : index
    %c0_40 = arith.constant 0 : index
    %44 = vector.load %arg6[%c0_38, %c0_39, %c0_40] : memref<3x112x96xbf16, #tpu.memory_space<vmem>>, vector<1x112x96xbf16>
    %45 = vector.shape_cast %44 : vector<1x112x96xbf16> to vector<112x96xbf16>
    %cst_41 = arith.constant dense<0.000000e+00> : vector<12x96xf32>
    %46 = tpu.matmul %43, %45, %cst_41 {dimension_numbers = #tpu.dot_dimension_numbers<[1], [0], [0], [1], [0, 0, 1, 1], [], []>} : vector<12x112xbf16>, vector<112x96xbf16>, vector<12x96xf32> -> vector<12x96xf32>
    %47 = arith.addf %41, %46 : vector<12x96xf32>
    %48 = vector.extract_strided_slice %40 {offsets = [1, 0], sizes = [12, 112], strides = [1, 1]} : vector<14x112xf32> to vector<12x112xf32>
    %49 = arith.truncf %48 : vector<12x112xf32> to vector<12x112xbf16>
    %c1_42 = arith.constant 1 : index
    %c0_43 = arith.constant 0 : index
    %c0_44 = arith.constant 0 : index
    %50 = vector.load %arg6[%c1_42, %c0_43, %c0_44] : memref<3x112x96xbf16, #tpu.memory_space<vmem>>, vector<1x112x96xbf16>
    %51 = vector.shape_cast %50 : vector<1x112x96xbf16> to vector<112x96xbf16>
    %cst_45 = arith.constant dense<0.000000e+00> : vector<12x96xf32>
    %52 = tpu.matmul %49, %51, %cst_45 {dimension_numbers = #tpu.dot_dimension_numbers<[1], [0], [0], [1], [0, 0, 1, 1], [], []>} : vector<12x112xbf16>, vector<112x96xbf16>, vector<12x96xf32> -> vector<12x96xf32>
    %53 = arith.addf %47, %52 : vector<12x96xf32>
    %54 = vector.extract_strided_slice %40 {offsets = [2, 0], sizes = [12, 112], strides = [1, 1]} : vector<14x112xf32> to vector<12x112xf32>
    %55 = arith.truncf %54 : vector<12x112xf32> to vector<12x112xbf16>
    %c2_46 = arith.constant 2 : index
    %c0_47 = arith.constant 0 : index
    %c0_48 = arith.constant 0 : index
    %56 = vector.load %arg6[%c2_46, %c0_47, %c0_48] : memref<3x112x96xbf16, #tpu.memory_space<vmem>>, vector<1x112x96xbf16>
    %57 = vector.shape_cast %56 : vector<1x112x96xbf16> to vector<112x96xbf16>
    %cst_49 = arith.constant dense<0.000000e+00> : vector<12x96xf32>
    %58 = tpu.matmul %55, %57, %cst_49 {dimension_numbers = #tpu.dot_dimension_numbers<[1], [0], [0], [1], [0, 0, 1, 1], [], []>} : vector<12x112xbf16>, vector<112x96xbf16>, vector<12x96xf32> -> vector<12x96xf32>
    %59 = arith.addf %53, %58 : vector<12x96xf32>
    %c0_50 = arith.constant 0 : index
    %c0_51 = arith.constant 0 : index
    %60 = vector.load %arg7[%c0_50, %c0_51] : memref<1x96xf32, #tpu.memory_space<vmem>>, vector<1x96xf32>
    %61 = vector.broadcast %60 : vector<1x96xf32> to vector<12x96xf32>
    %62 = arith.addf %59, %61 : vector<12x96xf32>
    %cst_52 = arith.constant 0.000000e+00 : f32
    %63 = vector.broadcast %cst_52 : f32 to vector<12x96xf32>
    %64 = arith.maximumf %62, %63 : vector<12x96xf32>
    %c0_53 = arith.constant 0 : index
    %c0_54 = arith.constant 0 : index
    %c0_55 = arith.constant 0 : index
    %65 = vector.load %arg8[%c0_53, %c0_54, %c0_55] : memref<2x96x48xf32, #tpu.memory_space<vmem>>, vector<1x96x48xf32>
    %66 = vector.shape_cast %65 : vector<1x96x48xf32> to vector<96x48xf32>
    %cst_56 = arith.constant dense<0.000000e+00> : vector<12x48xf32>
    %67 = tpu.matmul %64, %66, %cst_56 {dimension_numbers = #tpu.dot_dimension_numbers<[1], [0], [0], [1], [0, 0, 1, 1], [], []>} : vector<12x96xf32>, vector<96x48xf32>, vector<12x48xf32> -> vector<12x48xf32>
    %c1_57 = arith.constant 1 : index
    %c0_58 = arith.constant 0 : index
    %c0_59 = arith.constant 0 : index
    %68 = vector.load %arg8[%c1_57, %c0_58, %c0_59] : memref<2x96x48xf32, #tpu.memory_space<vmem>>, vector<1x96x48xf32>
    %69 = vector.shape_cast %68 : vector<1x96x48xf32> to vector<96x48xf32>
    %cst_60 = arith.constant dense<0.000000e+00> : vector<12x48xf32>
    %70 = tpu.matmul %64, %69, %cst_60 {dimension_numbers = #tpu.dot_dimension_numbers<[1], [0], [0], [1], [0, 0, 1, 1], [], []>} : vector<12x96xf32>, vector<96x48xf32>, vector<12x48xf32> -> vector<12x48xf32>
    %71 = arith.maximumf %67, %70 : vector<12x48xf32>
    %c0_61 = arith.constant 0 : index
    %c0_62 = arith.constant 0 : index
    %c0_63 = arith.constant 0 : index
    %72 = vector.load %arg9[%c0_61, %c0_62, %c0_63] : memref<2x6x12xf32, #tpu.memory_space<vmem>>, vector<1x6x12xf32>
    %73 = vector.shape_cast %72 : vector<1x6x12xf32> to vector<6x12xf32>
    %cst_64 = arith.constant dense<0.000000e+00> : vector<6x48xf32>
    %74 = tpu.matmul %73, %71, %cst_64 {dimension_numbers = #tpu.dot_dimension_numbers<[1], [0], [0], [1], [0, 0, 1, 1], [], []>} : vector<6x12xf32>, vector<12x48xf32>, vector<6x48xf32> -> vector<6x48xf32>
    %c1_65 = arith.constant 1 : index
    %c0_66 = arith.constant 0 : index
    %c0_67 = arith.constant 0 : index
    %75 = vector.load %arg9[%c1_65, %c0_66, %c0_67] : memref<2x6x12xf32, #tpu.memory_space<vmem>>, vector<1x6x12xf32>
    %76 = vector.shape_cast %75 : vector<1x6x12xf32> to vector<6x12xf32>
    %cst_68 = arith.constant dense<0.000000e+00> : vector<6x48xf32>
    %77 = tpu.matmul %76, %71, %cst_68 {dimension_numbers = #tpu.dot_dimension_numbers<[1], [0], [0], [1], [0, 0, 1, 1], [], []>} : vector<6x12xf32>, vector<12x48xf32>, vector<6x48xf32> -> vector<6x48xf32>
    %78 = arith.maximumf %74, %77 : vector<6x48xf32>
    %79 = arith.truncf %78 : vector<6x48xf32> to vector<6x48xbf16>
    %c0_69 = arith.constant 0 : index
    %c0_70 = arith.constant 0 : index
    %c0_71 = arith.constant 0 : index
    %80 = vector.load %arg10[%c0_69, %c0_70, %c0_71] : memref<1x6x48xbf16, #tpu.memory_space<vmem>>, vector<1x6x48xbf16>
    %81 = vector.shape_cast %80 : vector<1x6x48xbf16> to vector<6x48xbf16>
    %82 = vector.shape_cast %79 : vector<6x48xbf16> to vector<1x6x48xbf16>
    tpu.vector_store %arg10[%c0_69, %c0_70, %c0_71], %82 {strides = array<i32>} : memref<1x6x48xbf16, #tpu.memory_space<vmem>>, vector<1x6x48xbf16>,
    return
  }
  func.func @transform_0(%arg0: i32) -> (i32, i32, i32) {
    %c0_i32 = arith.constant 0 : i32
    %c0_i32_0 = arith.constant 0 : i32
    %c0_i32_1 = arith.constant 0 : i32
    return %arg0, %c0_i32, %c0_i32_0 : i32, i32, i32
  }
  func.func @transform_1(%arg0: i32) -> (i32, i32, i32) {
    %c0_i32 = arith.constant 0 : i32
    %c0_i32_0 = arith.constant 0 : i32
    %c0_i32_1 = arith.constant 0 : i32
    %c0_i32_2 = arith.constant 0 : i32
    return %c0_i32, %c0_i32_0, %c0_i32_1 : i32, i32, i32
  }
  func.func @transform_2(%arg0: i32) -> (i32, i32) {
    %c0_i32 = arith.constant 0 : i32
    %c0_i32_0 = arith.constant 0 : i32
    %c0_i32_1 = arith.constant 0 : i32
    return %c0_i32, %c0_i32_0 : i32, i32
  }
  func.func @transform_3(%arg0: i32) -> (i32, i32, i32) {
    %c0_i32 = arith.constant 0 : i32
    %c0_i32_0 = arith.constant 0 : i32
    %c0_i32_1 = arith.constant 0 : i32
    %c0_i32_2 = arith.constant 0 : i32
    return %c0_i32, %c0_i32_0, %c0_i32_1 : i32, i32, i32
  }
  func.func @transform_4(%arg0: i32) -> (i32, i32, i32) {
    %c0_i32 = arith.constant 0 : i32
    %c0_i32_0 = arith.constant 0 : i32
    %c0_i32_1 = arith.constant 0 : i32
    %c0_i32_2 = arith.constant 0 : i32
    return %c0_i32, %c0_i32_0, %c0_i32_1 : i32, i32, i32
  }
  func.func @transform_5(%arg0: i32) -> (i32, i32, i32) {
    %c0_i32 = arith.constant 0 : i32
    %c0_i32_0 = arith.constant 0 : i32
    %c0_i32_1 = arith.constant 0 : i32
    %c0_i32_2 = arith.constant 0 : i32
    return %c0_i32, %c0_i32_0, %c0_i32_1 : i32, i32, i32
  }
  func.func @transform_6(%arg0: i32) -> (i32, i32) {
    %c0_i32 = arith.constant 0 : i32
    %c0_i32_0 = arith.constant 0 : i32
    %c0_i32_1 = arith.constant 0 : i32
    return %c0_i32, %c0_i32_0 : i32, i32
  }
  func.func @transform_7(%arg0: i32) -> (i32, i32, i32) {
    %c0_i32 = arith.constant 0 : i32
    %c0_i32_0 = arith.constant 0 : i32
    %c0_i32_1 = arith.constant 0 : i32
    %c0_i32_2 = arith.constant 0 : i32
    return %c0_i32, %c0_i32_0, %c0_i32_1 : i32, i32, i32
  }
  func.func @transform_8(%arg0: i32) -> (i32, i32, i32) {
    %c0_i32 = arith.constant 0 : i32
    %c0_i32_0 = arith.constant 0 : i32
    %c0_i32_1 = arith.constant 0 : i32
    %c0_i32_2 = arith.constant 0 : i32
    return %c0_i32, %c0_i32_0, %c0_i32_1 : i32, i32, i32
  }
  func.func @transform_9(%arg0: i32) -> (i32, i32, i32) {
    %c0_i32 = arith.constant 0 : i32
    %c0_i32_0 = arith.constant 0 : i32
    %c0_i32_1 = arith.constant 0 : i32
    return %arg0, %c0_i32, %c0_i32_0 : i32, i32, i32
  }
}

module attributes {stable_mosaic.version = 11 : i64} {
  func.func @_text_head_kernel(%arg0: i32, %arg1: memref<1x8x32xf32, #tpu.memory_space<vmem>>, %arg2: memref<1x1x8xi32, #tpu.memory_space<vmem>>, %arg3: memref<32x32xbf16, #tpu.memory_space<vmem>>, %arg4: memref<1x32xf32, #tpu.memory_space<vmem>>, %arg5: memref<1x1x288xbf16, #tpu.memory_space<vmem>>, %arg6: memref<32x128xbf16, #tpu.memory_space<vmem>>, %arg7: memref<288x128xbf16, #tpu.memory_space<vmem>>, %arg8: memref<1x128xf32, #tpu.memory_space<vmem>>, %arg9: memref<1x1x128xf32, #tpu.memory_space<vmem>>) attributes {dimension_semantics = [#tpu.dimension_semantics<parallel>], iteration_bounds = array<i64: 2>, scalar_prefetch = 0 : i64, scratch_operands = 0 : i64, tpu.core_type = #tpu.core_type<tc>, window_params = [{transform_indices = @transform_0, window_bounds = array<i64: 1, 8, 32>}, {transform_indices = @transform_1, window_bounds = array<i64: 1, 1, 8>}, {pipeline_mode = #tpu.pipeline_mode<synchronous>, transform_indices = @transform_2, window_bounds = array<i64: 32, 32>}, {pipeline_mode = #tpu.pipeline_mode<synchronous>, transform_indices = @transform_3, window_bounds = array<i64: 1, 32>}, {transform_indices = @transform_4, window_bounds = array<i64: 1, 1, 288>}, {pipeline_mode = #tpu.pipeline_mode<synchronous>, transform_indices = @transform_5, window_bounds = array<i64: 32, 128>}, {pipeline_mode = #tpu.pipeline_mode<synchronous>, transform_indices = @transform_6, window_bounds = array<i64: 288, 128>}, {pipeline_mode = #tpu.pipeline_mode<synchronous>, transform_indices = @transform_7, window_bounds = array<i64: 1, 128>}, {transform_indices = @transform_8, window_bounds = array<i64: 1, 1, 128>}]} {
    %c0 = arith.constant 0 : index
    %c0_0 = arith.constant 0 : index
    %c0_1 = arith.constant 0 : index
    %0 = vector.load %arg1[%c0, %c0_0, %c0_1] : memref<1x8x32xf32, #tpu.memory_space<vmem>>, vector<1x8x32xf32>
    %1 = vector.shape_cast %0 : vector<1x8x32xf32> to vector<8x32xf32>
    %c0_2 = arith.constant 0 : index
    %c0_3 = arith.constant 0 : index
    %c0_4 = arith.constant 0 : index
    %2 = vector.load %arg2[%c0_2, %c0_3, %c0_4] : memref<1x1x8xi32, #tpu.memory_space<vmem>>, vector<1x1x8xi32>
    %3 = vector.shape_cast %2 : vector<1x1x8xi32> to vector<1x8xi32>
    %4 = arith.sitofp %3 : vector<1x8xi32> to vector<1x8xf32>
    %cst = arith.constant dense<0.000000e+00> : vector<1x32xf32>
    %5 = tpu.matmul %4, %1, %cst {dimension_numbers = #tpu.dot_dimension_numbers<[1], [0], [0], [1], [0, 0, 1, 1], [], []>} : vector<1x8xf32>, vector<8x32xf32>, vector<1x32xf32> -> vector<1x32xf32>
    %cst_5 = arith.constant dense<0.000000e+00> : vector<1xf32>
    %6 = vector.multi_reduction <add>, %4, %cst_5 [1] : vector<1x8xf32> to vector<1xf32>
    %7 = vector.shape_cast %6 : vector<1xf32> to vector<1x1xf32>
    %cst_6 = arith.constant 1.000000e+00 : f32
    %8 = vector.broadcast %cst_6 : f32 to vector<1x1xf32>
    %9 = arith.maximumf %7, %8 : vector<1x1xf32>
    %10 = vector.broadcast %9 : vector<1x1xf32> to vector<1x32xf32>
    %11 = arith.divf %5, %10 : vector<1x32xf32>
    %12 = arith.truncf %11 : vector<1x32xf32> to vector<1x32xbf16>
    %c0_7 = arith.constant 0 : index
    %c0_8 = arith.constant 0 : index
    %13 = vector.load %arg3[%c0_7, %c0_8] : memref<32x32xbf16, #tpu.memory_space<vmem>>, vector<32x32xbf16>
    %cst_9 = arith.constant dense<0.000000e+00> : vector<1x32xf32>
    %14 = tpu.matmul %12, %13, %cst_9 {dimension_numbers = #tpu.dot_dimension_numbers<[1], [0], [0], [1], [0, 0, 1, 1], [], []>} : vector<1x32xbf16>, vector<32x32xbf16>, vector<1x32xf32> -> vector<1x32xf32>
    %c0_10 = arith.constant 0 : index
    %c0_11 = arith.constant 0 : index
    %15 = vector.load %arg4[%c0_10, %c0_11] : memref<1x32xf32, #tpu.memory_space<vmem>>, vector<1x32xf32>
    %16 = arith.addf %14, %15 : vector<1x32xf32>
    %17 = math.tanh %16 : vector<1x32xf32>
    %18 = arith.truncf %17 : vector<1x32xf32> to vector<1x32xbf16>
    %c0_12 = arith.constant 0 : index
    %c0_13 = arith.constant 0 : index
    %19 = vector.load %arg6[%c0_12, %c0_13] : memref<32x128xbf16, #tpu.memory_space<vmem>>, vector<32x128xbf16>
    %cst_14 = arith.constant dense<0.000000e+00> : vector<1x128xf32>
    %20 = tpu.matmul %18, %19, %cst_14 {dimension_numbers = #tpu.dot_dimension_numbers<[1], [0], [0], [1], [0, 0, 1, 1], [], []>} : vector<1x32xbf16>, vector<32x128xbf16>, vector<1x128xf32> -> vector<1x128xf32>
    %c0_15 = arith.constant 0 : index
    %c0_16 = arith.constant 0 : index
    %c0_17 = arith.constant 0 : index
    %21 = vector.load %arg5[%c0_15, %c0_16, %c0_17] : memref<1x1x288xbf16, #tpu.memory_space<vmem>>, vector<1x1x288xbf16>
    %22 = vector.shape_cast %21 : vector<1x1x288xbf16> to vector<1x288xbf16>
    %c0_18 = arith.constant 0 : index
    %c0_19 = arith.constant 0 : index
    %23 = vector.load %arg7[%c0_18, %c0_19] : memref<288x128xbf16, #tpu.memory_space<vmem>>, vector<288x128xbf16>
    %cst_20 = arith.constant dense<0.000000e+00> : vector<1x128xf32>
    %24 = tpu.matmul %22, %23, %cst_20 {dimension_numbers = #tpu.dot_dimension_numbers<[1], [0], [0], [1], [0, 0, 1, 1], [], []>} : vector<1x288xbf16>, vector<288x128xbf16>, vector<1x128xf32> -> vector<1x128xf32>
    %25 = arith.addf %20, %24 : vector<1x128xf32>
    %c0_21 = arith.constant 0 : index
    %c0_22 = arith.constant 0 : index
    %26 = vector.load %arg8[%c0_21, %c0_22] : memref<1x128xf32, #tpu.memory_space<vmem>>, vector<1x128xf32>
    %27 = arith.addf %25, %26 : vector<1x128xf32>
    %c0_23 = arith.constant 0 : index
    %c0_24 = arith.constant 0 : index
    %c0_25 = arith.constant 0 : index
    %28 = vector.load %arg9[%c0_23, %c0_24, %c0_25] : memref<1x1x128xf32, #tpu.memory_space<vmem>>, vector<1x1x128xf32>
    %29 = vector.shape_cast %28 : vector<1x1x128xf32> to vector<1x128xf32>
    %30 = vector.shape_cast %27 : vector<1x128xf32> to vector<1x1x128xf32>
    tpu.vector_store %arg9[%c0_23, %c0_24, %c0_25], %30 {strides = array<i32>} : memref<1x1x128xf32, #tpu.memory_space<vmem>>, vector<1x1x128xf32>,
    return
  }
  func.func @transform_0(%arg0: i32) -> (i32, i32, i32) {
    %c0_i32 = arith.constant 0 : i32
    %c0_i32_0 = arith.constant 0 : i32
    %c0_i32_1 = arith.constant 0 : i32
    return %arg0, %c0_i32, %c0_i32_0 : i32, i32, i32
  }
  func.func @transform_1(%arg0: i32) -> (i32, i32, i32) {
    %c0_i32 = arith.constant 0 : i32
    %c0_i32_0 = arith.constant 0 : i32
    %c0_i32_1 = arith.constant 0 : i32
    return %arg0, %c0_i32, %c0_i32_0 : i32, i32, i32
  }
  func.func @transform_2(%arg0: i32) -> (i32, i32) {
    %c0_i32 = arith.constant 0 : i32
    %c0_i32_0 = arith.constant 0 : i32
    %c0_i32_1 = arith.constant 0 : i32
    return %c0_i32, %c0_i32_0 : i32, i32
  }
  func.func @transform_3(%arg0: i32) -> (i32, i32) {
    %c0_i32 = arith.constant 0 : i32
    %c0_i32_0 = arith.constant 0 : i32
    %c0_i32_1 = arith.constant 0 : i32
    return %c0_i32, %c0_i32_0 : i32, i32
  }
  func.func @transform_4(%arg0: i32) -> (i32, i32, i32) {
    %c0_i32 = arith.constant 0 : i32
    %c0_i32_0 = arith.constant 0 : i32
    %c0_i32_1 = arith.constant 0 : i32
    return %arg0, %c0_i32, %c0_i32_0 : i32, i32, i32
  }
  func.func @transform_5(%arg0: i32) -> (i32, i32) {
    %c0_i32 = arith.constant 0 : i32
    %c0_i32_0 = arith.constant 0 : i32
    %c0_i32_1 = arith.constant 0 : i32
    return %c0_i32, %c0_i32_0 : i32, i32
  }
  func.func @transform_6(%arg0: i32) -> (i32, i32) {
    %c0_i32 = arith.constant 0 : i32
    %c0_i32_0 = arith.constant 0 : i32
    %c0_i32_1 = arith.constant 0 : i32
    return %c0_i32, %c0_i32_0 : i32, i32
  }
  func.func @transform_7(%arg0: i32) -> (i32, i32) {
    %c0_i32 = arith.constant 0 : i32
    %c0_i32_0 = arith.constant 0 : i32
    %c0_i32_1 = arith.constant 0 : i32
    return %c0_i32, %c0_i32_0 : i32, i32
  }
  func.func @transform_8(%arg0: i32) -> (i32, i32, i32) {
    %c0_i32 = arith.constant 0 : i32
    %c0_i32_0 = arith.constant 0 : i32
    %c0_i32_1 = arith.constant 0 : i32
    return %arg0, %c0_i32, %c0_i32_0 : i32, i32, i32
  }
}

</mosaic_0001>

<llo_original>
// kernel: mix_model_forward.3
$region0: #{mix_model_forward.3}
  #allocation0 [shape = 'u32[]', space=smem, size = 0x4, offset = 0x4, fixed_abs, tag = 'smem constant byte address 0x4 - core index']
  #allocation1 [shape = 'u32[144,128]{1,0:T(1,128)}', space=vmem, size = 0x12000, scoped, tag = 'internal scratch']
  %s0 = inlined_call_operand.vmem [shape: f32[2,8,32], index: 0, kind: input, shape index: {}]
  %s1 = inlined_call_operand.vmem [shape: s32[2,1,8], index: 1, kind: input, shape index: {}]
  %s2 = inlined_call_operand.vmem [shape: bf16[32,32], index: 2, kind: input, shape index: {}]
  %s3 = inlined_call_operand.vmem [shape: f32[1,32], index: 3, kind: input, shape index: {}]
  %s4 = inlined_call_operand.vmem [shape: bf16[2,1,288], index: 4, kind: input, shape index: {}]
  %s5 = inlined_call_operand.vmem [shape: bf16[32,128], index: 5, kind: input, shape index: {}]
  %s6 = inlined_call_operand.vmem [shape: bf16[288,128], index: 6, kind: input, shape index: {}]
  %s7 = inlined_call_operand.vmem [shape: f32[1,128], index: 7, kind: input, shape index: {}]
  %s8 = inlined_call_operand.hbm [shape: f32[2,1,128], index: 8, kind: output, shape index: {}]
  %s9 = sld [smem:[#allocation0]]
  $region65: #{mix_model_forward.3} parent=0
    _
  %s11 = ssub.s32 1, %s9
  %s12 = scalar_select 0, %s11, %s9
  $region1: #{mix_model_forward.3} parent=0
    #allocation2 [shape = 'u8[1024]{0}', space=vmem, size = 0x400, scoped, tag = 'output window, operand 0']
    #allocation3 [shape = 's32[2]{0}', space=sflag, size = 0x8, scoped, tag = 'scoped memory for mix_model_forward.3']
    %13 = vsyncpa [#allocation3], 0
    %s14 = scalar_lea.sflag [#allocation3], 1
    %15 = vsyncpa %s14, 0
    loop: start=0, step=1, limit=4
    $region2: #{mix_model_forward.3} parent=1 // loop_pre_header
      _
    $region3: #{mix_model_forward.3} parent=1 // loop_header
      %s17 = sphi 0, %s21
      %p18 = scmp.ge.s32.totalorder %s17, 4
      %s27 = sphi 0, %s29
      %s30 = sphi 0, %s27
      %s31 = sphi 0, %s30
      %s47 = sphi 0, %s31
      %s53 = sphi 0, %s55
      %s56 = sphi 0, %s53
      %s57 = sphi 0, %s56
      %s73 = sphi 0, %s57
      %s77 = sphi 0, %s77
      %s79 = sphi 0, %s77
      %s80 = sphi 0, %s79
      %s94 = sphi 0, %s80
      %s98 = sphi 0, %s98
      %s100 = sphi 0, %s98
      %s101 = sphi 0, %s100
      %s115 = sphi 0, %s101
      %s121 = sphi 0, %s123
      %s124 = sphi 0, %s121
      %s125 = sphi 0, %s124
      %s141 = sphi 0, %s125
      %s145 = sphi 0, %s145
      %s147 = sphi 0, %s145
      %s148 = sphi 0, %s147
      %s162 = sphi 0, %s148
      %s166 = sphi 0, %s166
      %s168 = sphi 0, %s166
      %s169 = sphi 0, %s168
      %s183 = sphi 0, %s169
      %s187 = sphi 0, %s187
      %s189 = sphi 0, %s187
      %s190 = sphi 0, %s189
      %s204 = sphi 0, %s190
      %s210 = sphi 0, %s212
      %s213 = sphi 0, %s210
      %s214 = sphi 0, %s213
      %s230 = sphi 0, %s214
    $region4: #{mix_model_forward.3} parent=1 // loop_header_branch
      %20 = sbr.rel (%p18) target = $region8
    $region5: #{mix_model_forward.3} parent=1 // loop_body
      %s22 = ssub.s32 %s17, 1
      %s23 = ssub.s32 %s17, 2
      %s24 = sadd.s32 %s17, 1
      %s25 = ssub.s32 %s17, %s24
      %p26 = scmp.eq.s32.totalorder %s25, 0
      %s28 = sadd.s32 %s27, 1
      %s29 = scalar_select %p26, %s27, %s28
      %p32 = pneg %p26
      %p33 = scmp.eq.s32.totalorder %s17, 1
      %p34 = por %p32, %p33
      %p35 = scmp.ne.s32.totalorder %s27, %s30
      %p36 = scmp.eq.s32.totalorder %s17, 0
      %p37 = por %p35, %p36
      %p38 = scmp.ne.s32.totalorder %s27, %s30
      %p39 = scmp.eq.s32.totalorder %s22, 1
      %p40 = por %p38, %p39
      %p41 = scmp.ne.s32.totalorder %s30, %s31
      %p42 = scmp.eq.s32.totalorder %s22, 0
      %p43 = por %p41, %p42
      %p44 = scmp.ne.s32.totalorder %s30, %s31
      %p45 = scmp.eq.s32.totalorder %s23, 1
      %p46 = por %p44, %p45
      %p48 = scmp.ne.s32.totalorder %s31, %s47
      %p49 = scmp.eq.s32.totalorder %s23, 0
      %p50 = por %p48, %p49
      %s51 = ssub.s32 %s17, %s24
      %p52 = scmp.eq.s32.totalorder %s51, 0
      %s54 = sadd.s32 %s53, 1
      %s55 = scalar_select %p52, %s53, %s54
      %p58 = pneg %p52
      %p59 = scmp.eq.s32.totalorder %s17, 1
      %p60 = por %p58, %p59
      %p61 = scmp.ne.s32.totalorder %s53, %s56
      %p62 = scmp.eq.s32.totalorder %s17, 0
      %p63 = por %p61, %p62
      %p64 = scmp.ne.s32.totalorder %s53, %s56
      %p65 = scmp.eq.s32.totalorder %s22, 1
      %p66 = por %p64, %p65
      %p67 = scmp.ne.s32.totalorder %s56, %s57
      %p68 = scmp.eq.s32.totalorder %s22, 0
      %p69 = por %p67, %p68
      %p70 = scmp.ne.s32.totalorder %s56, %s57
      %p71 = scmp.eq.s32.totalorder %s23, 1
      %p72 = por %p70, %p71
      %p74 = scmp.ne.s32.totalorder %s57, %s73
      %p75 = scmp.eq.s32.totalorder %s23, 0
      %p76 = por %p74, %p75
      %s78 = sadd.s32 %s77, 1
      %p81 = scmp.eq.s32.totalorder %s17, 1
      %p82 = scmp.ne.s32.totalorder %s77, %s79
      %p83 = scmp.eq.s32.totalorder %s17, 0
      %p84 = por %p82, %p83
      %p85 = scmp.ne.s32.totalorder %s77, %s79
      %p86 = scmp.eq.s32.totalorder %s22, 1
      %p87 = por %p85, %p86
      %p88 = scmp.ne.s32.totalorder %s79, %s80
      %p89 = scmp.eq.s32.totalorder %s22, 0
      %p90 = por %p88, %p89
      %p91 = scmp.ne.s32.totalorder %s79, %s80
      %p92 = scmp.eq.s32.totalorder %s23, 1
      %p93 = por %p91, %p92
      %p95 = scmp.ne.s32.totalorder %s80, %s94
      %p96 = scmp.eq.s32.totalorder %s23, 0
      %p97 = por %p95, %p96
      %s99 = sadd.s32 %s98, 1
      %p102 = scmp.eq.s32.totalorder %s17, 1
      %p103 = scmp.ne.s32.totalorder %s98, %s100
      %p104 = scmp.eq.s32.totalorder %s17, 0
      %p105 = por %p103, %p104
      %p106 = scmp.ne.s32.totalorder %s98, %s100
      %p107 = scmp.eq.s32.totalorder %s22, 1
      %p108 = por %p106, %p107
      %p109 = scmp.ne.s32.totalorder %s100, %s101
      %p110 = scmp.eq.s32.totalorder %s22, 0
      %p111 = por %p109, %p110
      %p112 = scmp.ne.s32.totalorder %s100, %s101
      %p113 = scmp.eq.s32.totalorder %s23, 1
      %p114 = por %p112, %p113
      %p116 = scmp.ne.s32.totalorder %s101, %s115
      %p117 = scmp.eq.s32.totalorder %s23, 0
      %p118 = por %p116, %p117
      %s119 = ssub.s32 %s17, %s24
      %p120 = scmp.eq.s32.totalorder %s119, 0
      %s122 = sadd.s32 %s121, 1
      %s123 = scalar_select %p120, %s121, %s122
      %p126 = pneg %p120
      %p127 = scmp.eq.s32.totalorder %s17, 1
      %p128 = por %p126, %p127
      %p129 = scmp.ne.s32.totalorder %s121, %s124
      %p130 = scmp.eq.s32.totalorder %s17, 0
      %p131 = por %p129, %p130
      %p132 = scmp.ne.s32.totalorder %s121, %s124
      %p133 = scmp.eq.s32.totalorder %s22, 1
      %p134 = por %p132, %p133
      %p135 = scmp.ne.s32.totalorder %s124, %s125
      %p136 = scmp.eq.s32.totalorder %s22, 0
      %p137 = por %p135, %p136
      %p138 = scmp.ne.s32.totalorder %s124, %s125
      %p139 = scmp.eq.s32.totalorder %s23, 1
      %p140 = por %p138, %p139
      %p142 = scmp.ne.s32.totalorder %s125, %s141
      %p143 = scmp.eq.s32.totalorder %s23, 0
      %p144 = por %p142, %p143
      %s146 = sadd.s32 %s145, 1
      %p149 = scmp.eq.s32.totalorder %s17, 1
      %p150 = scmp.ne.s32.totalorder %s145, %s147
      %p151 = scmp.eq.s32.totalorder %s17, 0
      %p152 = por %p150, %p151
      %p153 = scmp.ne.s32.totalorder %s145, %s147
      %p154 = scmp.eq.s32.totalorder %s22, 1
      %p155 = por %p153, %p154
      %p156 = scmp.ne.s32.totalorder %s147, %s148
      %p157 = scmp.eq.s32.totalorder %s22, 0
      %p158 = por %p156, %p157
      %p159 = scmp.ne.s32.totalorder %s147, %s148
      %p160 = scmp.eq.s32.totalorder %s23, 1
      %p161 = por %p159, %p160
      %p163 = scmp.ne.s32.totalorder %s148, %s162
      %p164 = scmp.eq.s32.totalorder %s23, 0
      %p165 = por %p163, %p164
      %s167 = sadd.s32 %s166, 1
      %p170 = scmp.eq.s32.totalorder %s17, 1
      %p171 = scmp.ne.s32.totalorder %s166, %s168
      %p172 = scmp.eq.s32.totalorder %s17, 0
      %p173 = por %p171, %p172
      %p174 = scmp.ne.s32.totalorder %s166, %s168
      %p175 = scmp.eq.s32.totalorder %s22, 1
      %p176 = por %p174, %p175
      %p177 = scmp.ne.s32.totalorder %s168, %s169
      %p178 = scmp.eq.s32.totalorder %s22, 0
      %p179 = por %p177, %p178
      %p180 = scmp.ne.s32.totalorder %s168, %s169
      %p181 = scmp.eq.s32.totalorder %s23, 1
      %p182 = por %p180, %p181
      %p184 = scmp.ne.s32.totalorder %s169, %s183
      %p185 = scmp.eq.s32.totalorder %s23, 0
      %p186 = por %p184, %p185
      %s188 = sadd.s32 %s187, 1
      %p191 = scmp.eq.s32.totalorder %s17, 1
      %p192 = scmp.ne.s32.totalorder %s187, %s189
      %p193 = scmp.eq.s32.totalorder %s17, 0
      %p194 = por %p192, %p193
      %p195 = scmp.ne.s32.totalorder %s187, %s189
      %p196 = scmp.eq.s32.totalorder %s22, 1
      %p197 = por %p195, %p196
      %p198 = scmp.ne.s32.totalorder %s189, %s190
      %p199 = scmp.eq.s32.totalorder %s22, 0
      %p200 = por %p198, %p199
      %p201 = scmp.ne.s32.totalorder %s189, %s190
      %p202 = scmp.eq.s32.totalorder %s23, 1
      %p203 = por %p201, %p202
      %p205 = scmp.ne.s32.totalorder %s190, %s204
      %p206 = scmp.eq.s32.totalorder %s23, 0
      %p207 = por %p205, %p206
      %s208 = ssub.s32 %s17, %s24
      %p209 = scmp.eq.s32.totalorder %s208, 0
      %s211 = sadd.s32 %s210, 1
      %s212 = scalar_select %p209, %s210, %s211
      %p215 = pneg %p209
      %p216 = scmp.eq.s32.totalorder %s17, 1
      %p217 = por %p215, %p216
      %p218 = scmp.ne.s32.totalorder %s210, %s213
      %p219 = scmp.eq.s32.totalorder %s17, 0
      %p220 = por %p218, %p219
      %p221 = scmp.ne.s32.totalorder %s210, %s213
      %p222 = scmp.eq.s32.totalorder %s22, 1
      %p223 = por %p221, %p222
      %p224 = scmp.ne.s32.totalorder %s213, %s214
      %p225 = scmp.eq.s32.totalorder %s22, 0
      %p226 = por %p224, %p225
      %p227 = scmp.ne.s32.totalorder %s213, %s214
      %p228 = scmp.eq.s32.totalorder %s23, 1
      %p229 = por %p227, %p228
      %p231 = scmp.ne.s32.totalorder %s214, %s230
      %p232 = scmp.eq.s32.totalorder %s23, 0
      %p233 = por %p231, %p232
      %p234 = scmp.le.s32.totalorder 1, %s17
      %p235 = scmp.lt.s32.totalorder %s17, 3
      %p236 = pnand %p234, %p235
      %p237 = pneg %p236
      // Predicated region
      $region9: #{mix_model_forward.3} parent=5 // pred_check
        _
      $region10: #{mix_model_forward.3} parent=5 // pred_check_branch
        %239 = sbr.rel (%p236) target = $region12
      $region11: #{mix_model_forward.3} parent=5 // pred_region
        %s240 = ssub.s32 %s17, 1
        // Predicated region
        $region13: #{mix_model_forward.3} parent=11 // pred_check
          %p241 = pneg %p90
        $region14: #{mix_model_forward.3} parent=11 // pred_check_branch
          %243 = sbr.rel (%p241) target = $region16
        $region15: #{mix_model_forward.3} parent=11 // pred_region
          _
        $region16: #{mix_model_forward.3} parent=11 // pred_fallthru
          _
        // Predicated region
        $region17: #{mix_model_forward.3} parent=11 // pred_check
          %p244 = pneg %p111
        $region18: #{mix_model_forward.3} parent=11 // pred_check_branch
          %246 = sbr.rel (%p244) target = $region20
        $region19: #{mix_model_forward.3} parent=11 // pred_region
          _
        $region20: #{mix_model_forward.3} parent=11 // pred_fallthru
          _
        // Predicated region
        $region21: #{mix_model_forward.3} parent=11 // pred_check
          %p247 = pneg %p158
        $region22: #{mix_model_forward.3} parent=11 // pred_check_branch
          %249 = sbr.rel (%p247) target = $region24
        $region23: #{mix_model_forward.3} parent=11 // pred_region
          _
        $region24: #{mix_model_forward.3} parent=11 // pred_fallthru
          _
        // Predicated region
        $region25: #{mix_model_forward.3} parent=11 // pred_check
          %p250 = pneg %p179
        $region26: #{mix_model_forward.3} parent=11 // pred_check_branch
          %252 = sbr.rel (%p250) target = $region28
        $region27: #{mix_model_forward.3} parent=11 // pred_region
          _
        $region28: #{mix_model_forward.3} parent=11 // pred_fallthru
          _
        // Predicated region
        $region29: #{mix_model_forward.3} parent=11 // pred_check
          %p253 = pneg %p200
        $region30: #{mix_model_forward.3} parent=11 // pred_check_branch
          %255 = sbr.rel (%p253) target = $region32
        $region31: #{mix_model_forward.3} parent=11 // pred_region
          _
        $region32: #{mix_model_forward.3} parent=11 // pred_fallthru
          _
      $region12: #{mix_model_forward.3} parent=5 // pred_fallthru
        _
      %p256 = scmp.lt.s32.totalorder %s17, 2
      // Predicated region
      $region33: #{mix_model_forward.3} parent=5 // pred_check
        %p257 = pneg %p256
      $region34: #{mix_model_forward.3} parent=5 // pred_check_branch
        %259 = sbr.rel (%p257) target = $region36
      $region35: #{mix_model_forward.3} parent=5 // pred_region
        // Predicated region
        $region37: #{mix_model_forward.3} parent=35 // pred_check
          %p260 = pneg %p37
        $region38: #{mix_model_forward.3} parent=35 // pred_check_branch
          %262 = sbr.rel (%p260) target = $region40
        $region39: #{mix_model_forward.3} parent=35 // pred_region
          %p263 = scmp.lt.s32.totalorder %s17, 1
          %s264 = scalar_select %p263, %s17, 1
          %s265 = smul.addr %s264, 8
          %s266 = scalar_lea.vmem %s0, %s265
        $region40: #{mix_model_forward.3} parent=35 // pred_fallthru
          _
        // Predicated region
        $region41: #{mix_model_forward.3} parent=35 // pred_check
          %p267 = pneg %p63
        $region42: #{mix_model_forward.3} parent=35 // pred_check_branch
          %269 = sbr.rel (%p267) target = $region44
        $region43: #{mix_model_forward.3} parent=35 // pred_region
          %p270 = scmp.lt.s32.totalorder %s17, 1
          %s271 = scalar_select %p270, %s17, 1
          %s272 = scalar_lea.vmem %s1, %s271
        $region44: #{mix_model_forward.3} parent=35 // pred_fallthru
          _
        // Predicated region
        $region45: #{mix_model_forward.3} parent=35 // pred_check
          %p273 = pneg %p131
        $region46: #{mix_model_forward.3} parent=35 // pred_check_branch
          %275 = sbr.rel (%p273) target = $region48
        $region47: #{mix_model_forward.3} parent=35 // pred_region
          %p276 = scmp.lt.s32.totalorder %s17, 1
          %s277 = scalar_select %p276, %s17, 1
          %s278 = smul.addr %s277, 3
          %s279 = scalar_lea.vmem %s4, %s278
        $region48: #{mix_model_forward.3} parent=35 // pred_fallthru
          _
      $region36: #{mix_model_forward.3} parent=5 // pred_fallthru
        _
      %p280 = scmp.le.s32.totalorder 1, %s17
      %p281 = scmp.lt.s32.totalorder %s17, 3
      %p282 = pnand %p280, %p281
      %p283 = pneg %p282
      // Predicated region
      $region49: #{mix_model_forward.3} parent=5 // pred_check
        _
      $region50: #{mix_model_forward.3} parent=5 // pred_check_branch
        %285 = sbr.rel (%p282) target = $region52
      $region51: #{mix_model_forward.3} parent=5 // pred_region
        %s286 = ssub.s32 %s17, 1
        %p287 = scmp.lt.s32.totalorder %s22, 1
        %s288 = scalar_select %p287, %s22, 1
        %s289 = smul.addr %s288, 8
        %s290 = scalar_lea.vmem %s0, %s289
        %p291 = pneg %p43
        %p292 = pneg %p40
        %p293 = scmp.lt.s32.totalorder %s22, 1
        %s294 = scalar_select %p293, %s22, 1
        %s295 = scalar_lea.vmem %s1, %s294
        %p296 = pneg %p69
        %p297 = pneg %p66
        %p298 = pneg %p90
        %p299 = pneg %p87
        %p300 = pneg %p111
        %p301 = pneg %p108
        %p302 = scmp.lt.s32.totalorder %s22, 1
        %s303 = scalar_select %p302, %s22, 1
        %s304 = smul.addr %s303, 3
        %s305 = scalar_lea.vmem %s4, %s304
        %p306 = pneg %p137
        %p307 = pneg %p134
        %p308 = pneg %p158
        %p309 = pneg %p155
        %p310 = pneg %p179
        %p311 = pneg %p176
        %p312 = pneg %p200
        %p313 = pneg %p197
        %p314 = pneg %p226
        %p315 = pneg %p223
        %s316 = sand.u32 %s213, 1
        %s317 = scalar_lea.sflag [#allocation3], %s316
        %s318 = sand.u32 %s213, 1
        %s319 = scalar_lea.vmem [#allocation2], %s318
        %p320 = scmp.lt.s32.totalorder %s22, 1
        %s321 = scalar_select %p320, %s22, 1
        %s322 = smul.addr %s321, 8
        %s323 = scalar_lea.vmem %s0, %s322
        %p324 = scmp.lt.s32.totalorder %s22, 1
        %s325 = scalar_select %p324, %s22, 1
        %s326 = scalar_lea.vmem %s1, %s325
        %p327 = scmp.lt.s32.totalorder %s22, 1
        %s328 = scalar_select %p327, %s22, 1
        %s329 = smul.addr %s328, 3
        %s330 = scalar_lea.vmem %s4, %s329
        %v332 = vld [vmem:[%s323] sm:$0xff]
        %v333 = vld [vmem:[%s326] sm:$0x1]
        %v334 = vcvt.s32.f32 %v333
        %vm335 = vcmask 64512
        %v337 = vsel %vm335, %v334, 0
        %339 = vmatprep.subr.mxu0 0.0
        %340 = vmatpush1.msra.mxu0 0.0
        %341 = vmatprep.subr.mxu0 0.0
        %342 = vmatpush1.msra.mxu0 0.0
        %343 = vmatprep.subr.mxu0 0.0
        %344 = vmatpush1.msra.mxu0 0.0
        %345 = vmatprep.subr.mxu0 0.0
        %346 = vmatpush1.msra.mxu0 0.0
        %347 = vmatprep.subr.mxu0 0.0
        %348 = vmatpush1.msra.mxu0 0.0
        %349 = vmatprep.subr.mxu0 0.0
        %350 = vmatpush1.msra.mxu0 0.0
        %351 = vmatprep.subr.mxu0 0.0
        %352 = vmatpush1.msra.mxu0 0.0
        %353 = vmatprep.subr.mxu0 0.0
        %354 = vmatpush1.msra.mxu0 0.0
        %355 = vmatprep.subr.mxu0 0.0
        %356 = vmatpush1.msra.mxu0 0.0
        %357 = vmatprep.subr.mxu0 0.0
        %358 = vmatpush1.msra.mxu0 0.0
        %359 = vmatprep.subr.mxu0 0.0
        %360 = vmatpush1.msra.mxu0 0.0
        %361 = vmatprep.subr.mxu0 0.0
        %362 = vmatpush1.msra.mxu0 0.0
        %363 = vmatprep.subr.mxu0 0.0
        %364 = vmatpush1.msra.mxu0 0.0
        %365 = vmatprep.subr.mxu0 0.0
        %366 = vmatpush1.msra.mxu0 0.0
        %367 = vmatprep.subr.mxu0 0.0
        %368 = vmatpush1.msra.mxu0 0.0
        %369 = vmatprep.subr.mxu0 0.0
        %370 = vmatpush1.msra.mxu0 %v332
        %371 = vmatprep.subr.mxu0 0.0
        %372 = vmatpush2.msra.mxu0 0.0
        %373 = vmatprep.subr.mxu0 0.0
        %374 = vmatpush2.msra.mxu0 0.0
        %375 = vmatprep.subr.mxu0 0.0
        %376 = vmatpush2.msra.mxu0 0.0
        %377 = vmatprep.subr.mxu0 0.0
        %378 = vmatpush2.msra.mxu0 0.0
        %379 = vmatprep.subr.mxu0 0.0
        %380 = vmatpush2.msra.mxu0 0.0
        %381 = vmatprep.subr.mxu0 0.0
        %382 = vmatpush2.msra.mxu0 0.0
        %383 = vmatprep.subr.mxu0 0.0
        %384 = vmatpush2.msra.mxu0 0.0
        %385 = vmatprep.subr.mxu0 0.0
        %386 = vmatpush2.msra.mxu0 0.0
        %387 = vmatprep.subr.mxu0 0.0
        %388 = vmatpush2.msra.mxu0 0.0
        %389 = vmatprep.subr.mxu0 0.0
        %390 = vmatpush2.msra.mxu0 0.0
        %391 = vmatprep.subr.mxu0 0.0
        %392 = vmatpush2.msra.mxu0 0.0
        %393 = vmatprep.subr.mxu0 0.0
        %394 = vmatpush2.msra.mxu0 0.0
        %395 = vmatprep.subr.mxu0 0.0
        %396 = vmatpush2.msra.mxu0 0.0
        %397 = vmatprep.subr.mxu0 0.0
        %398 = vmatpush2.msra.mxu0 0.0
        %399 = vmatprep.subr.mxu0 0.0
        %400 = vmatpush2.msra.mxu0 0.0
        %401 = vmatprep.subr.mxu0 0.0
        %402 = vmatpush2.msra.mxu0 0.0
        %403 = vmatprep.mubr.f32.mxu0 0.0
        %404 = vmatmul.mubr.f32.gmra.mxu0 %v337
        %v405 = vpop.f32.mrf.mxu0
        %v406 = vadd.f32 0.0, %v405
        %v407 = vpop.f32.mrf.mxu0
        %408 = vdwg.mxu0
        %vm409 = vcmask 57344
        %v410 = vsel %vm409, %v334, 0.0
        %411 = vadd.xlane.f32.xlu0 %v410
        %v412 = vpop.xlane.xlu0 %411
        %v413 = vmax.f32 %v412, 1.0
        %v414 = vrcp.pop %v413
        %v415 = vmul.f32 %v406, %v414
        %v416 = vpack.c.bf16 %v415, %v415
        %v417 = vld [vmem:[%s2] sm:$0xf]
        %v418 = vld [vmem:[%s2 + $0x4] sm:$0xf]
        %v419 = vld [vmem:[%s2 + $0x8] sm:$0xf]
        %v420 = vld [vmem:[%s2 + $0xc] sm:$0xf]
        %v421 = vld [vmem:[%s3] sm:$0x1]
        %v426 = vunpack.c.l.b16 %v417
        %v427 = vunpack.c.l.b16 %v418
        %v428 = vunpack.c.l.b16 %v419
        %v429 = vunpack.c.l.b16 %v420
        %v430 = vpack.c.b16 %v427, %v426
        %v431 = vpack.c.b16 %v429, %v428
        %vm434 = vcmask 261120
        %v436 = vsel %vm434, %v416, 0
        %438 = vmatprep.subr.bf16.mxu0 0
        %439 = vmatpush1.bf16.msra.mxu0 0
        %440 = vmatprep.subr.bf16.mxu0 0
        %441 = vmatpush1.bf16.msra.mxu0 0
        %442 = vmatprep.subr.bf16.mxu0 0
        %443 = vmatpush1.bf16.msra.mxu0 0
        %444 = vmatprep.subr.bf16.mxu0 0
        %445 = vmatpush1.bf16.msra.mxu0 0
        %446 = vmatprep.subr.bf16.mxu0 0
        %447 = vmatpush1.bf16.msra.mxu0 0
        %448 = vmatprep.subr.bf16.mxu0 0
        %449 = vmatpush1.bf16.msra.mxu0 0
        %450 = vmatprep.subr.bf16.mxu0 0
        %451 = vmatpush1.bf16.msra.mxu0 %v431
        %452 = vmatprep.subr.bf16.mxu0 0
        %453 = vmatpush1.bf16.msra.mxu0 %v430
        %454 = vmatprep.subr.bf16.mxu0 0
        %455 = vmatpush2.bf16.msra.mxu0 0
        %456 = vmatprep.subr.bf16.mxu0 0
        %457 = vmatpush2.bf16.msra.mxu0 0
        %458 = vmatprep.subr.bf16.mxu0 0
        %459 = vmatpush2.bf16.msra.mxu0 0
        %460 = vmatprep.subr.bf16.mxu0 0
        %461 = vmatpush2.bf16.msra.mxu0 0
        %462 = vmatprep.subr.bf16.mxu0 0
        %463 = vmatpush2.bf16.msra.mxu0 0
        %464 = vmatprep.subr.bf16.mxu0 0
        %465 = vmatpush2.bf16.msra.mxu0 0
        %466 = vmatprep.subr.bf16.mxu0 0
        %467 = vmatpush2.bf16.msra.mxu0 0
        %468 = vmatprep.subr.bf16.mxu0 0
        %469 = vmatpush2.bf16.msra.mxu0 0
        %470 = vmatprep.mubr.bf16.mxu0 0
        %471 = vmatmul.mubr.bf16.gmra.mxu0 %v436
        %v472 = vpop.f32.mrf.mxu0
        %v473 = vadd.f32 %v421, %v472
        %v474 = vpop.f32.mrf.mxu0
        %v475 = vpop.f32.mrf.mxu0
        %v476 = vpop.f32.mrf.mxu0
        %477 = vdwg.mxu0
        %v478 = vtanh.pop %v473
        %v479 = vpack.c.bf16 %v478, %v478
        %v480 = vld [vmem:[%s5] sm:$0xf]
        %v481 = vld [vmem:[%s5 + $0x4] sm:$0xf]
        %v482 = vld [vmem:[%s5 + $0x8] sm:$0xf]
        %v483 = vld [vmem:[%s5 + $0xc] sm:$0xf]
        %v484 = vld [vmem:[%s330] sm:$0x7]
        %v485 = vld [vmem:[%s6] sm:$0xf]
        %v486 = vld [vmem:[%s6 + $0x4] sm:$0xf]
        %v487 = vld [vmem:[%s6 + $0x8] sm:$0xf]
        %v488 = vld [vmem:[%s6 + $0xc] sm:$0xf]
        %v489 = vld [vmem:[%s6 + $0x10] sm:$0xf]
        %v490 = vld [vmem:[%s6 + $0x14] sm:$0xf]
        %v491 = vld [vmem:[%s6 + $0x18] sm:$0xf]
        %v492 = vld [vmem:[%s6 + $0x1c] sm:$0xf]
        %v493 = vld [vmem:[%s6 + $0x20] sm:$0xf]
        %v494 = vld [vmem:[%s6 + $0x24] sm:$0xf]
        %v495 = vld [vmem:[%s6 + $0x28] sm:$0xf]
        %v496 = vld [vmem:[%s6 + $0x2c] sm:$0xf]
        %v497 = vld [vmem:[%s6 + $0x30] sm:$0xf]
        %v498 = vld [vmem:[%s6 + $0x34] sm:$0xf]
        %v499 = vld [vmem:[%s6 + $0x38] sm:$0xf]
        %v500 = vld [vmem:[%s6 + $0x3c] sm:$0xf]
        %v501 = vld [vmem:[%s6 + $0x40] sm:$0xf]
        %v502 = vld [vmem:[%s6 + $0x44] sm:$0xf]
        %v503 = vld [vmem:[%s6 + $0x48] sm:$0xf]
        %v504 = vld [vmem:[%s6 + $0x4c] sm:$0xf]
        %v505 = vld [vmem:[%s6 + $0x50] sm:$0xf]
        %v506 = vld [vmem:[%s6 + $0x54] sm:$0xf]
        %v507 = vld [vmem:[%s6 + $0x58] sm:$0xf]
        %v508 = vld [vmem:[%s6 + $0x5c] sm:$0xf]
        %v509 = vld [vmem:[%s6 + $0x60] sm:$0xf]
        %v510 = vld [vmem:[%s6 + $0x64] sm:$0xf]
        %v511 = vld [vmem:[%s6 + $0x68] sm:$0xf]
        %v512 = vld [vmem:[%s6 + $0x6c] sm:$0xf]
        %v513 = vld [vmem:[%s6 + $0x70] sm:$0xf]
        %v514 = vld [vmem:[%s6 + $0x74] sm:$0xf]
        %v515 = vld [vmem:[%s6 + $0x78] sm:$0xf]
        %v516 = vld [vmem:[%s6 + $0x7c] sm:$0xf]
        %v517 = vld [vmem:[%s6 + $0x80] sm:$0xf]
        %v518 = vld [vmem:[%s6 + $0x84] sm:$0xf]
        %v519 = vld [vmem:[%s6 + $0x88] sm:$0xf]
        %v520 = vld [vmem:[%s6 + $0x8c] sm:$0xf]
        %v523 = vunpack.c.l.s4 1966171168
        %v524 = vunpack.c.0.s8 %v523
        %v525 = vlaneseq
        %v526 = vshrl.u32 %v525, 7
        %v527 = vsub.s32 %v524, %v526
        %v528 = vrot.slane %v484, %v527
        %v529 = vcombine.high %v528, %v528
        %v531 = vunpack.c.l.s4 1966171168
        %v532 = vunpack.c.0.s8 %v531
        %v533 = vlaneseq
        %v534 = vshrl.u32 %v533, 7
        %v535 = vsub.s32 %v532, %v534
        %v536 = vrot.slane %v528, %v535
        %v538 = vunpack.c.l.s4 1966171168
        %v539 = vunpack.c.0.s8 %v538
        %v540 = vlaneseq
        %v541 = vshrl.u32 %v540, 7
        %v542 = vsub.s32 %v539, %v541
        %v543 = vrot.slane %v529, %v542
        %v544 = vcombine.high %v536, %v536
        %v583 = vunpack.c.l.b16 %v485
        %v584 = vunpack.c.l.b16 %v486
        %v585 = vunpack.c.l.b16 %v487
        %v586 = vunpack.c.l.b16 %v488
        %v587 = vunpack.c.l.b16 %v489
        %v588 = vunpack.c.l.b16 %v490
        %v589 = vunpack.c.l.b16 %v491
        %v590 = vunpack.c.l.b16 %v492
        %v591 = vunpack.c.l.b16 %v493
        %v592 = vunpack.c.l.b16 %v494
        %v593 = vunpack.c.l.b16 %v495
        %v594 = vunpack.c.l.b16 %v496
        %v595 = vunpack.c.l.b16 %v497
        %v596 = vunpack.c.l.b16 %v498
        %v597 = vunpack.c.l.b16 %v499
        %v598 = vunpack.c.l.b16 %v500
        %v599 = vunpack.c.l.b16 %v501
        %v600 = vunpack.c.l.b16 %v502
        %v601 = vunpack.c.l.b16 %v503
        %v602 = vunpack.c.l.b16 %v504
        %v603 = vunpack.c.l.b16 %v505
        %v604 = vunpack.c.l.b16 %v506
        %v605 = vunpack.c.l.b16 %v507
        %v606 = vunpack.c.l.b16 %v508
        %v607 = vunpack.c.l.b16 %v509
        %v608 = vunpack.c.l.b16 %v510
        %v609 = vunpack.c.l.b16 %v511
        %v610 = vunpack.c.l.b16 %v512
        %v611 = vunpack.c.l.b16 %v513
        %v612 = vunpack.c.l.b16 %v514
        %v613 = vunpack.c.l.b16 %v515
        %v614 = vunpack.c.l.b16 %v516
        %v615 = vunpack.c.l.b16 %v517
        %v616 = vunpack.c.l.b16 %v518
        %v617 = vunpack.c.l.b16 %v519
        %v618 = vunpack.c.l.b16 %v520
        %v619 = vpack.c.b16 %v584, %v583
        %v620 = vpack.c.b16 %v586, %v585
        %v621 = vpack.c.b16 %v588, %v587
        %v622 = vpack.c.b16 %v590, %v589
        %v623 = vpack.c.b16 %v592, %v591
        %v624 = vpack.c.b16 %v594, %v593
        %v625 = vpack.c.b16 %v596, %v595
        %v626 = vpack.c.b16 %v598, %v597
        %v627 = vpack.c.b16 %v600, %v599
        %v628 = vpack.c.b16 %v602, %v601
        %v629 = vpack.c.b16 %v604, %v603
        %v630 = vpack.c.b16 %v606, %v605
        %v631 = vpack.c.b16 %v608, %v607
        %v632 = vpack.c.b16 %v610, %v609
        %v633 = vpack.c.b16 %v612, %v611
        %v634 = vpack.c.b16 %v614, %v613
        %v635 = vpack.c.b16 %v616, %v615
        %v636 = vpack.c.b16 %v618, %v617
        %v656 = vsel %vm434, %v544, 0
        %658 = vmatprep.subr.bf16.mxu0 0
        %659 = vmatpush1.bf16.msra.mxu0 %v626
        %660 = vmatprep.subr.bf16.mxu0 0
        %661 = vmatpush1.bf16.msra.mxu0 %v625
        %662 = vmatprep.subr.bf16.mxu0 0
        %663 = vmatpush1.bf16.msra.mxu0 %v624
        %664 = vmatprep.subr.bf16.mxu0 0
        %665 = vmatpush1.bf16.msra.mxu0 %v623
        %666 = vmatprep.subr.bf16.mxu0 0
        %667 = vmatpush1.bf16.msra.mxu0 %v622
        %668 = vmatprep.subr.bf16.mxu0 0
        %669 = vmatpush1.bf16.msra.mxu0 %v621
        %670 = vmatprep.subr.bf16.mxu0 0
        %671 = vmatpush1.bf16.msra.mxu0 %v620
        %672 = vmatprep.subr.bf16.mxu0 0
        %673 = vmatpush1.bf16.msra.mxu0 %v619
        %674 = vmatprep.subr.bf16.mxu0 0
        %675 = vmatpush2.bf16.msra.mxu0 %v634
        %676 = vmatprep.subr.bf16.mxu0 0
        %677 = vmatpush2.bf16.msra.mxu0 %v633
        %678 = vmatprep.subr.bf16.mxu0 0
        %679 = vmatpush2.bf16.msra.mxu0 %v632
        %680 = vmatprep.subr.bf16.mxu0 0
        %681 = vmatpush2.bf16.msra.mxu0 %v631
        %682 = vmatprep.subr.bf16.mxu0 0
        %683 = vmatpush2.bf16.msra.mxu0 %v630
        %684 = vmatprep.subr.bf16.mxu0 0
        %685 = vmatpush2.bf16.msra.mxu0 %v629
        %686 = vmatprep.subr.bf16.mxu0 0
        %687 = vmatpush2.bf16.msra.mxu0 %v628
        %688 = vmatprep.subr.bf16.mxu0 0
        %689 = vmatpush2.bf16.msra.mxu0 %v627
        %690 = vmatprep.mubr.bf16.mxu0 %v543
        %691 = vmatmul.mubr.bf16.gmra.mxu0 %v536
        %v692 = vpop.f32.mrf.mxu0
        %v693 = vadd.f32 0.0, %v692
        %v694 = vpop.f32.mrf.mxu0
        %v695 = vpop.f32.mrf.mxu0
        %v696 = vpop.f32.mrf.mxu0
        %697 = vdwg.mxu0
        %698 = vmatprep.subr.bf16.mxu0 0
        %699 = vmatpush1.bf16.msra.mxu0 0
        %700 = vmatprep.subr.bf16.mxu0 0
        %701 = vmatpush1.bf16.msra.mxu0 0
        %702 = vmatprep.subr.bf16.mxu0 0
        %703 = vmatpush1.bf16.msra.mxu0 0
        %704 = vmatprep.subr.bf16.mxu0 0
        %705 = vmatpush1.bf16.msra.mxu0 0
        %706 = vmatprep.subr.bf16.mxu0 0
        %707 = vmatpush1.bf16.msra.mxu0 0
        %708 = vmatprep.subr.bf16.mxu0 0
        %709 = vmatpush1.bf16.msra.mxu0 0
        %710 = vmatprep.subr.bf16.mxu0 0
        %711 = vmatpush1.bf16.msra.mxu0 %v636
        %712 = vmatprep.subr.bf16.mxu0 0
        %713 = vmatpush1.bf16.msra.mxu0 %v635
        %714 = vmatprep.subr.bf16.mxu0 0
        %715 = vmatpush2.bf16.msra.mxu0 0
        %716 = vmatprep.subr.bf16.mxu0 0
        %717 = vmatpush2.bf16.msra.mxu0 0
        %718 = vmatprep.subr.bf16.mxu0 0
        %719 = vmatpush2.bf16.msra.mxu0 0
        %720 = vmatprep.subr.bf16.mxu0 0
        %721 = vmatpush2.bf16.msra.mxu0 0
        %722 = vmatprep.subr.bf16.mxu0 0
        %723 = vmatpush2.bf16.msra.mxu0 0
        %724 = vmatprep.subr.bf16.mxu0 0
        %725 = vmatpush2.bf16.msra.mxu0 0
        %726 = vmatprep.subr.bf16.mxu0 0
        %727 = vmatpush2.bf16.msra.mxu0 0
        %728 = vmatprep.subr.bf16.mxu0 0
        %729 = vmatpush2.bf16.msra.mxu0 0
        %730 = vmatprep.mubr.bf16.mxu0 0
        %731 = vmatmul.mubr.bf16.gmra.mxu0 %v656
        %v732 = vpop.f32.mrf.mxu0
        %v733 = vadd.f32 %v693, %v732
        %v734 = vpop.f32.mrf.mxu0
        %v735 = vpop.f32.mrf.mxu0
        %v736 = vpop.f32.mrf.mxu0
        %737 = vdwg.mxu0
        %v742 = vunpack.c.l.b16 %v480
        %v743 = vunpack.c.l.b16 %v481
        %v744 = vunpack.c.l.b16 %v482
        %v745 = vunpack.c.l.b16 %v483
        %v746 = vpack.c.b16 %v743, %v742
        %v747 = vpack.c.b16 %v745, %v744
        %v751 = vsel %vm434, %v479, 0
        %753 = vmatprep.subr.bf16.mxu0 0
        %754 = vmatpush1.bf16.msra.mxu0 0
        %755 = vmatprep.subr.bf16.mxu0 0
        %756 = vmatpush1.bf16.msra.mxu0 0
        %757 = vmatprep.subr.bf16.mxu0 0
        %758 = vmatpush1.bf16.msra.mxu0 0
        %759 = vmatprep.subr.bf16.mxu0 0
        %760 = vmatpush1.bf16.msra.mxu0 0
        %761 = vmatprep.subr.bf16.mxu0 0
        %762 = vmatpush1.bf16.msra.mxu0 0
        %763 = vmatprep.subr.bf16.mxu0 0
        %764 = vmatpush1.bf16.msra.mxu0 0
        %765 = vmatprep.subr.bf16.mxu0 0
        %766 = vmatpush1.bf16.msra.mxu0 %v747
        %767 = vmatprep.subr.bf16.mxu0 0
        %768 = vmatpush1.bf16.msra.mxu0 %v746
        %769 = vmatprep.subr.bf16.mxu0 0
        %770 = vmatpush2.bf16.msra.mxu0 0
        %771 = vmatprep.subr.bf16.mxu0 0
        %772 = vmatpush2.bf16.msra.mxu0 0
        %773 = vmatprep.subr.bf16.mxu0 0
        %774 = vmatpush2.bf16.msra.mxu0 0
        %775 = vmatprep.subr.bf16.mxu0 0
        %776 = vmatpush2.bf16.msra.mxu0 0
        %777 = vmatprep.subr.bf16.mxu0 0
        %778 = vmatpush2.bf16.msra.mxu0 0
        %779 = vmatprep.subr.bf16.mxu0 0
        %780 = vmatpush2.bf16.msra.mxu0 0
        %781 = vmatprep.subr.bf16.mxu0 0
        %782 = vmatpush2.bf16.msra.mxu0 0
        %783 = vmatprep.subr.bf16.mxu0 0
        %784 = vmatpush2.bf16.msra.mxu0 0
        %785 = vmatprep.mubr.bf16.mxu0 0
        %786 = vmatmul.mubr.bf16.gmra.mxu0 %v751
        %v787 = vpop.f32.mrf.mxu0
        %v788 = vadd.f32 %v733, %v787
        %v789 = vpop.f32.mrf.mxu0
        %v790 = vpop.f32.mrf.mxu0
        %v791 = vpop.f32.mrf.mxu0
        %792 = vdwg.mxu0
        %v793 = vld [vmem:[%s7] sm:$0x1]
        %v794 = vadd.f32 %v788, %v793
        %795 = vst [vmem:[%s319] sm:$0x1] %v794
        %s796 = sand.u32 %s213, 1
        %s797 = scalar_lea.sflag [#allocation3], %s796
        %s798 = sand.u32 %s213, 1
        %s799 = scalar_lea.vmem [#allocation2], %s798
        // Predicated region
        $region53: #{mix_model_forward.3} parent=51 // pred_check
          %p800 = pneg %p223
        $region54: #{mix_model_forward.3} parent=51 // pred_check_branch
          %802 = sbr.rel (%p800) target = $region56
        $region55: #{mix_model_forward.3} parent=51 // pred_region
          %s804 = ssub.s32 16, 16
          %805 = vsyncadd %s797, %s804
          %s806 = smul.addr %s22, 16
          %s807 = scalar_lea.hbm %s8, %s806
          %s809 = sshll.u32 %s799, 4
          %s810 = int_to_ptr.vmem [resolvable:$true] %s809
          %812 = dma.vmem_to_hbm [thread:$0]  %s810, 16, %s807, %s797
        $region56: #{mix_model_forward.3} parent=51 // pred_fallthru
          _
      $region52: #{mix_model_forward.3} parent=5 // pred_fallthru
        _
      %p813 = scmp.le.s32.totalorder 2, %s17
      // Predicated region
      $region57: #{mix_model_forward.3} parent=5 // pred_check
        %p814 = pneg %p813
      $region58: #{mix_model_forward.3} parent=5 // pred_check_branch
        %816 = sbr.rel (%p814) target = $region60
      $region59: #{mix_model_forward.3} parent=5 // pred_region
        %s817 = ssub.s32 %s17, 2
        // Predicated region
        $region61: #{mix_model_forward.3} parent=59 // pred_check
          %p818 = pneg %p229
        $region62: #{mix_model_forward.3} parent=59 // pred_check_branch
          %820 = sbr.rel (%p818) target = $region64
        $region63: #{mix_model_forward.3} parent=59 // pred_region
          %s821 = sand.u32 %s214, 1
          %s822 = scalar_lea.sflag [#allocation3], %s821
          %s823 = sand.u32 %s214, 1
          %s824 = scalar_lea.vmem [#allocation2], %s823
          %825 = dma.done %s822, 16
        $region64: #{mix_model_forward.3} parent=59 // pred_fallthru
          _
      $region60: #{mix_model_forward.3} parent=5 // pred_fallthru
        _
    $region6: #{mix_model_forward.3} parent=1 // loop_footer
      %s21 = sadd.s32 1, %s17
    $region7: #{mix_model_forward.3} parent=1 // loop_footer_branch
      %16 = sbr.rel target = $region3
    $region8: #{mix_model_forward.3} parent=1 // loop_exit
      _
    %826 = vsyncpa [#allocation3], 1
    %s827 = scalar_lea.sflag [#allocation3], 1
    %828 = vsyncpa %s827, 1

// kernel: mix_model_forward.2
$region0: #{mix_model_forward.2}
  #allocation0 [shape = 'u32[]', space=smem, size = 0x4, offset = 0x4, fixed_abs, tag = 'smem constant byte address 0x4 - core index']
  #allocation1 [shape = 'u32[144,128]{1,0:T(1,128)}', space=vmem, size = 0x12000, scoped, tag = 'internal scratch']
  %s0 = inlined_call_operand.vmem [shape: f32[2,26,208], index: 0, kind: input, shape index: {}]
  %s1 = inlined_call_operand.vmem [shape: bf16[3,208,192], index: 1, kind: input, shape index: {}]
  %s2 = inlined_call_operand.vmem [shape: f32[1,192], index: 2, kind: input, shape index: {}]
  %s3 = inlined_call_operand.vmem [shape: f32[2,192,112], index: 3, kind: input, shape index: {}]
  %s4 = inlined_call_operand.vmem [shape: f32[2,14,24], index: 4, kind: input, shape index: {}]
  %s5 = inlined_call_operand.vmem [shape: bf16[3,112,96], index: 5, kind: input, shape index: {}]
  %s6 = inlined_call_operand.vmem [shape: f32[1,96], index: 6, kind: input, shape index: {}]
  %s7 = inlined_call_operand.vmem [shape: f32[2,96,48], index: 7, kind: input, shape index: {}]
  %s8 = inlined_call_operand.vmem [shape: f32[2,6,12], index: 8, kind: input, shape index: {}]
  %s9 = inlined_call_operand.vmem [shape: bf16[2,6,48], index: 9, kind: output, shape index: {}]
  %s10 = sld [smem:[#allocation0]]
  $region69: #{mix_model_forward.2} parent=0
    _
  %s12 = ssub.s32 1, %s10
  %s13 = scalar_select 0, %s12, %s10
  loop: start=0, step=1, limit=4
  $region2: #{mix_model_forward.2} parent=0 // loop_pre_header
    _
  $region3: #{mix_model_forward.2} parent=0 // loop_header
    %s15 = sphi 0, %s19
    %p16 = scmp.ge.s32.totalorder %s15, 4
    %s25 = sphi 0, %s27
    %s28 = sphi 0, %s25
    %s29 = sphi 0, %s28
    %s45 = sphi 0, %s29
    %s49 = sphi 0, %s49
    %s51 = sphi 0, %s49
    %s52 = sphi 0, %s51
    %s66 = sphi 0, %s52
    %s70 = sphi 0, %s70
    %s72 = sphi 0, %s70
    %s73 = sphi 0, %s72
    %s87 = sphi 0, %s73
    %s91 = sphi 0, %s91
    %s93 = sphi 0, %s91
    %s94 = sphi 0, %s93
    %s108 = sphi 0, %s94
    %s112 = sphi 0, %s112
    %s114 = sphi 0, %s112
    %s115 = sphi 0, %s114
    %s129 = sphi 0, %s115
    %s133 = sphi 0, %s133
    %s135 = sphi 0, %s133
    %s136 = sphi 0, %s135
    %s150 = sphi 0, %s136
    %s154 = sphi 0, %s154
    %s156 = sphi 0, %s154
    %s157 = sphi 0, %s156
    %s171 = sphi 0, %s157
    %s175 = sphi 0, %s175
    %s177 = sphi 0, %s175
    %s178 = sphi 0, %s177
    %s192 = sphi 0, %s178
    %s196 = sphi 0, %s196
    %s198 = sphi 0, %s196
    %s199 = sphi 0, %s198
    %s213 = sphi 0, %s199
    %s219 = sphi 0, %s221
    %s222 = sphi 0, %s219
    %s223 = sphi 0, %s222
    %s239 = sphi 0, %s223
  $region4: #{mix_model_forward.2} parent=0 // loop_header_branch
    %18 = sbr.rel (%p16) target = $region8
  $region5: #{mix_model_forward.2} parent=0 // loop_body
    %s20 = ssub.s32 %s15, 1
    %s21 = ssub.s32 %s15, 2
    %s22 = sadd.s32 %s15, 1
    %s23 = ssub.s32 %s15, %s22
    %p24 = scmp.eq.s32.totalorder %s23, 0
    %s26 = sadd.s32 %s25, 1
    %s27 = scalar_select %p24, %s25, %s26
    %p30 = pneg %p24
    %p31 = scmp.eq.s32.totalorder %s15, 1
    %p32 = por %p30, %p31
    %p33 = scmp.ne.s32.totalorder %s25, %s28
    %p34 = scmp.eq.s32.totalorder %s15, 0
    %p35 = por %p33, %p34
    %p36 = scmp.ne.s32.totalorder %s25, %s28
    %p37 = scmp.eq.s32.totalorder %s20, 1
    %p38 = por %p36, %p37
    %p39 = scmp.ne.s32.totalorder %s28, %s29
    %p40 = scmp.eq.s32.totalorder %s20, 0
    %p41 = por %p39, %p40
    %p42 = scmp.ne.s32.totalorder %s28, %s29
    %p43 = scmp.eq.s32.totalorder %s21, 1
    %p44 = por %p42, %p43
    %p46 = scmp.ne.s32.totalorder %s29, %s45
    %p47 = scmp.eq.s32.totalorder %s21, 0
    %p48 = por %p46, %p47
    %s50 = sadd.s32 %s49, 1
    %p53 = scmp.eq.s32.totalorder %s15, 1
    %p54 = scmp.ne.s32.totalorder %s49, %s51
    %p55 = scmp.eq.s32.totalorder %s15, 0
    %p56 = por %p54, %p55
    %p57 = scmp.ne.s32.totalorder %s49, %s51
    %p58 = scmp.eq.s32.totalorder %s20, 1
    %p59 = por %p57, %p58
    %p60 = scmp.ne.s32.totalorder %s51, %s52
    %p61 = scmp.eq.s32.totalorder %s20, 0
    %p62 = por %p60, %p61
    %p63 = scmp.ne.s32.totalorder %s51, %s52
    %p64 = scmp.eq.s32.totalorder %s21, 1
    %p65 = por %p63, %p64
    %p67 = scmp.ne.s32.totalorder %s52, %s66
    %p68 = scmp.eq.s32.totalorder %s21, 0
    %p69 = por %p67, %p68
    %s71 = sadd.s32 %s70, 1
    %p74 = scmp.eq.s32.totalorder %s15, 1
    %p75 = scmp.ne.s32.totalorder %s70, %s72
    %p76 = scmp.eq.s32.totalorder %s15, 0
    %p77 = por %p75, %p76
    %p78 = scmp.ne.s32.totalorder %s70, %s72
    %p79 = scmp.eq.s32.totalorder %s20, 1
    %p80 = por %p78, %p79
    %p81 = scmp.ne.s32.totalorder %s72, %s73
    %p82 = scmp.eq.s32.totalorder %s20, 0
    %p83 = por %p81, %p82
    %p84 = scmp.ne.s32.totalorder %s72, %s73
    %p85 = scmp.eq.s32.totalorder %s21, 1
    %p86 = por %p84, %p85
    %p88 = scmp.ne.s32.totalorder %s73, %s87
    %p89 = scmp.eq.s32.totalorder %s21, 0
    %p90 = por %p88, %p89
    %s92 = sadd.s32 %s91, 1
    %p95 = scmp.eq.s32.totalorder %s15, 1
    %p96 = scmp.ne.s32.totalorder %s91, %s93
    %p97 = scmp.eq.s32.totalorder %s15, 0
    %p98 = por %p96, %p97
    %p99 = scmp.ne.s32.totalorder %s91, %s93
    %p100 = scmp.eq.s32.totalorder %s20, 1
    %p101 = por %p99, %p100
    %p102 = scmp.ne.s32.totalorder %s93, %s94
    %p103 = scmp.eq.s32.totalorder %s20, 0
    %p104 = por %p102, %p103
    %p105 = scmp.ne.s32.totalorder %s93, %s94
    %p106 = scmp.eq.s32.totalorder %s21, 1
    %p107 = por %p105, %p106
    %p109 = scmp.ne.s32.totalorder %s94, %s108
    %p110 = scmp.eq.s32.totalorder %s21, 0
    %p111 = por %p109, %p110
    %s113 = sadd.s32 %s112, 1
    %p116 = scmp.eq.s32.totalorder %s15, 1
    %p117 = scmp.ne.s32.totalorder %s112, %s114
    %p118 = scmp.eq.s32.totalorder %s15, 0
    %p119 = por %p117, %p118
    %p120 = scmp.ne.s32.totalorder %s112, %s114
    %p121 = scmp.eq.s32.totalorder %s20, 1
    %p122 = por %p120, %p121
    %p123 = scmp.ne.s32.totalorder %s114, %s115
    %p124 = scmp.eq.s32.totalorder %s20, 0
    %p125 = por %p123, %p124
    %p126 = scmp.ne.s32.totalorder %s114, %s115
    %p127 = scmp.eq.s32.totalorder %s21, 1
    %p128 = por %p126, %p127
    %p130 = scmp.ne.s32.totalorder %s115, %s129
    %p131 = scmp.eq.s32.totalorder %s21, 0
    %p132 = por %p130, %p131
    %s134 = sadd.s32 %s133, 1
    %p137 = scmp.eq.s32.totalorder %s15, 1
    %p138 = scmp.ne.s32.totalorder %s133, %s135
    %p139 = scmp.eq.s32.totalorder %s15, 0
    %p140 = por %p138, %p139
    %p141 = scmp.ne.s32.totalorder %s133, %s135
    %p142 = scmp.eq.s32.totalorder %s20, 1
    %p143 = por %p141, %p142
    %p144 = scmp.ne.s32.totalorder %s135, %s136
    %p145 = scmp.eq.s32.totalorder %s20, 0
    %p146 = por %p144, %p145
    %p147 = scmp.ne.s32.totalorder %s135, %s136
    %p148 = scmp.eq.s32.totalorder %s21, 1
    %p149 = por %p147, %p148
    %p151 = scmp.ne.s32.totalorder %s136, %s150
    %p152 = scmp.eq.s32.totalorder %s21, 0
    %p153 = por %p151, %p152
    %s155 = sadd.s32 %s154, 1
    %p158 = scmp.eq.s32.totalorder %s15, 1
    %p159 = scmp.ne.s32.totalorder %s154, %s156
    %p160 = scmp.eq.s32.totalorder %s15, 0
    %p161 = por %p159, %p160
    %p162 = scmp.ne.s32.totalorder %s154, %s156
    %p163 = scmp.eq.s32.totalorder %s20, 1
    %p164 = por %p162, %p163
    %p165 = scmp.ne.s32.totalorder %s156, %s157
    %p166 = scmp.eq.s32.totalorder %s20, 0
    %p167 = por %p165, %p166
    %p168 = scmp.ne.s32.totalorder %s156, %s157
    %p169 = scmp.eq.s32.totalorder %s21, 1
    %p170 = por %p168, %p169
    %p172 = scmp.ne.s32.totalorder %s157, %s171
    %p173 = scmp.eq.s32.totalorder %s21, 0
    %p174 = por %p172, %p173
    %s176 = sadd.s32 %s175, 1
    %p179 = scmp.eq.s32.totalorder %s15, 1
    %p180 = scmp.ne.s32.totalorder %s175, %s177
    %p181 = scmp.eq.s32.totalorder %s15, 0
    %p182 = por %p180, %p181
    %p183 = scmp.ne.s32.totalorder %s175, %s177
    %p184 = scmp.eq.s32.totalorder %s20, 1
    %p185 = por %p183, %p184
    %p186 = scmp.ne.s32.totalorder %s177, %s178
    %p187 = scmp.eq.s32.totalorder %s20, 0
    %p188 = por %p186, %p187
    %p189 = scmp.ne.s32.totalorder %s177, %s178
    %p190 = scmp.eq.s32.totalorder %s21, 1
    %p191 = por %p189, %p190
    %p193 = scmp.ne.s32.totalorder %s178, %s192
    %p194 = scmp.eq.s32.totalorder %s21, 0
    %p195 = por %p193, %p194
    %s197 = sadd.s32 %s196, 1
    %p200 = scmp.eq.s32.totalorder %s15, 1
    %p201 = scmp.ne.s32.totalorder %s196, %s198
    %p202 = scmp.eq.s32.totalorder %s15, 0
    %p203 = por %p201, %p202
    %p204 = scmp.ne.s32.totalorder %s196, %s198
    %p205 = scmp.eq.s32.totalorder %s20, 1
    %p206 = por %p204, %p205
    %p207 = scmp.ne.s32.totalorder %s198, %s199
    %p208 = scmp.eq.s32.totalorder %s20, 0
    %p209 = por %p207, %p208
    %p210 = scmp.ne.s32.totalorder %s198, %s199
    %p211 = scmp.eq.s32.totalorder %s21, 1
    %p212 = por %p210, %p211
    %p214 = scmp.ne.s32.totalorder %s199, %s213
    %p215 = scmp.eq.s32.totalorder %s21, 0
    %p216 = por %p214, %p215
    %s217 = ssub.s32 %s15, %s22
    %p218 = scmp.eq.s32.totalorder %s217, 0
    %s220 = sadd.s32 %s219, 1
    %s221 = scalar_select %p218, %s219, %s220
    %p224 = pneg %p218
    %p225 = scmp.eq.s32.totalorder %s15, 1
    %p226 = por %p224, %p225
    %p227 = scmp.ne.s32.totalorder %s219, %s222
    %p228 = scmp.eq.s32.totalorder %s15, 0
    %p229 = por %p227, %p228
    %p230 = scmp.ne.s32.totalorder %s219, %s222
    %p231 = scmp.eq.s32.totalorder %s20, 1
    %p232 = por %p230, %p231
    %p233 = scmp.ne.s32.totalorder %s222, %s223
    %p234 = scmp.eq.s32.totalorder %s20, 0
    %p235 = por %p233, %p234
    %p236 = scmp.ne.s32.totalorder %s222, %s223
    %p237 = scmp.eq.s32.totalorder %s21, 1
    %p238 = por %p236, %p237
    %p240 = scmp.ne.s32.totalorder %s223, %s239
    %p241 = scmp.eq.s32.totalorder %s21, 0
    %p242 = por %p240, %p241
    %p243 = scmp.le.s32.totalorder 1, %s15
    %p244 = scmp.lt.s32.totalorder %s15, 3
    %p245 = pnand %p243, %p244
    %p246 = pneg %p245
    // Predicated region
    $region9: #{mix_model_forward.2} parent=5 // pred_check
      _
    $region10: #{mix_model_forward.2} parent=5 // pred_check_branch
      %248 = sbr.rel (%p245) target = $region12
    $region11: #{mix_model_forward.2} parent=5 // pred_region
      %s249 = ssub.s32 %s15, 1
      // Predicated region
      $region13: #{mix_model_forward.2} parent=11 // pred_check
        %p250 = pneg %p62
      $region14: #{mix_model_forward.2} parent=11 // pred_check_branch
        %252 = sbr.rel (%p250) target = $region16
      $region15: #{mix_model_forward.2} parent=11 // pred_region
        _
      $region16: #{mix_model_forward.2} parent=11 // pred_fallthru
        _
      // Predicated region
      $region17: #{mix_model_forward.2} parent=11 // pred_check
        %p253 = pneg %p83
      $region18: #{mix_model_forward.2} parent=11 // pred_check_branch
        %255 = sbr.rel (%p253) target = $region20
      $region19: #{mix_model_forward.2} parent=11 // pred_region
        _
      $region20: #{mix_model_forward.2} parent=11 // pred_fallthru
        _
      // Predicated region
      $region21: #{mix_model_forward.2} parent=11 // pred_check
        %p256 = pneg %p104
      $region22: #{mix_model_forward.2} parent=11 // pred_check_branch
        %258 = sbr.rel (%p256) target = $region24
      $region23: #{mix_model_forward.2} parent=11 // pred_region
        _
      $region24: #{mix_model_forward.2} parent=11 // pred_fallthru
        _
      // Predicated region
      $region25: #{mix_model_forward.2} parent=11 // pred_check
        %p259 = pneg %p125
      $region26: #{mix_model_forward.2} parent=11 // pred_check_branch
        %261 = sbr.rel (%p259) target = $region28
      $region27: #{mix_model_forward.2} parent=11 // pred_region
        _
      $region28: #{mix_model_forward.2} parent=11 // pred_fallthru
        _
      // Predicated region
      $region29: #{mix_model_forward.2} parent=11 // pred_check
        %p262 = pneg %p146
      $region30: #{mix_model_forward.2} parent=11 // pred_check_branch
        %264 = sbr.rel (%p262) target = $region32
      $region31: #{mix_model_forward.2} parent=11 // pred_region
        _
      $region32: #{mix_model_forward.2} parent=11 // pred_fallthru
        _
      // Predicated region
      $region33: #{mix_model_forward.2} parent=11 // pred_check
        %p265 = pneg %p167
      $region34: #{mix_model_forward.2} parent=11 // pred_check_branch
        %267 = sbr.rel (%p265) target = $region36
      $region35: #{mix_model_forward.2} parent=11 // pred_region
        _
      $region36: #{mix_model_forward.2} parent=11 // pred_fallthru
        _
      // Predicated region
      $region37: #{mix_model_forward.2} parent=11 // pred_check
        %p268 = pneg %p188
      $region38: #{mix_model_forward.2} parent=11 // pred_check_branch
        %270 = sbr.rel (%p268) target = $region40
      $region39: #{mix_model_forward.2} parent=11 // pred_region
        _
      $region40: #{mix_model_forward.2} parent=11 // pred_fallthru
        _
      // Predicated region
      $region41: #{mix_model_forward.2} parent=11 // pred_check
        %p271 = pneg %p209
      $region42: #{mix_model_forward.2} parent=11 // pred_check_branch
        %273 = sbr.rel (%p271) target = $region44
      $region43: #{mix_model_forward.2} parent=11 // pred_region
        _
      $region44: #{mix_model_forward.2} parent=11 // pred_fallthru
        _
    $region12: #{mix_model_forward.2} parent=5 // pred_fallthru
      _
    %p274 = scmp.lt.s32.totalorder %s15, 2
    // Predicated region
    $region45: #{mix_model_forward.2} parent=5 // pred_check
      %p275 = pneg %p274
    $region46: #{mix_model_forward.2} parent=5 // pred_check_branch
      %277 = sbr.rel (%p275) target = $region48
    $region47: #{mix_model_forward.2} parent=5 // pred_region
      // Predicated region
      $region49: #{mix_model_forward.2} parent=47 // pred_check
        %p278 = pneg %p35
      $region50: #{mix_model_forward.2} parent=47 // pred_check_branch
        %280 = sbr.rel (%p278) target = $region52
      $region51: #{mix_model_forward.2} parent=47 // pred_region
        %p281 = scmp.lt.s32.totalorder %s15, 1
        %s282 = scalar_select %p281, %s15, 1
        %s283 = smul.addr %s282, 8
        %s284 = smul.addr %s283, 8
        %s285 = scalar_lea.vmem %s0, %s284
      $region52: #{mix_model_forward.2} parent=47 // pred_fallthru
        _
    $region48: #{mix_model_forward.2} parent=5 // pred_fallthru
      _
    %p286 = scmp.le.s32.totalorder 1, %s15
    %p287 = scmp.lt.s32.totalorder %s15, 3
    %p288 = pnand %p286, %p287
    %p289 = pneg %p288
    // Predicated region
    $region53: #{mix_model_forward.2} parent=5 // pred_check
      _
    $region54: #{mix_model_forward.2} parent=5 // pred_check_branch
      %291 = sbr.rel (%p288) target = $region56
    $region55: #{mix_model_forward.2} parent=5 // pred_region
      %s292 = ssub.s32 %s15, 1
      %p293 = scmp.lt.s32.totalorder %s20, 1
      %s294 = scalar_select %p293, %s20, 1
      %s295 = smul.addr %s294, 8
      %s296 = smul.addr %s295, 8
      %s297 = scalar_lea.vmem %s0, %s296
      %p298 = pneg %p41
      %p299 = pneg %p38
      %p300 = pneg %p62
      %p301 = pneg %p59
      %p302 = pneg %p83
      %p303 = pneg %p80
      %p304 = pneg %p104
      %p305 = pneg %p101
      %p306 = pneg %p125
      %p307 = pneg %p122
      %p308 = pneg %p146
      %p309 = pneg %p143
      %p310 = pneg %p167
      %p311 = pneg %p164
      %p312 = pneg %p188
      %p313 = pneg %p185
      %p314 = pneg %p209
      %p315 = pneg %p206
      %p316 = pneg %p235
      %p317 = pneg %p232
      %p318 = scmp.lt.s32.totalorder %s20, 1
      %s319 = scalar_select %p318, %s20, 1
      %s320 = smul.addr %s319, 4
      %s321 = scalar_lea.vmem %s9, %s320
      %p322 = scmp.lt.s32.totalorder %s20, 1
      %s323 = scalar_select %p322, %s20, 1
      %s324 = smul.addr %s323, 8
      %s325 = smul.addr %s324, 8
      %s326 = scalar_lea.vmem %s0, %s325
      %p327 = scmp.lt.s32.totalorder %s20, 1
      %s328 = scalar_select %p327, %s20, 1
      %s329 = smul.addr %s328, 4
      %s330 = scalar_lea.vmem %s9, %s329
      %v332 = vld [vmem:[%s326] sm:$0xff]
      %v333 = vld [vmem:[%s326 + $0x8] sm:$0xff]
      %v334 = vld [vmem:[%s326 + $0x10] sm:$0xff]
      %v335 = vld [vmem:[%s326 + $0x18] sm:$0xff]
      %v336 = vld [vmem:[%s326 + $0x20] sm:$0xff]
      %v337 = vld [vmem:[%s326 + $0x28] sm:$0xff]
      %v338 = vpack.c.bf16 %v334, %v332
      %v339 = vpack.c.bf16 %v335, %v333
      %v340 = vpack.c.bf16 %v336, %v336
      %v341 = vpack.c.bf16 %v337, %v337
      %v342 = vld [vmem:[%s1] sm:$0xff]
      %v343 = vld [vmem:[%s1 + $0x8] sm:$0xff]
      %v344 = vld [vmem:[%s1 + $0x10] sm:$0xff]
      %v345 = vld [vmem:[%s1 + $0x18] sm:$0xff]
      %v346 = vld [vmem:[%s1 + $0x20] sm:$0xff]
      %v347 = vld [vmem:[%s1 + $0x28] sm:$0xff]
      %v348 = vld [vmem:[%s1 + $0x30] sm:$0xff]
      %v349 = vld [vmem:[%s1 + $0x38] sm:$0xff]
      %v350 = vld [vmem:[%s1 + $0x40] sm:$0xff]
      %v351 = vld [vmem:[%s1 + $0x48] sm:$0xff]
      %v352 = vld [vmem:[%s1 + $0x50] sm:$0xff]
      %v353 = vld [vmem:[%s1 + $0x58] sm:$0xff]
      %v354 = vld [vmem:[%s1 + $0x60] sm:$0xff]
      %v355 = vld [vmem:[%s1 + $0x68] sm:$0xff]
      %v356 = vld [vmem:[%s1 + $0x70] sm:$0xff]
      %v357 = vld [vmem:[%s1 + $0x78] sm:$0xff]
      %v358 = vld [vmem:[%s1 + $0x80] sm:$0xff]
      %v359 = vld [vmem:[%s1 + $0x88] sm:$0xff]
      %v360 = vld [vmem:[%s1 + $0x90] sm:$0xff]
      %v361 = vld [vmem:[%s1 + $0x98] sm:$0xff]
      %v362 = vld [vmem:[%s1 + $0xa0] sm:$0xff]
      %v363 = vld [vmem:[%s1 + $0xa8] sm:$0xff]
      %v364 = vld [vmem:[%s1 + $0xb0] sm:$0xff]
      %v365 = vld [vmem:[%s1 + $0xb8] sm:$0xff]
      %v366 = vld [vmem:[%s1 + $0xc0] sm:$0xff]
      %v367 = vld [vmem:[%s1 + $0xc8] sm:$0xff]
      %v368 = vld [vmem:[%s326] sm:$0xfe]
      %v369 = vld [vmem:[%s326 + $0x8] sm:$0xfe]
      %v370 = vld [vmem:[%s326 + $0x30] sm:$0x1]
      %v371 = vld [vmem:[%s326 + $0x38] sm:$0x1]
      %v372 = vpack.c.bf16 %v334, %v368
      %v373 = vpack.c.bf16 %v335, %v369
      %v374 = vpack.c.bf16 %v370, %v336
      %v375 = vpack.c.bf16 %v371, %v337
      %s376 = scalar_lea.vmem %s1, 208
      %v377 = vld [vmem:[%s376] sm:$0xff]
      %v378 = vld [vmem:[%s376 + $0x8] sm:$0xff]
      %v379 = vld [vmem:[%s376 + $0x10] sm:$0xff]
      %v380 = vld [vmem:[%s376 + $0x18] sm:$0xff]
      %v381 = vld [vmem:[%s376 + $0x20] sm:$0xff]
      %v382 = vld [vmem:[%s376 + $0x28] sm:$0xff]
      %v383 = vld [vmem:[%s376 + $0x30] sm:$0xff]
      %v384 = vld [vmem:[%s376 + $0x38] sm:$0xff]
      %v385 = vld [vmem:[%s376 + $0x40] sm:$0xff]
      %v386 = vld [vmem:[%s376 + $0x48] sm:$0xff]
      %v387 = vld [vmem:[%s376 + $0x50] sm:$0xff]
      %v388 = vld [vmem:[%s376 + $0x58] sm:$0xff]
      %v389 = vld [vmem:[%s376 + $0x60] sm:$0xff]
      %v390 = vld [vmem:[%s376 + $0x68] sm:$0xff]
      %v391 = vld [vmem:[%s376 + $0x70] sm:$0xff]
      %v392 = vld [vmem:[%s376 + $0x78] sm:$0xff]
      %v393 = vld [vmem:[%s376 + $0x80] sm:$0xff]
      %v394 = vld [vmem:[%s376 + $0x88] sm:$0xff]
      %v395 = vld [vmem:[%s376 + $0x90] sm:$0xff]
      %v396 = vld [vmem:[%s376 + $0x98] sm:$0xff]
      %v397 = vld [vmem:[%s376 + $0xa0] sm:$0xff]
      %v398 = vld [vmem:[%s376 + $0xa8] sm:$0xff]
      %v399 = vld [vmem:[%s376 + $0xb0] sm:$0xff]
      %v400 = vld [vmem:[%s376 + $0xb8] sm:$0xff]
      %v401 = vld [vmem:[%s376 + $0xc0] sm:$0xff]
      %v402 = vld [vmem:[%s376 + $0xc8] sm:$0xff]
      %vm403 = vsmask.f32 7424
      %v405 = vshrl.u32 %v372, 16
      %v407 = vshll.u32 %v372, 16
      %v409 = vrot.slane %v407, 1
      %v410 = vor.u32 %v405, %v409
      %v412 = vshll.u32 %v374, 16
      %v414 = vrot.slane %v412, 1
      %v415 = vsel %vm403, %v410, %v414
      %v417 = vshrl.u32 %v373, 16
      %v419 = vshll.u32 %v373, 16
      %v421 = vrot.slane %v419, 1
      %v422 = vor.u32 %v417, %v421
      %v424 = vshll.u32 %v375, 16
      %v426 = vrot.slane %v424, 1
      %v427 = vsel %vm403, %v422, %v426
      %v428 = vshrl.u32 %v374, 16
      %v430 = vor.u32 %v428, %v414
      %v431 = vshrl.u32 %v375, 16
      %v433 = vor.u32 %v431, %v426
      %v462 = vunpack.c.l.b16 %v377
      %v463 = vunpack.c.h.b16 %v377
      %v464 = vunpack.c.l.b16 %v378
      %v465 = vunpack.c.h.b16 %v378
      %v466 = vunpack.c.l.b16 %v379
      %v467 = vunpack.c.h.b16 %v379
      %v468 = vunpack.c.l.b16 %v380
      %v469 = vunpack.c.h.b16 %v380
      %v470 = vunpack.c.l.b16 %v381
      %v471 = vunpack.c.h.b16 %v381
      %v472 = vunpack.c.l.b16 %v382
      %v473 = vunpack.c.h.b16 %v382
      %v474 = vunpack.c.l.b16 %v383
      %v475 = vunpack.c.h.b16 %v383
      %v476 = vunpack.c.l.b16 %v384
      %v477 = vunpack.c.h.b16 %v384
      %v478 = vunpack.c.l.b16 %v385
      %v479 = vunpack.c.h.b16 %v385
      %v480 = vunpack.c.l.b16 %v386
      %v481 = vunpack.c.h.b16 %v386
      %v482 = vunpack.c.l.b16 %v387
      %v483 = vunpack.c.h.b16 %v387
      %v484 = vunpack.c.l.b16 %v388
      %v485 = vunpack.c.h.b16 %v388
      %v486 = vunpack.c.l.b16 %v389
      %v487 = vunpack.c.h.b16 %v389
      %v488 = vunpack.c.l.b16 %v390
      %v489 = vunpack.c.h.b16 %v390
      %v490 = vunpack.c.l.b16 %v391
      %v491 = vunpack.c.h.b16 %v391
      %v492 = vunpack.c.l.b16 %v392
      %v493 = vunpack.c.h.b16 %v392
      %v494 = vunpack.c.l.b16 %v393
      %v495 = vunpack.c.h.b16 %v393
      %v496 = vunpack.c.l.b16 %v394
      %v497 = vunpack.c.h.b16 %v394
      %v498 = vunpack.c.l.b16 %v395
      %v499 = vunpack.c.h.b16 %v395
      %v500 = vunpack.c.l.b16 %v396
      %v501 = vunpack.c.h.b16 %v396
      %v502 = vunpack.c.l.b16 %v397
      %v503 = vunpack.c.h.b16 %v397
      %v504 = vunpack.c.l.b16 %v398
      %v505 = vunpack.c.h.b16 %v398
      %v506 = vunpack.c.l.b16 %v399
      %v507 = vunpack.c.h.b16 %v399
      %v508 = vunpack.c.l.b16 %v400
      %v509 = vunpack.c.h.b16 %v400
      %v510 = vunpack.c.l.b16 %v401
      %v511 = vunpack.c.h.b16 %v401
      %v512 = vunpack.c.l.b16 %v402
      %v513 = vunpack.c.h.b16 %v402
      %v514 = vpack.c.b16 %v464, %v462
      %v515 = vpack.c.b16 %v465, %v463
      %v516 = vpack.c.b16 %v468, %v466
      %v517 = vpack.c.b16 %v469, %v467
      %v518 = vpack.c.b16 %v472, %v470
      %v519 = vpack.c.b16 %v473, %v471
      %v520 = vpack.c.b16 %v476, %v474
      %v521 = vpack.c.b16 %v477, %v475
      %v522 = vpack.c.b16 %v480, %v478
      %v523 = vpack.c.b16 %v481, %v479
      %v524 = vpack.c.b16 %v484, %v482
      %v525 = vpack.c.b16 %v485, %v483
      %v526 = vpack.c.b16 %v488, %v486
      %v527 = vpack.c.b16 %v489, %v487
      %v528 = vpack.c.b16 %v492, %v490
      %v529 = vpack.c.b16 %v493, %v491
      %v530 = vpack.c.b16 %v496, %v494
      %v531 = vpack.c.b16 %v497, %v495
      %v532 = vpack.c.b16 %v500, %v498
      %v533 = vpack.c.b16 %v501, %v499
      %v534 = vpack.c.b16 %v504, %v502
      %v535 = vpack.c.b16 %v505, %v503
      %v536 = vpack.c.b16 %v508, %v506
      %v537 = vpack.c.b16 %v509, %v507
      %v538 = vpack.c.b16 %v512, %v510
      %v539 = vpack.c.b16 %v513, %v511
      %vm566 = vcmask 654336
      %v568 = vsel %vm566, %v427, 0
      %v571 = vsel %vm566, %v433, 0
      %573 = vmatprep.subr.bf16.mxu0 %v529
      %574 = vmatpush1.bf16.msra.mxu0 %v528
      %575 = vmatprep.subr.bf16.mxu0 %v527
      %576 = vmatpush1.bf16.msra.mxu0 %v526
      %577 = vmatprep.subr.bf16.mxu0 %v525
      %578 = vmatpush1.bf16.msra.mxu0 %v524
      %579 = vmatprep.subr.bf16.mxu0 %v523
      %580 = vmatpush1.bf16.msra.mxu0 %v522
      %581 = vmatprep.subr.bf16.mxu0 %v521
      %582 = vmatpush1.bf16.msra.mxu0 %v520
      %583 = vmatprep.subr.bf16.mxu0 %v519
      %584 = vmatpush1.bf16.msra.mxu0 %v518
      %585 = vmatprep.subr.bf16.mxu0 %v517
      %586 = vmatpush1.bf16.msra.mxu0 %v516
      %587 = vmatprep.subr.bf16.mxu0 %v515
      %588 = vmatpush1.bf16.msra.mxu0 %v514
      %589 = vmatprep.subr.bf16.mxu0 0
      %590 = vmatpush2.bf16.msra.mxu0 0
      %591 = vmatprep.subr.bf16.mxu0 0
      %592 = vmatpush2.bf16.msra.mxu0 0
      %593 = vmatprep.subr.bf16.mxu0 0
      %594 = vmatpush2.bf16.msra.mxu0 0
      %595 = vmatprep.subr.bf16.mxu0 %v539
      %596 = vmatpush2.bf16.msra.mxu0 %v538
      %597 = vmatprep.subr.bf16.mxu0 %v537
      %598 = vmatpush2.bf16.msra.mxu0 %v536
      %599 = vmatprep.subr.bf16.mxu0 %v535
      %600 = vmatpush2.bf16.msra.mxu0 %v534
      %601 = vmatprep.subr.bf16.mxu0 %v533
      %602 = vmatpush2.bf16.msra.mxu0 %v532
      %603 = vmatprep.subr.bf16.mxu0 %v531
      %604 = vmatpush2.bf16.msra.mxu0 %v530
      %605 = vmatprep.mubr.bf16.mxu0 %v568
      %606 = vmatmul.mubr.bf16.gmra.mxu0 %v415
      %v607 = vpop.f32.mrf.mxu0
      %v608 = vadd.f32 0.0, %v607
      %v609 = vpop.f32.mrf.mxu0
      %v610 = vadd.f32 0.0, %v609
      %v611 = vpop.f32.mrf.mxu0
      %v612 = vadd.f32 0.0, %v611
      %v613 = vpop.f32.mrf.mxu0
      %v614 = vadd.f32 0.0, %v613
      %615 = vmatprep.mubr.bf16.mxu0 %v571
      %616 = vmatmul.mubr.bf16.gmra.mxu0 %v430
      %v617 = vpop.f32.mrf.mxu0
      %v618 = vadd.f32 0.0, %v617
      %v619 = vpop.f32.mrf.mxu0
      %v620 = vadd.f32 0.0, %v619
      %v621 = vpop.f32.mrf.mxu0
      %v622 = vpop.f32.mrf.mxu0
      %623 = vdwg.mxu0
      %v650 = vunpack.c.l.b16 %v342
      %v651 = vunpack.c.h.b16 %v342
      %v652 = vunpack.c.l.b16 %v343
      %v653 = vunpack.c.h.b16 %v343
      %v654 = vunpack.c.l.b16 %v344
      %v655 = vunpack.c.h.b16 %v344
      %v656 = vunpack.c.l.b16 %v345
      %v657 = vunpack.c.h.b16 %v345
      %v658 = vunpack.c.l.b16 %v346
      %v659 = vunpack.c.h.b16 %v346
      %v660 = vunpack.c.l.b16 %v347
      %v661 = vunpack.c.h.b16 %v347
      %v662 = vunpack.c.l.b16 %v348
      %v663 = vunpack.c.h.b16 %v348
      %v664 = vunpack.c.l.b16 %v349
      %v665 = vunpack.c.h.b16 %v349
      %v666 = vunpack.c.l.b16 %v350
      %v667 = vunpack.c.h.b16 %v350
      %v668 = vunpack.c.l.b16 %v351
      %v669 = vunpack.c.h.b16 %v351
      %v670 = vunpack.c.l.b16 %v352
      %v671 = vunpack.c.h.b16 %v352
      %v672 = vunpack.c.l.b16 %v353
      %v673 = vunpack.c.h.b16 %v353
      %v674 = vunpack.c.l.b16 %v354
      %v675 = vunpack.c.h.b16 %v354
      %v676 = vunpack.c.l.b16 %v355
      %v677 = vunpack.c.h.b16 %v355
      %v678 = vunpack.c.l.b16 %v356
      %v679 = vunpack.c.h.b16 %v356
      %v680 = vunpack.c.l.b16 %v357
      %v681 = vunpack.c.h.b16 %v357
      %v682 = vunpack.c.l.b16 %v358
      %v683 = vunpack.c.h.b16 %v358
      %v684 = vunpack.c.l.b16 %v359
      %v685 = vunpack.c.h.b16 %v359
      %v686 = vunpack.c.l.b16 %v360
      %v687 = vunpack.c.h.b16 %v360
      %v688 = vunpack.c.l.b16 %v361
      %v689 = vunpack.c.h.b16 %v361
      %v690 = vunpack.c.l.b16 %v362
      %v691 = vunpack.c.h.b16 %v362
      %v692 = vunpack.c.l.b16 %v363
      %v693 = vunpack.c.h.b16 %v363
      %v694 = vunpack.c.l.b16 %v364
      %v695 = vunpack.c.h.b16 %v364
      %v696 = vunpack.c.l.b16 %v365
      %v697 = vunpack.c.h.b16 %v365
      %v698 = vunpack.c.l.b16 %v366
      %v699 = vunpack.c.h.b16 %v366
      %v700 = vunpack.c.l.b16 %v367
      %v701 = vunpack.c.h.b16 %v367
      %v702 = vpack.c.b16 %v652, %v650
      %v703 = vpack.c.b16 %v653, %v651
      %v704 = vpack.c.b16 %v656, %v654
      %v705 = vpack.c.b16 %v657, %v655
      %v706 = vpack.c.b16 %v660, %v658
      %v707 = vpack.c.b16 %v661, %v659
      %v708 = vpack.c.b16 %v664, %v662
      %v709 = vpack.c.b16 %v665, %v663
      %v710 = vpack.c.b16 %v668, %v666
      %v711 = vpack.c.b16 %v669, %v667
      %v712 = vpack.c.b16 %v672, %v670
      %v713 = vpack.c.b16 %v673, %v671
      %v714 = vpack.c.b16 %v676, %v674
      %v715 = vpack.c.b16 %v677, %v675
      %v716 = vpack.c.b16 %v680, %v678
      %v717 = vpack.c.b16 %v681, %v679
      %v718 = vpack.c.b16 %v684, %v682
      %v719 = vpack.c.b16 %v685, %v683
      %v720 = vpack.c.b16 %v688, %v686
      %v721 = vpack.c.b16 %v689, %v687
      %v722 = vpack.c.b16 %v692, %v690
      %v723 = vpack.c.b16 %v693, %v691
      %v724 = vpack.c.b16 %v696, %v694
      %v725 = vpack.c.b16 %v697, %v695
      %v726 = vpack.c.b16 %v700, %v698
      %v727 = vpack.c.b16 %v701, %v699
      %v755 = vsel %vm566, %v339, 0
      %v758 = vsel %vm566, %v341, 0
      %760 = vmatprep.subr.bf16.mxu0 %v717
      %761 = vmatpush1.bf16.msra.mxu0 %v716
      %762 = vmatprep.subr.bf16.mxu0 %v715
      %763 = vmatpush1.bf16.msra.mxu0 %v714
      %764 = vmatprep.subr.bf16.mxu0 %v713
      %765 = vmatpush1.bf16.msra.mxu0 %v712
      %766 = vmatprep.subr.bf16.mxu0 %v711
      %767 = vmatpush1.bf16.msra.mxu0 %v710
      %768 = vmatprep.subr.bf16.mxu0 %v709
      %769 = vmatpush1.bf16.msra.mxu0 %v708
      %770 = vmatprep.subr.bf16.mxu0 %v707
      %771 = vmatpush1.bf16.msra.mxu0 %v706
      %772 = vmatprep.subr.bf16.mxu0 %v705
      %773 = vmatpush1.bf16.msra.mxu0 %v704
      %774 = vmatprep.subr.bf16.mxu0 %v703
      %775 = vmatpush1.bf16.msra.mxu0 %v702
      %776 = vmatprep.subr.bf16.mxu0 0
      %777 = vmatpush2.bf16.msra.mxu0 0
      %778 = vmatprep.subr.bf16.mxu0 0
      %779 = vmatpush2.bf16.msra.mxu0 0
      %780 = vmatprep.subr.bf16.mxu0 0
      %781 = vmatpush2.bf16.msra.mxu0 0
      %782 = vmatprep.subr.bf16.mxu0 %v727
      %783 = vmatpush2.bf16.msra.mxu0 %v726
      %784 = vmatprep.subr.bf16.mxu0 %v725
      %785 = vmatpush2.bf16.msra.mxu0 %v724
      %786 = vmatprep.subr.bf16.mxu0 %v723
      %787 = vmatpush2.bf16.msra.mxu0 %v722
      %788 = vmatprep.subr.bf16.mxu0 %v721
      %789 = vmatpush2.bf16.msra.mxu0 %v720
      %790 = vmatprep.subr.bf16.mxu0 %v719
      %791 = vmatpush2.bf16.msra.mxu0 %v718
      %792 = vmatprep.mubr.bf16.mxu0 %v755
      %793 = vmatmul.mubr.bf16.gmra.mxu0 %v338
      %v794 = vpop.f32.mrf.mxu0
      %v795 = vadd.f32 %v608, %v794
      %v796 = vpop.f32.mrf.mxu0
      %v797 = vadd.f32 %v610, %v796
      %v798 = vpop.f32.mrf.mxu0
      %v799 = vadd.f32 %v612, %v798
      %v800 = vpop.f32.mrf.mxu0
      %v801 = vadd.f32 %v614, %v800
      %802 = vmatprep.mubr.bf16.mxu0 %v758
      %803 = vmatmul.mubr.bf16.gmra.mxu0 %v340
      %v804 = vpop.f32.mrf.mxu0
      %v805 = vadd.f32 %v618, %v804
      %v806 = vpop.f32.mrf.mxu0
      %v807 = vadd.f32 %v620, %v806
      %v808 = vpop.f32.mrf.mxu0
      %v809 = vpop.f32.mrf.mxu0
      %810 = vdwg.mxu0
      %v811 = vld [vmem:[%s326] sm:$0xfc]
      %v812 = vld [vmem:[%s326 + $0x8] sm:$0xfc]
      %v813 = vld [vmem:[%s326 + $0x30] sm:$0x3]
      %v814 = vld [vmem:[%s326 + $0x38] sm:$0x3]
      %v815 = vpack.c.bf16 %v334, %v811
      %v816 = vpack.c.bf16 %v335, %v812
      %v817 = vpack.c.bf16 %v813, %v336
      %v818 = vpack.c.bf16 %v814, %v337
      %s819 = scalar_lea.vmem %s1, 416
      %v820 = vld [vmem:[%s819] sm:$0xff]
      %v821 = vld [vmem:[%s819 + $0x8] sm:$0xff]
      %v822 = vld [vmem:[%s819 + $0x10] sm:$0xff]
      %v823 = vld [vmem:[%s819 + $0x18] sm:$0xff]
      %v824 = vld [vmem:[%s819 + $0x20] sm:$0xff]
      %v825 = vld [vmem:[%s819 + $0x28] sm:$0xff]
      %v826 = vld [vmem:[%s819 + $0x30] sm:$0xff]
      %v827 = vld [vmem:[%s819 + $0x38] sm:$0xff]
      %v828 = vld [vmem:[%s819 + $0x40] sm:$0xff]
      %v829 = vld [vmem:[%s819 + $0x48] sm:$0xff]
      %v830 = vld [vmem:[%s819 + $0x50] sm:$0xff]
      %v831 = vld [vmem:[%s819 + $0x58] sm:$0xff]
      %v832 = vld [vmem:[%s819 + $0x60] sm:$0xff]
      %v833 = vld [vmem:[%s819 + $0x68] sm:$0xff]
      %v834 = vld [vmem:[%s819 + $0x70] sm:$0xff]
      %v835 = vld [vmem:[%s819 + $0x78] sm:$0xff]
      %v836 = vld [vmem:[%s819 + $0x80] sm:$0xff]
      %v837 = vld [vmem:[%s819 + $0x88] sm:$0xff]
      %v838 = vld [vmem:[%s819 + $0x90] sm:$0xff]
      %v839 = vld [vmem:[%s819 + $0x98] sm:$0xff]
      %v840 = vld [vmem:[%s819 + $0xa0] sm:$0xff]
      %v841 = vld [vmem:[%s819 + $0xa8] sm:$0xff]
      %v842 = vld [vmem:[%s819 + $0xb0] sm:$0xff]
      %v843 = vld [vmem:[%s819 + $0xb8] sm:$0xff]
      %v844 = vld [vmem:[%s819 + $0xc0] sm:$0xff]
      %v845 = vld [vmem:[%s819 + $0xc8] sm:$0xff]
      %vm850 = vcmask 1046528
      %v851 = vrot.slane %v815, 1
      %v852 = vrot.slane %v817, 1
      %v853 = vsel %vm850, %v851, %v852
      %v854 = vrot.slane %v816, 1
      %v855 = vrot.slane %v818, 1
      %v856 = vsel %vm850, %v854, %v855
      %v885 = vunpack.c.l.b16 %v820
      %v886 = vunpack.c.h.b16 %v820
      %v887 = vunpack.c.l.b16 %v821
      %v888 = vunpack.c.h.b16 %v821
      %v889 = vunpack.c.l.b16 %v822
      %v890 = vunpack.c.h.b16 %v822
      %v891 = vunpack.c.l.b16 %v823
      %v892 = vunpack.c.h.b16 %v823
      %v893 = vunpack.c.l.b16 %v824
      %v894 = vunpack.c.h.b16 %v824
      %v895 = vunpack.c.l.b16 %v825
      %v896 = vunpack.c.h.b16 %v825
      %v897 = vunpack.c.l.b16 %v826
      %v898 = vunpack.c.h.b16 %v826
      %v899 = vunpack.c.l.b16 %v827
      %v900 = vunpack.c.h.b16 %v827
      %v901 = vunpack.c.l.b16 %v828
      %v902 = vunpack.c.h.b16 %v828
      %v903 = vunpack.c.l.b16 %v829
      %v904 = vunpack.c.h.b16 %v829
      %v905 = vunpack.c.l.b16 %v830
      %v906 = vunpack.c.h.b16 %v830
      %v907 = vunpack.c.l.b16 %v831
      %v908 = vunpack.c.h.b16 %v831
      %v909 = vunpack.c.l.b16 %v832
      %v910 = vunpack.c.h.b16 %v832
      %v911 = vunpack.c.l.b16 %v833
      %v912 = vunpack.c.h.b16 %v833
      %v913 = vunpack.c.l.b16 %v834
      %v914 = vunpack.c.h.b16 %v834
      %v915 = vunpack.c.l.b16 %v835
      %v916 = vunpack.c.h.b16 %v835
      %v917 = vunpack.c.l.b16 %v836
      %v918 = vunpack.c.h.b16 %v836
      %v919 = vunpack.c.l.b16 %v837
      %v920 = vunpack.c.h.b16 %v837
      %v921 = vunpack.c.l.b16 %v838
      %v922 = vunpack.c.h.b16 %v838
      %v923 = vunpack.c.l.b16 %v839
      %v924 = vunpack.c.h.b16 %v839
      %v925 = vunpack.c.l.b16 %v840
      %v926 = vunpack.c.h.b16 %v840
      %v927 = vunpack.c.l.b16 %v841
      %v928 = vunpack.c.h.b16 %v841
      %v929 = vunpack.c.l.b16 %v842
      %v930 = vunpack.c.h.b16 %v842
      %v931 = vunpack.c.l.b16 %v843
      %v932 = vunpack.c.h.b16 %v843
      %v933 = vunpack.c.l.b16 %v844
      %v934 = vunpack.c.h.b16 %v844
      %v935 = vunpack.c.l.b16 %v845
      %v936 = vunpack.c.h.b16 %v845
      %v937 = vpack.c.b16 %v887, %v885
      %v938 = vpack.c.b16 %v888, %v886
      %v939 = vpack.c.b16 %v891, %v889
      %v940 = vpack.c.b16 %v892, %v890
      %v941 = vpack.c.b16 %v895, %v893
      %v942 = vpack.c.b16 %v896, %v894
      %v943 = vpack.c.b16 %v899, %v897
      %v944 = vpack.c.b16 %v900, %v898
      %v945 = vpack.c.b16 %v903, %v901
      %v946 = vpack.c.b16 %v904, %v902
      %v947 = vpack.c.b16 %v907, %v905
      %v948 = vpack.c.b16 %v908, %v906
      %v949 = vpack.c.b16 %v911, %v909
      %v950 = vpack.c.b16 %v912, %v910
      %v951 = vpack.c.b16 %v915, %v913
      %v952 = vpack.c.b16 %v916, %v914
      %v953 = vpack.c.b16 %v919, %v917
      %v954 = vpack.c.b16 %v920, %v918
      %v955 = vpack.c.b16 %v923, %v921
      %v956 = vpack.c.b16 %v924, %v922
      %v957 = vpack.c.b16 %v927, %v925
      %v958 = vpack.c.b16 %v928, %v926
      %v959 = vpack.c.b16 %v931, %v929
      %v960 = vpack.c.b16 %v932, %v930
      %v961 = vpack.c.b16 %v935, %v933
      %v962 = vpack.c.b16 %v936, %v934
      %v990 = vsel %vm566, %v856, 0
      %v993 = vsel %vm566, %v855, 0
      %995 = vmatprep.subr.bf16.mxu0 %v952
      %996 = vmatpush1.bf16.msra.mxu0 %v951
      %997 = vmatprep.subr.bf16.mxu0 %v950
      %998 = vmatpush1.bf16.msra.mxu0 %v949
      %999 = vmatprep.subr.bf16.mxu0 %v948
      %1000 = vmatpush1.bf16.msra.mxu0 %v947
      %1001 = vmatprep.subr.bf16.mxu0 %v946
      %1002 = vmatpush1.bf16.msra.mxu0 %v945
      %1003 = vmatprep.subr.bf16.mxu0 %v944
      %1004 = vmatpush1.bf16.msra.mxu0 %v943
      %1005 = vmatprep.subr.bf16.mxu0 %v942
      %1006 = vmatpush1.bf16.msra.mxu0 %v941
      %1007 = vmatprep.subr.bf16.mxu0 %v940
      %1008 = vmatpush1.bf16.msra.mxu0 %v939
      %1009 = vmatprep.subr.bf16.mxu0 %v938
      %1010 = vmatpush1.bf16.msra.mxu0 %v937
      %1011 = vmatprep.subr.bf16.mxu0 0
      %1012 = vmatpush2.bf16.msra.mxu0 0
      %1013 = vmatprep.subr.bf16.mxu0 0
      %1014 = vmatpush2.bf16.msra.mxu0 0
      %1015 = vmatprep.subr.bf16.mxu0 0
      %1016 = vmatpush2.bf16.msra.mxu0 0
      %1017 = vmatprep.subr.bf16.mxu0 %v962
      %1018 = vmatpush2.bf16.msra.mxu0 %v961
      %1019 = vmatprep.subr.bf16.mxu0 %v960
      %1020 = vmatpush2.bf16.msra.mxu0 %v959
      %1021 = vmatprep.subr.bf16.mxu0 %v958
      %1022 = vmatpush2.bf16.msra.mxu0 %v957
      %1023 = vmatprep.subr.bf16.mxu0 %v956
      %1024 = vmatpush2.bf16.msra.mxu0 %v955
      %1025 = vmatprep.subr.bf16.mxu0 %v954
      %1026 = vmatpush2.bf16.msra.mxu0 %v953
      %1027 = vmatprep.mubr.bf16.mxu0 %v990
      %1028 = vmatmul.mubr.bf16.gmra.mxu0 %v853
      %v1029 = vpop.f32.mrf.mxu0
      %v1030 = vadd.f32 0.0, %v1029
      %v1031 = vpop.f32.mrf.mxu0
      %v1032 = vadd.f32 0.0, %v1031
      %v1033 = vpop.f32.mrf.mxu0
      %v1034 = vadd.f32 0.0, %v1033
      %v1035 = vpop.f32.mrf.mxu0
      %v1036 = vadd.f32 0.0, %v1035
      %1037 = vmatprep.mubr.bf16.mxu0 %v993
      %1038 = vmatmul.mubr.bf16.gmra.mxu0 %v852
      %v1039 = vpop.f32.mrf.mxu0
      %v1040 = vadd.f32 0.0, %v1039
      %v1041 = vpop.f32.mrf.mxu0
      %v1042 = vadd.f32 0.0, %v1041
      %v1043 = vpop.f32.mrf.mxu0
      %v1044 = vpop.f32.mrf.mxu0
      %1045 = vdwg.mxu0
      %v1046 = vadd.f32 %v795, %v1030
      %v1047 = vadd.f32 %v797, %v1032
      %v1048 = vadd.f32 %v799, %v1034
      %v1049 = vadd.f32 %v801, %v1036
      %v1050 = vadd.f32 %v805, %v1040
      %v1051 = vadd.f32 %v807, %v1042
      %v1052 = vld [vmem:[%s2] sm:$0x3]
      %v1054 = vlaneseq
      %v1055 = vshrl.u32 %v1054, 7
      %v1056 = vsub.s32 0, %v1055
      %v1057 = vrot.slane %v1052, %v1056
      %v1058 = vlaneseq
      %v1059 = vshrl.u32 %v1058, 7
      %v1060 = vsub.s32 1, %v1059
      %v1061 = vrot.slane %v1052, %v1060
      %v1064 = vadd.f32 %v1046, %v1057
      %v1065 = vadd.f32 %v1047, %v1061
      %v1066 = vadd.f32 %v1048, %v1057
      %v1067 = vadd.f32 %v1049, %v1061
      %v1068 = vadd.f32 %v1050, %v1057
      %v1069 = vadd.f32 %v1051, %v1061
      %v1070 = vmax.f32 %v1064, 0.0
      %v1071 = vmax.f32 %v1065, 0.0
      %v1072 = vmax.f32 %v1066, 0.0
      %v1073 = vmax.f32 %v1067, 0.0
      %v1074 = vmax.f32 %v1068, 0.0
      %v1075 = vmax.f32 %v1069, 0.0
      %v1076 = vld [vmem:[%s3] sm:$0xff]
      %v1077 = vld [vmem:[%s3 + $0x8] sm:$0xff]
      %v1078 = vld [vmem:[%s3 + $0x10] sm:$0xff]
      %v1079 = vld [vmem:[%s3 + $0x18] sm:$0xff]
      %v1080 = vld [vmem:[%s3 + $0x20] sm:$0xff]
      %v1081 = vld [vmem:[%s3 + $0x28] sm:$0xff]
      %v1082 = vld [vmem:[%s3 + $0x30] sm:$0xff]
      %v1083 = vld [vmem:[%s3 + $0x38] sm:$0xff]
      %v1084 = vld [vmem:[%s3 + $0x40] sm:$0xff]
      %v1085 = vld [vmem:[%s3 + $0x48] sm:$0xff]
      %v1086 = vld [vmem:[%s3 + $0x50] sm:$0xff]
      %v1087 = vld [vmem:[%s3 + $0x58] sm:$0xff]
      %v1088 = vld [vmem:[%s3 + $0x60] sm:$0xff]
      %v1089 = vld [vmem:[%s3 + $0x68] sm:$0xff]
      %v1090 = vld [vmem:[%s3 + $0x70] sm:$0xff]
      %v1091 = vld [vmem:[%s3 + $0x78] sm:$0xff]
      %v1092 = vld [vmem:[%s3 + $0x80] sm:$0xff]
      %v1093 = vld [vmem:[%s3 + $0x88] sm:$0xff]
      %v1094 = vld [vmem:[%s3 + $0x90] sm:$0xff]
      %v1095 = vld [vmem:[%s3 + $0x98] sm:$0xff]
      %v1096 = vld [vmem:[%s3 + $0xa0] sm:$0xff]
      %v1097 = vld [vmem:[%s3 + $0xa8] sm:$0xff]
      %v1098 = vld [vmem:[%s3 + $0xb0] sm:$0xff]
      %v1099 = vld [vmem:[%s3 + $0xb8] sm:$0xff]
      %vm1100 = vcmask 523264
      %v1102 = vsel %vm1100, %v1071, 0
      %v1105 = vsel %vm1100, %v1073, 0
      %v1108 = vsel %vm1100, %v1075, 0
      %1110 = vmatprep.subr.mxu0 0.0
      %1111 = vmatpush1.msra.mxu0 %v1091
      %1112 = vmatprep.subr.mxu0 0.0
      %1113 = vmatpush1.msra.mxu0 %v1090
      %1114 = vmatprep.subr.mxu0 0.0
      %1115 = vmatpush1.msra.mxu0 %v1089
      %1116 = vmatprep.subr.mxu0 0.0
      %1117 = vmatpush1.msra.mxu0 %v1088
      %1118 = vmatprep.subr.mxu0 0.0
      %1119 = vmatpush1.msra.mxu0 %v1087
      %1120 = vmatprep.subr.mxu0 0.0
      %1121 = vmatpush1.msra.mxu0 %v1086
      %1122 = vmatprep.subr.mxu0 0.0
      %1123 = vmatpush1.msra.mxu0 %v1085
      %1124 = vmatprep.subr.mxu0 0.0
      %1125 = vmatpush1.msra.mxu0 %v1084
      %1126 = vmatprep.subr.mxu0 0.0
      %1127 = vmatpush1.msra.mxu0 %v1083
      %1128 = vmatprep.subr.mxu0 0.0
      %1129 = vmatpush1.msra.mxu0 %v1082
      %1130 = vmatprep.subr.mxu0 0.0
      %1131 = vmatpush1.msra.mxu0 %v1081
      %1132 = vmatprep.subr.mxu0 0.0
      %1133 = vmatpush1.msra.mxu0 %v1080
      %1134 = vmatprep.subr.mxu0 0.0
      %1135 = vmatpush1.msra.mxu0 %v1079
      %1136 = vmatprep.subr.mxu0 0.0
      %1137 = vmatpush1.msra.mxu0 %v1078
      %1138 = vmatprep.subr.mxu0 0.0
      %1139 = vmatpush1.msra.mxu0 %v1077
      %1140 = vmatprep.subr.mxu0 0.0
      %1141 = vmatpush1.msra.mxu0 %v1076
      %1142 = vmatprep.subr.mxu0 0.0
      %1143 = vmatpush2.msra.mxu0 0.0
      %1144 = vmatprep.subr.mxu0 0.0
      %1145 = vmatpush2.msra.mxu0 0.0
      %1146 = vmatprep.subr.mxu0 0.0
      %1147 = vmatpush2.msra.mxu0 0.0
      %1148 = vmatprep.subr.mxu0 0.0
      %1149 = vmatpush2.msra.mxu0 0.0
      %1150 = vmatprep.subr.mxu0 0.0
      %1151 = vmatpush2.msra.mxu0 0.0
      %1152 = vmatprep.subr.mxu0 0.0
      %1153 = vmatpush2.msra.mxu0 0.0
      %1154 = vmatprep.subr.mxu0 0.0
      %1155 = vmatpush2.msra.mxu0 0.0
      %1156 = vmatprep.subr.mxu0 0.0
      %1157 = vmatpush2.msra.mxu0 0.0
      %1158 = vmatprep.subr.mxu0 0.0
      %1159 = vmatpush2.msra.mxu0 %v1099
      %1160 = vmatprep.subr.mxu0 0.0
      %1161 = vmatpush2.msra.mxu0 %v1098
      %1162 = vmatprep.subr.mxu0 0.0
      %1163 = vmatpush2.msra.mxu0 %v1097
      %1164 = vmatprep.subr.mxu0 0.0
      %1165 = vmatpush2.msra.mxu0 %v1096
      %1166 = vmatprep.subr.mxu0 0.0
      %1167 = vmatpush2.msra.mxu0 %v1095
      %1168 = vmatprep.subr.mxu0 0.0
      %1169 = vmatpush2.msra.mxu0 %v1094
      %1170 = vmatprep.subr.mxu0 0.0
      %1171 = vmatpush2.msra.mxu0 %v1093
      %1172 = vmatprep.subr.mxu0 0.0
      %1173 = vmatpush2.msra.mxu0 %v1092
      %1174 = vmatprep.mubr.f32.mxu0 %v1102
      %1175 = vmatmul.mubr.f32.gmra.mxu0 %v1070
      %v1176 = vpop.f32.mrf.mxu0
      %v1177 = vadd.f32 0.0, %v1176
      %v1178 = vpop.f32.mrf.mxu0
      %1179 = vmatprep.mubr.f32.mxu0 %v1105
      %1180 = vmatmul.mubr.f32.gmra.mxu0 %v1072
      %v1181 = vpop.f32.mrf.mxu0
      %v1182 = vadd.f32 0.0, %v1181
      %v1183 = vpop.f32.mrf.mxu0
      %1184 = vmatprep.mubr.f32.mxu0 %v1108
      %1185 = vmatmul.mubr.f32.gmra.mxu0 %v1074
      %v1186 = vpop.f32.mrf.mxu0
      %v1187 = vadd.f32 0.0, %v1186
      %v1188 = vpop.f32.mrf.mxu0
      %1189 = vdwg.mxu0
      %s1190 = scalar_lea.vmem %s3, 192
      %v1191 = vld [vmem:[%s1190] sm:$0xff]
      %v1192 = vld [vmem:[%s1190 + $0x8] sm:$0xff]
      %v1193 = vld [vmem:[%s1190 + $0x10] sm:$0xff]
      %v1194 = vld [vmem:[%s1190 + $0x18] sm:$0xff]
      %v1195 = vld [vmem:[%s1190 + $0x20] sm:$0xff]
      %v1196 = vld [vmem:[%s1190 + $0x28] sm:$0xff]
      %v1197 = vld [vmem:[%s1190 + $0x30] sm:$0xff]
      %v1198 = vld [vmem:[%s1190 + $0x38] sm:$0xff]
      %v1199 = vld [vmem:[%s1190 + $0x40] sm:$0xff]
      %v1200 = vld [vmem:[%s1190 + $0x48] sm:$0xff]
      %v1201 = vld [vmem:[%s1190 + $0x50] sm:$0xff]
      %v1202 = vld [vmem:[%s1190 + $0x58] sm:$0xff]
      %v1203 = vld [vmem:[%s1190 + $0x60] sm:$0xff]
      %v1204 = vld [vmem:[%s1190 + $0x68] sm:$0xff]
      %v1205 = vld [vmem:[%s1190 + $0x70] sm:$0xff]
      %v1206 = vld [vmem:[%s1190 + $0x78] sm:$0xff]
      %v1207 = vld [vmem:[%s1190 + $0x80] sm:$0xff]
      %v1208 = vld [vmem:[%s1190 + $0x88] sm:$0xff]
      %v1209 = vld [vmem:[%s1190 + $0x90] sm:$0xff]
      %v1210 = vld [vmem:[%s1190 + $0x98] sm:$0xff]
      %v1211 = vld [vmem:[%s1190 + $0xa0] sm:$0xff]
      %v1212 = vld [vmem:[%s1190 + $0xa8] sm:$0xff]
      %v1213 = vld [vmem:[%s1190 + $0xb0] sm:$0xff]
      %v1214 = vld [vmem:[%s1190 + $0xb8] sm:$0xff]
      %1215 = vmatprep.subr.mxu0 0.0
      %1216 = vmatpush1.msra.mxu0 %v1206
      %1217 = vmatprep.subr.mxu0 0.0
      %1218 = vmatpush1.msra.mxu0 %v1205
      %1219 = vmatprep.subr.mxu0 0.0
      %1220 = vmatpush1.msra.mxu0 %v1204
      %1221 = vmatprep.subr.mxu0 0.0
      %1222 = vmatpush1.msra.mxu0 %v1203
      %1223 = vmatprep.subr.mxu0 0.0
      %1224 = vmatpush1.msra.mxu0 %v1202
      %1225 = vmatprep.subr.mxu0 0.0
      %1226 = vmatpush1.msra.mxu0 %v1201
      %1227 = vmatprep.subr.mxu0 0.0
      %1228 = vmatpush1.msra.mxu0 %v1200
      %1229 = vmatprep.subr.mxu0 0.0
      %1230 = vmatpush1.msra.mxu0 %v1199
      %1231 = vmatprep.subr.mxu0 0.0
      %1232 = vmatpush1.msra.mxu0 %v1198
      %1233 = vmatprep.subr.mxu0 0.0
      %1234 = vmatpush1.msra.mxu0 %v1197
      %1235 = vmatprep.subr.mxu0 0.0
      %1236 = vmatpush1.msra.mxu0 %v1196
      %1237 = vmatprep.subr.mxu0 0.0
      %1238 = vmatpush1.msra.mxu0 %v1195
      %1239 = vmatprep.subr.mxu0 0.0
      %1240 = vmatpush1.msra.mxu0 %v1194
      %1241 = vmatprep.subr.mxu0 0.0
      %1242 = vmatpush1.msra.mxu0 %v1193
      %1243 = vmatprep.subr.mxu0 0.0
      %1244 = vmatpush1.msra.mxu0 %v1192
      %1245 = vmatprep.subr.mxu0 0.0
      %1246 = vmatpush1.msra.mxu0 %v1191
      %1247 = vmatprep.subr.mxu0 0.0
      %1248 = vmatpush2.msra.mxu0 0.0
      %1249 = vmatprep.subr.mxu0 0.0
      %1250 = vmatpush2.msra.mxu0 0.0
      %1251 = vmatprep.subr.mxu0 0.0
      %1252 = vmatpush2.msra.mxu0 0.0
      %1253 = vmatprep.subr.mxu0 0.0
      %1254 = vmatpush2.msra.mxu0 0.0
      %1255 = vmatprep.subr.mxu0 0.0
      %1256 = vmatpush2.msra.mxu0 0.0
      %1257 = vmatprep.subr.mxu0 0.0
      %1258 = vmatpush2.msra.mxu0 0.0
      %1259 = vmatprep.subr.mxu0 0.0
      %1260 = vmatpush2.msra.mxu0 0.0
      %1261 = vmatprep.subr.mxu0 0.0
      %1262 = vmatpush2.msra.mxu0 0.0
      %1263 = vmatprep.subr.mxu0 0.0
      %1264 = vmatpush2.msra.mxu0 %v1214
      %1265 = vmatprep.subr.mxu0 0.0
      %1266 = vmatpush2.msra.mxu0 %v1213
      %1267 = vmatprep.subr.mxu0 0.0
      %1268 = vmatpush2.msra.mxu0 %v1212
      %1269 = vmatprep.subr.mxu0 0.0
      %1270 = vmatpush2.msra.mxu0 %v1211
      %1271 = vmatprep.subr.mxu0 0.0
      %1272 = vmatpush2.msra.mxu0 %v1210
      %1273 = vmatprep.subr.mxu0 0.0
      %1274 = vmatpush2.msra.mxu0 %v1209
      %1275 = vmatprep.subr.mxu0 0.0
      %1276 = vmatpush2.msra.mxu0 %v1208
      %1277 = vmatprep.subr.mxu0 0.0
      %1278 = vmatpush2.msra.mxu0 %v1207
      %1279 = vmatprep.mubr.f32.mxu0 %v1102
      %1280 = vmatmul.mubr.f32.gmra.mxu0 %v1070
      %v1281 = vpop.f32.mrf.mxu0
      %v1282 = vadd.f32 0.0, %v1281
      %v1283 = vpop.f32.mrf.mxu0
      %1284 = vmatprep.mubr.f32.mxu0 %v1105
      %1285 = vmatmul.mubr.f32.gmra.mxu0 %v1072
      %v1286 = vpop.f32.mrf.mxu0
      %v1287 = vadd.f32 0.0, %v1286
      %v1288 = vpop.f32.mrf.mxu0
      %1289 = vmatprep.mubr.f32.mxu0 %v1108
      %1290 = vmatmul.mubr.f32.gmra.mxu0 %v1074
      %v1291 = vpop.f32.mrf.mxu0
      %v1292 = vadd.f32 0.0, %v1291
      %v1293 = vpop.f32.mrf.mxu0
      %1294 = vdwg.mxu0
      %v1295 = vmax.f32 %v1177, %v1282
      %v1296 = vmax.f32 %v1182, %v1287
      %v1297 = vmax.f32 %v1187, %v1292
      %v1298 = vld [vmem:[%s4] sm:$0xff]
      %v1299 = vld [vmem:[%s4 + $0x8] sm:$0x3f]
      %vm1300 = vcmask 195584
      %v1302 = vsel %vm1300, %v1298, 0
      %v1305 = vsel %vm1300, %v1299, 0
      %1307 = vmatprep.subr.mxu0 0.0
      %1308 = vmatpush1.msra.mxu0 0.0
      %1309 = vmatprep.subr.mxu0 0.0
      %1310 = vmatpush1.msra.mxu0 0.0
      %1311 = vmatprep.subr.mxu0 0.0
      %1312 = vmatpush1.msra.mxu0 0.0
      %1313 = vmatprep.subr.mxu0 0.0
      %1314 = vmatpush1.msra.mxu0 0.0
      %1315 = vmatprep.subr.mxu0 0.0
      %1316 = vmatpush1.msra.mxu0 0.0
      %1317 = vmatprep.subr.mxu0 0.0
      %1318 = vmatpush1.msra.mxu0 0.0
      %1319 = vmatprep.subr.mxu0 0.0
      %1320 = vmatpush1.msra.mxu0 0.0
      %1321 = vmatprep.subr.mxu0 0.0
      %1322 = vmatpush1.msra.mxu0 0.0
      %1323 = vmatprep.subr.mxu0 0.0
      %1324 = vmatpush1.msra.mxu0 0.0
      %1325 = vmatprep.subr.mxu0 0.0
      %1326 = vmatpush1.msra.mxu0 0.0
      %1327 = vmatprep.subr.mxu0 0.0
      %1328 = vmatpush1.msra.mxu0 0.0
      %1329 = vmatprep.subr.mxu0 0.0
      %1330 = vmatpush1.msra.mxu0 0.0
      %1331 = vmatprep.subr.mxu0 0.0
      %1332 = vmatpush1.msra.mxu0 0.0
      %1333 = vmatprep.subr.mxu0 0.0
      %1334 = vmatpush1.msra.mxu0 %v1297
      %1335 = vmatprep.subr.mxu0 0.0
      %1336 = vmatpush1.msra.mxu0 %v1296
      %1337 = vmatprep.subr.mxu0 0.0
      %1338 = vmatpush1.msra.mxu0 %v1295
      %1339 = vmatprep.subr.mxu0 0.0
      %1340 = vmatpush2.msra.mxu0 0.0
      %1341 = vmatprep.subr.mxu0 0.0
      %1342 = vmatpush2.msra.mxu0 0.0
      %1343 = vmatprep.subr.mxu0 0.0
      %1344 = vmatpush2.msra.mxu0 0.0
      %1345 = vmatprep.subr.mxu0 0.0
      %1346 = vmatpush2.msra.mxu0 0.0
      %1347 = vmatprep.subr.mxu0 0.0
      %1348 = vmatpush2.msra.mxu0 0.0
      %1349 = vmatprep.subr.mxu0 0.0
      %1350 = vmatpush2.msra.mxu0 0.0
      %1351 = vmatprep.subr.mxu0 0.0
      %1352 = vmatpush2.msra.mxu0 0.0
      %1353 = vmatprep.subr.mxu0 0.0
      %1354 = vmatpush2.msra.mxu0 0.0
      %1355 = vmatprep.subr.mxu0 0.0
      %1356 = vmatpush2.msra.mxu0 0.0
      %1357 = vmatprep.subr.mxu0 0.0
      %1358 = vmatpush2.msra.mxu0 0.0
      %1359 = vmatprep.subr.mxu0 0.0
      %1360 = vmatpush2.msra.mxu0 0.0
      %1361 = vmatprep.subr.mxu0 0.0
      %1362 = vmatpush2.msra.mxu0 0.0
      %1363 = vmatprep.subr.mxu0 0.0
      %1364 = vmatpush2.msra.mxu0 0.0
      %1365 = vmatprep.subr.mxu0 0.0
      %1366 = vmatpush2.msra.mxu0 0.0
      %1367 = vmatprep.subr.mxu0 0.0
      %1368 = vmatpush2.msra.mxu0 0.0
      %1369 = vmatprep.subr.mxu0 0.0
      %1370 = vmatpush2.msra.mxu0 0.0
      %1371 = vmatprep.mubr.f32.mxu0 0.0
      %1372 = vmatmul.mubr.f32.gmra.mxu0 %v1302
      %v1373 = vpop.f32.mrf.mxu0
      %v1374 = vadd.f32 0.0, %v1373
      %v1375 = vpop.f32.mrf.mxu0
      %1376 = vmatprep.mubr.f32.mxu0 0.0
      %1377 = vmatmul.mubr.f32.gmra.mxu0 %v1305
      %v1378 = vpop.f32.mrf.mxu0
      %v1379 = vadd.f32 0.0, %v1378
      %v1380 = vpop.f32.mrf.mxu0
      %1381 = vdwg.mxu0
      %s1382 = scalar_lea.vmem %s4, 16
      %v1383 = vld [vmem:[%s1382] sm:$0xff]
      %v1384 = vld [vmem:[%s1382 + $0x8] sm:$0x3f]
      %v1386 = vsel %vm1300, %v1383, 0
      %v1389 = vsel %vm1300, %v1384, 0
      %1391 = vmatprep.subr.mxu0 0.0
      %1392 = vmatpush1.msra.mxu0 0.0
      %1393 = vmatprep.subr.mxu0 0.0
      %1394 = vmatpush1.msra.mxu0 0.0
      %1395 = vmatprep.subr.mxu0 0.0
      %1396 = vmatpush1.msra.mxu0 0.0
      %1397 = vmatprep.subr.mxu0 0.0
      %1398 = vmatpush1.msra.mxu0 0.0
      %1399 = vmatprep.subr.mxu0 0.0
      %1400 = vmatpush1.msra.mxu0 0.0
      %1401 = vmatprep.subr.mxu0 0.0
      %1402 = vmatpush1.msra.mxu0 0.0
      %1403 = vmatprep.subr.mxu0 0.0
      %1404 = vmatpush1.msra.mxu0 0.0
      %1405 = vmatprep.subr.mxu0 0.0
      %1406 = vmatpush1.msra.mxu0 0.0
      %1407 = vmatprep.subr.mxu0 0.0
      %1408 = vmatpush1.msra.mxu0 0.0
      %1409 = vmatprep.subr.mxu0 0.0
      %1410 = vmatpush1.msra.mxu0 0.0
      %1411 = vmatprep.subr.mxu0 0.0
      %1412 = vmatpush1.msra.mxu0 0.0
      %1413 = vmatprep.subr.mxu0 0.0
      %1414 = vmatpush1.msra.mxu0 0.0
      %1415 = vmatprep.subr.mxu0 0.0
      %1416 = vmatpush1.msra.mxu0 0.0
      %1417 = vmatprep.subr.mxu0 0.0
      %1418 = vmatpush1.msra.mxu0 %v1297
      %1419 = vmatprep.subr.mxu0 0.0
      %1420 = vmatpush1.msra.mxu0 %v1296
      %1421 = vmatprep.subr.mxu0 0.0
      %1422 = vmatpush1.msra.mxu0 %v1295
      %1423 = vmatprep.subr.mxu0 0.0
      %1424 = vmatpush2.msra.mxu0 0.0
      %1425 = vmatprep.subr.mxu0 0.0
      %1426 = vmatpush2.msra.mxu0 0.0
      %1427 = vmatprep.subr.mxu0 0.0
      %1428 = vmatpush2.msra.mxu0 0.0
      %1429 = vmatprep.subr.mxu0 0.0
      %1430 = vmatpush2.msra.mxu0 0.0
      %1431 = vmatprep.subr.mxu0 0.0
      %1432 = vmatpush2.msra.mxu0 0.0
      %1433 = vmatprep.subr.mxu0 0.0
      %1434 = vmatpush2.msra.mxu0 0.0
      %1435 = vmatprep.subr.mxu0 0.0
      %1436 = vmatpush2.msra.mxu0 0.0
      %1437 = vmatprep.subr.mxu0 0.0
      %1438 = vmatpush2.msra.mxu0 0.0
      %1439 = vmatprep.subr.mxu0 0.0
      %1440 = vmatpush2.msra.mxu0 0.0
      %1441 = vmatprep.subr.mxu0 0.0
      %1442 = vmatpush2.msra.mxu0 0.0
      %1443 = vmatprep.subr.mxu0 0.0
      %1444 = vmatpush2.msra.mxu0 0.0
      %1445 = vmatprep.subr.mxu0 0.0
      %1446 = vmatpush2.msra.mxu0 0.0
      %1447 = vmatprep.subr.mxu0 0.0
      %1448 = vmatpush2.msra.mxu0 0.0
      %1449 = vmatprep.subr.mxu0 0.0
      %1450 = vmatpush2.msra.mxu0 0.0
      %1451 = vmatprep.subr.mxu0 0.0
      %1452 = vmatpush2.msra.mxu0 0.0
      %1453 = vmatprep.subr.mxu0 0.0
      %1454 = vmatpush2.msra.mxu0 0.0
      %1455 = vmatprep.mubr.f32.mxu0 0.0
      %1456 = vmatmul.mubr.f32.gmra.mxu0 %v1386
      %v1457 = vpop.f32.mrf.mxu0
      %v1458 = vadd.f32 0.0, %v1457
      %v1459 = vpop.f32.mrf.mxu0
      %1460 = vmatprep.mubr.f32.mxu0 0.0
      %1461 = vmatmul.mubr.f32.gmra.mxu0 %v1389
      %v1462 = vpop.f32.mrf.mxu0
      %v1463 = vadd.f32 0.0, %v1462
      %v1464 = vpop.f32.mrf.mxu0
      %1465 = vdwg.mxu0
      %v1466 = vmax.f32 %v1374, %v1458
      %v1467 = vmax.f32 %v1379, %v1463
      %v1468 = vpack.c.bf16 %v1467, %v1466
      %v1469 = vld [vmem:[%s5] sm:$0xf]
      %v1470 = vld [vmem:[%s5 + $0x4] sm:$0xf]
      %v1471 = vld [vmem:[%s5 + $0x8] sm:$0xf]
      %v1472 = vld [vmem:[%s5 + $0xc] sm:$0xf]
      %v1473 = vld [vmem:[%s5 + $0x10] sm:$0xf]
      %v1474 = vld [vmem:[%s5 + $0x14] sm:$0xf]
      %v1475 = vld [vmem:[%s5 + $0x18] sm:$0xf]
      %v1476 = vld [vmem:[%s5 + $0x1c] sm:$0xf]
      %v1477 = vld [vmem:[%s5 + $0x20] sm:$0xf]
      %v1478 = vld [vmem:[%s5 + $0x24] sm:$0xf]
      %v1479 = vld [vmem:[%s5 + $0x28] sm:$0xf]
      %v1480 = vld [vmem:[%s5 + $0x2c] sm:$0xf]
      %v1481 = vld [vmem:[%s5 + $0x30] sm:$0xf]
      %v1482 = vld [vmem:[%s5 + $0x34] sm:$0xf]
      %s1483 = scalar_lea.vmem %s5, 56
      %v1484 = vld [vmem:[%s1483] sm:$0xf]
      %v1485 = vld [vmem:[%s1483 + $0x4] sm:$0xf]
      %v1486 = vld [vmem:[%s1483 + $0x8] sm:$0xf]
      %v1487 = vld [vmem:[%s1483 + $0xc] sm:$0xf]
      %v1488 = vld [vmem:[%s1483 + $0x10] sm:$0xf]
      %v1489 = vld [vmem:[%s1483 + $0x14] sm:$0xf]
      %v1490 = vld [vmem:[%s1483 + $0x18] sm:$0xf]
      %v1491 = vld [vmem:[%s1483 + $0x1c] sm:$0xf]
      %v1492 = vld [vmem:[%s1483 + $0x20] sm:$0xf]
      %v1493 = vld [vmem:[%s1483 + $0x24] sm:$0xf]
      %v1494 = vld [vmem:[%s1483 + $0x28] sm:$0xf]
      %v1495 = vld [vmem:[%s1483 + $0x2c] sm:$0xf]
      %v1496 = vld [vmem:[%s1483 + $0x30] sm:$0xf]
      %v1497 = vld [vmem:[%s1483 + $0x34] sm:$0xf]
      %v1499 = vshrl.u32 %v1468, 16
      %v1501 = vshll.u32 %v1468, 16
      %v1503 = vrot.slane %v1501, 1
      %v1504 = vor.u32 %v1499, %v1503
      %v1519 = vunpack.c.l.b16 %v1484
      %v1520 = vunpack.c.l.b16 %v1485
      %v1521 = vunpack.c.l.b16 %v1486
      %v1522 = vunpack.c.l.b16 %v1487
      %v1523 = vunpack.c.l.b16 %v1488
      %v1524 = vunpack.c.l.b16 %v1489
      %v1525 = vunpack.c.l.b16 %v1490
      %v1526 = vunpack.c.l.b16 %v1491
      %v1527 = vunpack.c.l.b16 %v1492
      %v1528 = vunpack.c.l.b16 %v1493
      %v1529 = vunpack.c.l.b16 %v1494
      %v1530 = vunpack.c.l.b16 %v1495
      %v1531 = vunpack.c.l.b16 %v1496
      %v1532 = vunpack.c.l.b16 %v1497
      %v1533 = vpack.c.b16 %v1520, %v1519
      %v1534 = vpack.c.b16 %v1522, %v1521
      %v1535 = vpack.c.b16 %v1524, %v1523
      %v1536 = vpack.c.b16 %v1526, %v1525
      %v1537 = vpack.c.b16 %v1528, %v1527
      %v1538 = vpack.c.b16 %v1530, %v1529
      %v1539 = vpack.c.b16 %v1532, %v1531
      %vm1547 = vcmask 916480
      %v1549 = vsel %vm1547, %v1504, 0
      %1551 = vmatprep.subr.bf16.mxu0 0
      %1552 = vmatpush1.bf16.msra.mxu0 0
      %1553 = vmatprep.subr.bf16.mxu0 0
      %1554 = vmatpush1.bf16.msra.mxu0 %v1539
      %1555 = vmatprep.subr.bf16.mxu0 0
      %1556 = vmatpush1.bf16.msra.mxu0 %v1538
      %1557 = vmatprep.subr.bf16.mxu0 0
      %1558 = vmatpush1.bf16.msra.mxu0 %v1537
      %1559 = vmatprep.subr.bf16.mxu0 0
      %1560 = vmatpush1.bf16.msra.mxu0 %v1536
      %1561 = vmatprep.subr.bf16.mxu0 0
      %1562 = vmatpush1.bf16.msra.mxu0 %v1535
      %1563 = vmatprep.subr.bf16.mxu0 0
      %1564 = vmatpush1.bf16.msra.mxu0 %v1534
      %1565 = vmatprep.subr.bf16.mxu0 0
      %1566 = vmatpush1.bf16.msra.mxu0 %v1533
      %1567 = vmatprep.subr.bf16.mxu0 0
      %1568 = vmatpush2.bf16.msra.mxu0 0
      %1569 = vmatprep.subr.bf16.mxu0 0
      %1570 = vmatpush2.bf16.msra.mxu0 0
      %1571 = vmatprep.subr.bf16.mxu0 0
      %1572 = vmatpush2.bf16.msra.mxu0 0
      %1573 = vmatprep.subr.bf16.mxu0 0
      %1574 = vmatpush2.bf16.msra.mxu0 0
      %1575 = vmatprep.subr.bf16.mxu0 0
      %1576 = vmatpush2.bf16.msra.mxu0 0
      %1577 = vmatprep.subr.bf16.mxu0 0
      %1578 = vmatpush2.bf16.msra.mxu0 0
      %1579 = vmatprep.subr.bf16.mxu0 0
      %1580 = vmatpush2.bf16.msra.mxu0 0
      %1581 = vmatprep.subr.bf16.mxu0 0
      %1582 = vmatpush2.bf16.msra.mxu0 0
      %1583 = vmatprep.mubr.bf16.mxu0 0
      %1584 = vmatmul.mubr.bf16.gmra.mxu0 %v1549
      %v1585 = vpop.f32.mrf.mxu0
      %v1586 = vadd.f32 0.0, %v1585
      %v1587 = vpop.f32.mrf.mxu0
      %v1588 = vpop.f32.mrf.mxu0
      %v1589 = vadd.f32 0.0, %v1588
      %v1590 = vpop.f32.mrf.mxu0
      %1591 = vdwg.mxu0
      %v1606 = vunpack.c.l.b16 %v1469
      %v1607 = vunpack.c.l.b16 %v1470
      %v1608 = vunpack.c.l.b16 %v1471
      %v1609 = vunpack.c.l.b16 %v1472
      %v1610 = vunpack.c.l.b16 %v1473
      %v1611 = vunpack.c.l.b16 %v1474
      %v1612 = vunpack.c.l.b16 %v1475
      %v1613 = vunpack.c.l.b16 %v1476
      %v1614 = vunpack.c.l.b16 %v1477
      %v1615 = vunpack.c.l.b16 %v1478
      %v1616 = vunpack.c.l.b16 %v1479
      %v1617 = vunpack.c.l.b16 %v1480
      %v1618 = vunpack.c.l.b16 %v1481
      %v1619 = vunpack.c.l.b16 %v1482
      %v1620 = vpack.c.b16 %v1607, %v1606
      %v1621 = vpack.c.b16 %v1609, %v1608
      %v1622 = vpack.c.b16 %v1611, %v1610
      %v1623 = vpack.c.b16 %v1613, %v1612
      %v1624 = vpack.c.b16 %v1615, %v1614
      %v1625 = vpack.c.b16 %v1617, %v1616
      %v1626 = vpack.c.b16 %v1619, %v1618
      %v1634 = vsel %vm1547, %v1468, 0
      %1636 = vmatprep.subr.bf16.mxu0 0
      %1637 = vmatpush1.bf16.msra.mxu0 0
      %1638 = vmatprep.subr.bf16.mxu0 0
      %1639 = vmatpush1.bf16.msra.mxu0 %v1626
      %1640 = vmatprep.subr.bf16.mxu0 0
      %1641 = vmatpush1.bf16.msra.mxu0 %v1625
      %1642 = vmatprep.subr.bf16.mxu0 0
      %1643 = vmatpush1.bf16.msra.mxu0 %v1624
      %1644 = vmatprep.subr.bf16.mxu0 0
      %1645 = vmatpush1.bf16.msra.mxu0 %v1623
      %1646 = vmatprep.subr.bf16.mxu0 0
      %1647 = vmatpush1.bf16.msra.mxu0 %v1622
      %1648 = vmatprep.subr.bf16.mxu0 0
      %1649 = vmatpush1.bf16.msra.mxu0 %v1621
      %1650 = vmatprep.subr.bf16.mxu0 0
      %1651 = vmatpush1.bf16.msra.mxu0 %v1620
      %1652 = vmatprep.subr.bf16.mxu0 0
      %1653 = vmatpush2.bf16.msra.mxu0 0
      %1654 = vmatprep.subr.bf16.mxu0 0
      %1655 = vmatpush2.bf16.msra.mxu0 0
      %1656 = vmatprep.subr.bf16.mxu0 0
      %1657 = vmatpush2.bf16.msra.mxu0 0
      %1658 = vmatprep.subr.bf16.mxu0 0
      %1659 = vmatpush2.bf16.msra.mxu0 0
      %1660 = vmatprep.subr.bf16.mxu0 0
      %1661 = vmatpush2.bf16.msra.mxu0 0
      %1662 = vmatprep.subr.bf16.mxu0 0
      %1663 = vmatpush2.bf16.msra.mxu0 0
      %1664 = vmatprep.subr.bf16.mxu0 0
      %1665 = vmatpush2.bf16.msra.mxu0 0
      %1666 = vmatprep.subr.bf16.mxu0 0
      %1667 = vmatpush2.bf16.msra.mxu0 0
      %1668 = vmatprep.mubr.bf16.mxu0 0
      %1669 = vmatmul.mubr.bf16.gmra.mxu0 %v1634
      %v1670 = vpop.f32.mrf.mxu0
      %v1671 = vadd.f32 %v1586, %v1670
      %v1672 = vpop.f32.mrf.mxu0
      %v1673 = vpop.f32.mrf.mxu0
      %v1674 = vadd.f32 %v1589, %v1673
      %v1675 = vpop.f32.mrf.mxu0
      %1676 = vdwg.mxu0
      %s1677 = scalar_lea.vmem %s5, 112
      %v1678 = vld [vmem:[%s1677] sm:$0xf]
      %v1679 = vld [vmem:[%s1677 + $0x4] sm:$0xf]
      %v1680 = vld [vmem:[%s1677 + $0x8] sm:$0xf]
      %v1681 = vld [vmem:[%s1677 + $0xc] sm:$0xf]
      %v1682 = vld [vmem:[%s1677 + $0x10] sm:$0xf]
      %v1683 = vld [vmem:[%s1677 + $0x14] sm:$0xf]
      %v1684 = vld [vmem:[%s1677 + $0x18] sm:$0xf]
      %v1685 = vld [vmem:[%s1677 + $0x1c] sm:$0xf]
      %v1686 = vld [vmem:[%s1677 + $0x20] sm:$0xf]
      %v1687 = vld [vmem:[%s1677 + $0x24] sm:$0xf]
      %v1688 = vld [vmem:[%s1677 + $0x28] sm:$0xf]
      %v1689 = vld [vmem:[%s1677 + $0x2c] sm:$0xf]
      %v1690 = vld [vmem:[%s1677 + $0x30] sm:$0xf]
      %v1691 = vld [vmem:[%s1677 + $0x34] sm:$0xf]
      %v1693 = vrot.slane %v1468, 1
      %v1708 = vunpack.c.l.b16 %v1678
      %v1709 = vunpack.c.l.b16 %v1679
      %v1710 = vunpack.c.l.b16 %v1680
      %v1711 = vunpack.c.l.b16 %v1681
      %v1712 = vunpack.c.l.b16 %v1682
      %v1713 = vunpack.c.l.b16 %v1683
      %v1714 = vunpack.c.l.b16 %v1684
      %v1715 = vunpack.c.l.b16 %v1685
      %v1716 = vunpack.c.l.b16 %v1686
      %v1717 = vunpack.c.l.b16 %v1687
      %v1718 = vunpack.c.l.b16 %v1688
      %v1719 = vunpack.c.l.b16 %v1689
      %v1720 = vunpack.c.l.b16 %v1690
      %v1721 = vunpack.c.l.b16 %v1691
      %v1722 = vpack.c.b16 %v1709, %v1708
      %v1723 = vpack.c.b16 %v1711, %v1710
      %v1724 = vpack.c.b16 %v1713, %v1712
      %v1725 = vpack.c.b16 %v1715, %v1714
      %v1726 = vpack.c.b16 %v1717, %v1716
      %v1727 = vpack.c.b16 %v1719, %v1718
      %v1728 = vpack.c.b16 %v1721, %v1720
      %v1737 = vsel %vm1547, %v1693, 0
      %1739 = vmatprep.subr.bf16.mxu0 0
      %1740 = vmatpush1.bf16.msra.mxu0 0
      %1741 = vmatprep.subr.bf16.mxu0 0
      %1742 = vmatpush1.bf16.msra.mxu0 %v1728
      %1743 = vmatprep.subr.bf16.mxu0 0
      %1744 = vmatpush1.bf16.msra.mxu0 %v1727
      %1745 = vmatprep.subr.bf16.mxu0 0
      %1746 = vmatpush1.bf16.msra.mxu0 %v1726
      %1747 = vmatprep.subr.bf16.mxu0 0
      %1748 = vmatpush1.bf16.msra.mxu0 %v1725
      %1749 = vmatprep.subr.bf16.mxu0 0
      %1750 = vmatpush1.bf16.msra.mxu0 %v1724
      %1751 = vmatprep.subr.bf16.mxu0 0
      %1752 = vmatpush1.bf16.msra.mxu0 %v1723
      %1753 = vmatprep.subr.bf16.mxu0 0
      %1754 = vmatpush1.bf16.msra.mxu0 %v1722
      %1755 = vmatprep.subr.bf16.mxu0 0
      %1756 = vmatpush2.bf16.msra.mxu0 0
      %1757 = vmatprep.subr.bf16.mxu0 0
      %1758 = vmatpush2.bf16.msra.mxu0 0
      %1759 = vmatprep.subr.bf16.mxu0 0
      %1760 = vmatpush2.bf16.msra.mxu0 0
      %1761 = vmatprep.subr.bf16.mxu0 0
      %1762 = vmatpush2.bf16.msra.mxu0 0
      %1763 = vmatprep.subr.bf16.mxu0 0
      %1764 = vmatpush2.bf16.msra.mxu0 0
      %1765 = vmatprep.subr.bf16.mxu0 0
      %1766 = vmatpush2.bf16.msra.mxu0 0
      %1767 = vmatprep.subr.bf16.mxu0 0
      %1768 = vmatpush2.bf16.msra.mxu0 0
      %1769 = vmatprep.subr.bf16.mxu0 0
      %1770 = vmatpush2.bf16.msra.mxu0 0
      %1771 = vmatprep.mubr.bf16.mxu0 0
      %1772 = vmatmul.mubr.bf16.gmra.mxu0 %v1737
      %v1773 = vpop.f32.mrf.mxu0
      %v1774 = vadd.f32 0.0, %v1773
      %v1775 = vpop.f32.mrf.mxu0
      %v1776 = vpop.f32.mrf.mxu0
      %v1777 = vadd.f32 0.0, %v1776
      %v1778 = vpop.f32.mrf.mxu0
      %1779 = vdwg.mxu0
      %v1780 = vadd.f32 %v1671, %v1774
      %v1781 = vadd.f32 %v1674, %v1777
      %v1782 = vld [vmem:[%s6] sm:$0x1]
      %v1784 = vlaneseq
      %v1785 = vshrl.u32 %v1784, 7
      %v1786 = vsub.s32 0, %v1785
      %v1787 = vrot.slane %v1782, %v1786
      %v1789 = vadd.f32 %v1780, %v1787
      %v1790 = vadd.f32 %v1781, %v1787
      %v1791 = vmax.f32 %v1789, 0.0
      %v1792 = vmax.f32 %v1790, 0.0
      %v1793 = vld [vmem:[%s7] sm:$0xff]
      %v1794 = vld [vmem:[%s7 + $0x8] sm:$0xff]
      %v1795 = vld [vmem:[%s7 + $0x10] sm:$0xff]
      %v1796 = vld [vmem:[%s7 + $0x18] sm:$0xff]
      %v1797 = vld [vmem:[%s7 + $0x20] sm:$0xff]
      %v1798 = vld [vmem:[%s7 + $0x28] sm:$0xff]
      %v1799 = vld [vmem:[%s7 + $0x30] sm:$0xff]
      %v1800 = vld [vmem:[%s7 + $0x38] sm:$0xff]
      %v1801 = vld [vmem:[%s7 + $0x40] sm:$0xff]
      %v1802 = vld [vmem:[%s7 + $0x48] sm:$0xff]
      %v1803 = vld [vmem:[%s7 + $0x50] sm:$0xff]
      %v1804 = vld [vmem:[%s7 + $0x58] sm:$0xff]
      %vm1805 = vcmask 785408
      %v1807 = vsel %vm1805, %v1791, 0
      %v1810 = vsel %vm1805, %v1792, 0
      %1812 = vmatprep.subr.mxu0 0.0
      %1813 = vmatpush1.msra.mxu0 0.0
      %1814 = vmatprep.subr.mxu0 0.0
      %1815 = vmatpush1.msra.mxu0 0.0
      %1816 = vmatprep.subr.mxu0 0.0
      %1817 = vmatpush1.msra.mxu0 0.0
      %1818 = vmatprep.subr.mxu0 0.0
      %1819 = vmatpush1.msra.mxu0 0.0
      %1820 = vmatprep.subr.mxu0 0.0
      %1821 = vmatpush1.msra.mxu0 %v1804
      %1822 = vmatprep.subr.mxu0 0.0
      %1823 = vmatpush1.msra.mxu0 %v1803
      %1824 = vmatprep.subr.mxu0 0.0
      %1825 = vmatpush1.msra.mxu0 %v1802
      %1826 = vmatprep.subr.mxu0 0.0
      %1827 = vmatpush1.msra.mxu0 %v1801
      %1828 = vmatprep.subr.mxu0 0.0
      %1829 = vmatpush1.msra.mxu0 %v1800
      %1830 = vmatprep.subr.mxu0 0.0
      %1831 = vmatpush1.msra.mxu0 %v1799
      %1832 = vmatprep.subr.mxu0 0.0
      %1833 = vmatpush1.msra.mxu0 %v1798
      %1834 = vmatprep.subr.mxu0 0.0
      %1835 = vmatpush1.msra.mxu0 %v1797
      %1836 = vmatprep.subr.mxu0 0.0
      %1837 = vmatpush1.msra.mxu0 %v1796
      %1838 = vmatprep.subr.mxu0 0.0
      %1839 = vmatpush1.msra.mxu0 %v1795
      %1840 = vmatprep.subr.mxu0 0.0
      %1841 = vmatpush1.msra.mxu0 %v1794
      %1842 = vmatprep.subr.mxu0 0.0
      %1843 = vmatpush1.msra.mxu0 %v1793
      %1844 = vmatprep.subr.mxu0 0.0
      %1845 = vmatpush2.msra.mxu0 0.0
      %1846 = vmatprep.subr.mxu0 0.0
      %1847 = vmatpush2.msra.mxu0 0.0
      %1848 = vmatprep.subr.mxu0 0.0
      %1849 = vmatpush2.msra.mxu0 0.0
      %1850 = vmatprep.subr.mxu0 0.0
      %1851 = vmatpush2.msra.mxu0 0.0
      %1852 = vmatprep.subr.mxu0 0.0
      %1853 = vmatpush2.msra.mxu0 0.0
      %1854 = vmatprep.subr.mxu0 0.0
      %1855 = vmatpush2.msra.mxu0 0.0
      %1856 = vmatprep.subr.mxu0 0.0
      %1857 = vmatpush2.msra.mxu0 0.0
      %1858 = vmatprep.subr.mxu0 0.0
      %1859 = vmatpush2.msra.mxu0 0.0
      %1860 = vmatprep.subr.mxu0 0.0
      %1861 = vmatpush2.msra.mxu0 0.0
      %1862 = vmatprep.subr.mxu0 0.0
      %1863 = vmatpush2.msra.mxu0 0.0
      %1864 = vmatprep.subr.mxu0 0.0
      %1865 = vmatpush2.msra.mxu0 0.0
      %1866 = vmatprep.subr.mxu0 0.0
      %1867 = vmatpush2.msra.mxu0 0.0
      %1868 = vmatprep.subr.mxu0 0.0
      %1869 = vmatpush2.msra.mxu0 0.0
      %1870 = vmatprep.subr.mxu0 0.0
      %1871 = vmatpush2.msra.mxu0 0.0
      %1872 = vmatprep.subr.mxu0 0.0
      %1873 = vmatpush2.msra.mxu0 0.0
      %1874 = vmatprep.subr.mxu0 0.0
      %1875 = vmatpush2.msra.mxu0 0.0
      %1876 = vmatprep.mubr.f32.mxu0 0.0
      %1877 = vmatmul.mubr.f32.gmra.mxu0 %v1807
      %v1878 = vpop.f32.mrf.mxu0
      %v1879 = vadd.f32 0.0, %v1878
      %v1880 = vpop.f32.mrf.mxu0
      %1881 = vmatprep.mubr.f32.mxu0 0.0
      %1882 = vmatmul.mubr.f32.gmra.mxu0 %v1810
      %v1883 = vpop.f32.mrf.mxu0
      %v1884 = vadd.f32 0.0, %v1883
      %v1885 = vpop.f32.mrf.mxu0
      %1886 = vdwg.mxu0
      %s1887 = scalar_lea.vmem %s7, 96
      %v1888 = vld [vmem:[%s1887] sm:$0xff]
      %v1889 = vld [vmem:[%s1887 + $0x8] sm:$0xff]
      %v1890 = vld [vmem:[%s1887 + $0x10] sm:$0xff]
      %v1891 = vld [vmem:[%s1887 + $0x18] sm:$0xff]
      %v1892 = vld [vmem:[%s1887 + $0x20] sm:$0xff]
      %v1893 = vld [vmem:[%s1887 + $0x28] sm:$0xff]
      %v1894 = vld [vmem:[%s1887 + $0x30] sm:$0xff]
      %v1895 = vld [vmem:[%s1887 + $0x38] sm:$0xff]
      %v1896 = vld [vmem:[%s1887 + $0x40] sm:$0xff]
      %v1897 = vld [vmem:[%s1887 + $0x48] sm:$0xff]
      %v1898 = vld [vmem:[%s1887 + $0x50] sm:$0xff]
      %v1899 = vld [vmem:[%s1887 + $0x58] sm:$0xff]
      %1900 = vmatprep.subr.mxu0 0.0
      %1901 = vmatpush1.msra.mxu0 0.0
      %1902 = vmatprep.subr.mxu0 0.0
      %1903 = vmatpush1.msra.mxu0 0.0
      %1904 = vmatprep.subr.mxu0 0.0
      %1905 = vmatpush1.msra.mxu0 0.0
      %1906 = vmatprep.subr.mxu0 0.0
      %1907 = vmatpush1.msra.mxu0 0.0
      %1908 = vmatprep.subr.mxu0 0.0
      %1909 = vmatpush1.msra.mxu0 %v1899
      %1910 = vmatprep.subr.mxu0 0.0
      %1911 = vmatpush1.msra.mxu0 %v1898
      %1912 = vmatprep.subr.mxu0 0.0
      %1913 = vmatpush1.msra.mxu0 %v1897
      %1914 = vmatprep.subr.mxu0 0.0
      %1915 = vmatpush1.msra.mxu0 %v1896
      %1916 = vmatprep.subr.mxu0 0.0
      %1917 = vmatpush1.msra.mxu0 %v1895
      %1918 = vmatprep.subr.mxu0 0.0
      %1919 = vmatpush1.msra.mxu0 %v1894
      %1920 = vmatprep.subr.mxu0 0.0
      %1921 = vmatpush1.msra.mxu0 %v1893
      %1922 = vmatprep.subr.mxu0 0.0
      %1923 = vmatpush1.msra.mxu0 %v1892
      %1924 = vmatprep.subr.mxu0 0.0
      %1925 = vmatpush1.msra.mxu0 %v1891
      %1926 = vmatprep.subr.mxu0 0.0
      %1927 = vmatpush1.msra.mxu0 %v1890
      %1928 = vmatprep.subr.mxu0 0.0
      %1929 = vmatpush1.msra.mxu0 %v1889
      %1930 = vmatprep.subr.mxu0 0.0
      %1931 = vmatpush1.msra.mxu0 %v1888
      %1932 = vmatprep.subr.mxu0 0.0
      %1933 = vmatpush2.msra.mxu0 0.0
      %1934 = vmatprep.subr.mxu0 0.0
      %1935 = vmatpush2.msra.mxu0 0.0
      %1936 = vmatprep.subr.mxu0 0.0
      %1937 = vmatpush2.msra.mxu0 0.0
      %1938 = vmatprep.subr.mxu0 0.0
      %1939 = vmatpush2.msra.mxu0 0.0
      %1940 = vmatprep.subr.mxu0 0.0
      %1941 = vmatpush2.msra.mxu0 0.0
      %1942 = vmatprep.subr.mxu0 0.0
      %1943 = vmatpush2.msra.mxu0 0.0
      %1944 = vmatprep.subr.mxu0 0.0
      %1945 = vmatpush2.msra.mxu0 0.0
      %1946 = vmatprep.subr.mxu0 0.0
      %1947 = vmatpush2.msra.mxu0 0.0
      %1948 = vmatprep.subr.mxu0 0.0
      %1949 = vmatpush2.msra.mxu0 0.0
      %1950 = vmatprep.subr.mxu0 0.0
      %1951 = vmatpush2.msra.mxu0 0.0
      %1952 = vmatprep.subr.mxu0 0.0
      %1953 = vmatpush2.msra.mxu0 0.0
      %1954 = vmatprep.subr.mxu0 0.0
      %1955 = vmatpush2.msra.mxu0 0.0
      %1956 = vmatprep.subr.mxu0 0.0
      %1957 = vmatpush2.msra.mxu0 0.0
      %1958 = vmatprep.subr.mxu0 0.0
      %1959 = vmatpush2.msra.mxu0 0.0
      %1960 = vmatprep.subr.mxu0 0.0
      %1961 = vmatpush2.msra.mxu0 0.0
      %1962 = vmatprep.subr.mxu0 0.0
      %1963 = vmatpush2.msra.mxu0 0.0
      %1964 = vmatprep.mubr.f32.mxu0 0.0
      %1965 = vmatmul.mubr.f32.gmra.mxu0 %v1807
      %v1966 = vpop.f32.mrf.mxu0
      %v1967 = vadd.f32 0.0, %v1966
      %v1968 = vpop.f32.mrf.mxu0
      %1969 = vmatprep.mubr.f32.mxu0 0.0
      %1970 = vmatmul.mubr.f32.gmra.mxu0 %v1810
      %v1971 = vpop.f32.mrf.mxu0
      %v1972 = vadd.f32 0.0, %v1971
      %v1973 = vpop.f32.mrf.mxu0
      %1974 = vdwg.mxu0
      %v1975 = vmax.f32 %v1879, %v1967
      %v1976 = vmax.f32 %v1884, %v1972
      %v1977 = vld [vmem:[%s8] sm:$0x3f]
      %vm1978 = vcmask 97280
      %v1980 = vsel %vm1978, %v1977, 0
      %vm1982 = vcmask 1043456
      %v1984 = vsel %vm1982, %v1976, 0
      %1986 = vmatprep.subr.mxu0 0.0
      %1987 = vmatpush1.msra.mxu0 0.0
      %1988 = vmatprep.subr.mxu0 0.0
      %1989 = vmatpush1.msra.mxu0 0.0
      %1990 = vmatprep.subr.mxu0 0.0
      %1991 = vmatpush1.msra.mxu0 0.0
      %1992 = vmatprep.subr.mxu0 0.0
      %1993 = vmatpush1.msra.mxu0 0.0
      %1994 = vmatprep.subr.mxu0 0.0
      %1995 = vmatpush1.msra.mxu0 0.0
      %1996 = vmatprep.subr.mxu0 0.0
      %1997 = vmatpush1.msra.mxu0 0.0
      %1998 = vmatprep.subr.mxu0 0.0
      %1999 = vmatpush1.msra.mxu0 0.0
      %2000 = vmatprep.subr.mxu0 0.0
      %2001 = vmatpush1.msra.mxu0 0.0
      %2002 = vmatprep.subr.mxu0 0.0
      %2003 = vmatpush1.msra.mxu0 0.0
      %2004 = vmatprep.subr.mxu0 0.0
      %2005 = vmatpush1.msra.mxu0 0.0
      %2006 = vmatprep.subr.mxu0 0.0
      %2007 = vmatpush1.msra.mxu0 0.0
      %2008 = vmatprep.subr.mxu0 0.0
      %2009 = vmatpush1.msra.mxu0 0.0
      %2010 = vmatprep.subr.mxu0 0.0
      %2011 = vmatpush1.msra.mxu0 0.0
      %2012 = vmatprep.subr.mxu0 0.0
      %2013 = vmatpush1.msra.mxu0 0.0
      %2014 = vmatprep.subr.mxu0 0.0
      %2015 = vmatpush1.msra.mxu0 %v1984
      %2016 = vmatprep.subr.mxu0 0.0
      %2017 = vmatpush1.msra.mxu0 %v1975
      %2018 = vmatprep.subr.mxu0 0.0
      %2019 = vmatpush2.msra.mxu0 0.0
      %2020 = vmatprep.subr.mxu0 0.0
      %2021 = vmatpush2.msra.mxu0 0.0
      %2022 = vmatprep.subr.mxu0 0.0
      %2023 = vmatpush2.msra.mxu0 0.0
      %2024 = vmatprep.subr.mxu0 0.0
      %2025 = vmatpush2.msra.mxu0 0.0
      %2026 = vmatprep.subr.mxu0 0.0
      %2027 = vmatpush2.msra.mxu0 0.0
      %2028 = vmatprep.subr.mxu0 0.0
      %2029 = vmatpush2.msra.mxu0 0.0
      %2030 = vmatprep.subr.mxu0 0.0
      %2031 = vmatpush2.msra.mxu0 0.0
      %2032 = vmatprep.subr.mxu0 0.0
      %2033 = vmatpush2.msra.mxu0 0.0
      %2034 = vmatprep.subr.mxu0 0.0
      %2035 = vmatpush2.msra.mxu0 0.0
      %2036 = vmatprep.subr.mxu0 0.0
      %2037 = vmatpush2.msra.mxu0 0.0
      %2038 = vmatprep.subr.mxu0 0.0
      %2039 = vmatpush2.msra.mxu0 0.0
      %2040 = vmatprep.subr.mxu0 0.0
      %2041 = vmatpush2.msra.mxu0 0.0
      %2042 = vmatprep.subr.mxu0 0.0
      %2043 = vmatpush2.msra.mxu0 0.0
      %2044 = vmatprep.subr.mxu0 0.0
      %2045 = vmatpush2.msra.mxu0 0.0
      %2046 = vmatprep.subr.mxu0 0.0
      %2047 = vmatpush2.msra.mxu0 0.0
      %2048 = vmatprep.subr.mxu0 0.0
      %2049 = vmatpush2.msra.mxu0 0.0
      %2050 = vmatprep.mubr.f32.mxu0 0.0
      %2051 = vmatmul.mubr.f32.gmra.mxu0 %v1980
      %v2052 = vpop.f32.mrf.mxu0
      %v2053 = vadd.f32 0.0, %v2052
      %v2054 = vpop.f32.mrf.mxu0
      %2055 = vdwg.mxu0
      %s2056 = scalar_lea.vmem %s8, 8
      %v2057 = vld [vmem:[%s2056] sm:$0x3f]
      %v2059 = vsel %vm1978, %v2057, 0
      %2061 = vmatprep.subr.mxu0 0.0
      %2062 = vmatpush1.msra.mxu0 0.0
      %2063 = vmatprep.subr.mxu0 0.0
      %2064 = vmatpush1.msra.mxu0 0.0
      %2065 = vmatprep.subr.mxu0 0.0
      %2066 = vmatpush1.msra.mxu0 0.0
      %2067 = vmatprep.subr.mxu0 0.0
      %2068 = vmatpush1.msra.mxu0 0.0
      %2069 = vmatprep.subr.mxu0 0.0
      %2070 = vmatpush1.msra.mxu0 0.0
      %2071 = vmatprep.subr.mxu0 0.0
      %2072 = vmatpush1.msra.mxu0 0.0
      %2073 = vmatprep.subr.mxu0 0.0
      %2074 = vmatpush1.msra.mxu0 0.0
      %2075 = vmatprep.subr.mxu0 0.0
      %2076 = vmatpush1.msra.mxu0 0.0
      %2077 = vmatprep.subr.mxu0 0.0
      %2078 = vmatpush1.msra.mxu0 0.0
      %2079 = vmatprep.subr.mxu0 0.0
      %2080 = vmatpush1.msra.mxu0 0.0
      %2081 = vmatprep.subr.mxu0 0.0
      %2082 = vmatpush1.msra.mxu0 0.0
      %2083 = vmatprep.subr.mxu0 0.0
      %2084 = vmatpush1.msra.mxu0 0.0
      %2085 = vmatprep.subr.mxu0 0.0
      %2086 = vmatpush1.msra.mxu0 0.0
      %2087 = vmatprep.subr.mxu0 0.0
      %2088 = vmatpush1.msra.mxu0 0.0
      %2089 = vmatprep.subr.mxu0 0.0
      %2090 = vmatpush1.msra.mxu0 %v1984
      %2091 = vmatprep.subr.mxu0 0.0
      %2092 = vmatpush1.msra.mxu0 %v1975
      %2093 = vmatprep.subr.mxu0 0.0
      %2094 = vmatpush2.msra.mxu0 0.0
      %2095 = vmatprep.subr.mxu0 0.0
      %2096 = vmatpush2.msra.mxu0 0.0
      %2097 = vmatprep.subr.mxu0 0.0
      %2098 = vmatpush2.msra.mxu0 0.0
      %2099 = vmatprep.subr.mxu0 0.0
      %2100 = vmatpush2.msra.mxu0 0.0
      %2101 = vmatprep.subr.mxu0 0.0
      %2102 = vmatpush2.msra.mxu0 0.0
      %2103 = vmatprep.subr.mxu0 0.0
      %2104 = vmatpush2.msra.mxu0 0.0
      %2105 = vmatprep.subr.mxu0 0.0
      %2106 = vmatpush2.msra.mxu0 0.0
      %2107 = vmatprep.subr.mxu0 0.0
      %2108 = vmatpush2.msra.mxu0 0.0
      %2109 = vmatprep.subr.mxu0 0.0
      %2110 = vmatpush2.msra.mxu0 0.0
      %2111 = vmatprep.subr.mxu0 0.0
      %2112 = vmatpush2.msra.mxu0 0.0
      %2113 = vmatprep.subr.mxu0 0.0
      %2114 = vmatpush2.msra.mxu0 0.0
      %2115 = vmatprep.subr.mxu0 0.0
      %2116 = vmatpush2.msra.mxu0 0.0
      %2117 = vmatprep.subr.mxu0 0.0
      %2118 = vmatpush2.msra.mxu0 0.0
      %2119 = vmatprep.subr.mxu0 0.0
      %2120 = vmatpush2.msra.mxu0 0.0
      %2121 = vmatprep.subr.mxu0 0.0
      %2122 = vmatpush2.msra.mxu0 0.0
      %2123 = vmatprep.subr.mxu0 0.0
      %2124 = vmatpush2.msra.mxu0 0.0
      %2125 = vmatprep.mubr.f32.mxu0 0.0
      %2126 = vmatmul.mubr.f32.gmra.mxu0 %v2059
      %v2127 = vpop.f32.mrf.mxu0
      %v2128 = vadd.f32 0.0, %v2127
      %v2129 = vpop.f32.mrf.mxu0
      %2130 = vdwg.mxu0
      %v2131 = vmax.f32 %v2053, %v2128
      %v2132 = vpack.c.bf16 %v2131, %v2131
      %vm2133 = vcmask 387072
      %2134 = vst.msk [vmem:[%s330] sm:$0x7] %vm2133, %v2132
      %p2135 = scmp.lt.s32.totalorder %s20, 1
      %s2136 = scalar_select %p2135, %s20, 1
      %s2137 = smul.addr %s2136, 4
      %s2138 = scalar_lea.vmem %s9, %s2137
      // Predicated region
      $region57: #{mix_model_forward.2} parent=55 // pred_check
        %p2139 = pneg %p232
      $region58: #{mix_model_forward.2} parent=55 // pred_check_branch
        %2141 = sbr.rel (%p2139) target = $region60
      $region59: #{mix_model_forward.2} parent=55 // pred_region
        _
      $region60: #{mix_model_forward.2} parent=55 // pred_fallthru
        _
    $region56: #{mix_model_forward.2} parent=5 // pred_fallthru
      _
    %p2142 = scmp.le.s32.totalorder 2, %s15
    // Predicated region
    $region61: #{mix_model_forward.2} parent=5 // pred_check
      %p2143 = pneg %p2142
    $region62: #{mix_model_forward.2} parent=5 // pred_check_branch
      %2145 = sbr.rel (%p2143) target = $region64
    $region63: #{mix_model_forward.2} parent=5 // pred_region
      %s2146 = ssub.s32 %s15, 2
      // Predicated region
      $region65: #{mix_model_forward.2} parent=63 // pred_check
        %p2147 = pneg %p238
      $region66: #{mix_model_forward.2} parent=63 // pred_check_branch
        %2149 = sbr.rel (%p2147) target = $region68
      $region67: #{mix_model_forward.2} parent=63 // pred_region
        %p2150 = scmp.lt.s32.totalorder %s21, 1
        %s2151 = scalar_select %p2150, %s21, 1
        %s2152 = smul.addr %s2151, 4
        %s2153 = scalar_lea.vmem %s9, %s2152
      $region68: #{mix_model_forward.2} parent=63 // pred_fallthru
        _
    $region64: #{mix_model_forward.2} parent=5 // pred_fallthru
      _
  $region6: #{mix_model_forward.2} parent=0 // loop_footer
    %s19 = sadd.s32 1, %s15
  $region7: #{mix_model_forward.2} parent=0 // loop_footer_branch
    %14 = sbr.rel target = $region3
  $region8: #{mix_model_forward.2} parent=0 // loop_exit
    _

</llo_original>
